<compile_context>
chip_gen: v7x
topology: tpu7x:2x2x1
jax: 0.10.0
libtpu: 0.0.40
codegen_flags: <defaults>
</compile_context>

<pallas_src>
import math
import functools

import jax
import jax.numpy as jnp
from jax import lax
from jax.experimental import pallas as pl
from jax.experimental.pallas import tpu as pltpu


LN_EPS = 1e-6  # matches nn.LayerNorm(model_dim, eps=1e-06) in the reference module


# ----------------------------------------------------------------------------
# In-kernel helpers (pure register/VMEM math, no pallas_call of their own)
# ----------------------------------------------------------------------------

def _layernorm(x, gamma, beta, eps):
    mu = jnp.mean(x, axis=-1, keepdims=True)
    var = jnp.mean((x - mu) ** 2, axis=-1, keepdims=True)
    return (x - mu) * lax.rsqrt(var + eps) * gamma + beta


def _mha_ln(x_res, xq_bf, xkv_bf, bias, wq, bq, wkv, bkv, wo, bo, gamma, beta,
            *, num_heads, eps):
    """All-head MHA + output proj + residual + LayerNorm, fully in registers.

    x_res : (Sq, D) f32   query-side input, also the residual
    xq_bf : (Sq, D) bf16  query-side input (caller casts once)
    xkv_bf: (Sk, D) bf16  key/value-side input (same array as xq_bf for self-attn)
    bias  : additive mask bias broadcastable to (H, Sq, Sk)
    """
    Sq, D = x_res.shape
    dh = D // num_heads

    # Q projection (1/sqrt(dh) folded into wq/bq at init) and merged K/V
    # projection.  bf16 operands, f32 accumulation on the MXU.
    q = jnp.dot(xq_bf, wq, preferred_element_type=jnp.float32) + bq        # (Sq, D)
    kv = jnp.dot(xkv_bf, wkv, preferred_element_type=jnp.float32) + bkv    # (Sk, 2D)

    # cast once (not per head)
    q_bf = q.astype(jnp.bfloat16)
    kv_bf = kv.astype(jnp.bfloat16)

    # head-batched operands (H, S, dh) built from lane slices of q / kv
    q_h = jnp.stack([q_bf[:, h * dh:(h + 1) * dh]
                     for h in range(num_heads)], axis=0)                   # (H, Sq, dh)
    k_h = jnp.stack([kv_bf[:, h * dh:(h + 1) * dh]
                     for h in range(num_heads)], axis=0)                   # (H, Sk, dh)
    v_h = jnp.stack([kv_bf[:, D + h * dh:D + (h + 1) * dh]
                     for h in range(num_heads)], axis=0)                   # (H, Sk, dh)

    # one batched QK^T, one softmax pass, one batched P.V for all heads
    logits = jnp.einsum('hqd,hkd->hqk', q_h, k_h,
                        preferred_element_type=jnp.float32)                # (H, Sq, Sk)
    logits = logits + bias
    m = jnp.max(logits, axis=-1, keepdims=True)
    p = jnp.exp(logits - m)
    denom = jnp.sum(p, axis=-1, keepdims=True)
    probs = p * pl.reciprocal(denom, approx=True)
    ctx = jnp.einsum('hqk,hkd->hqd', probs.astype(jnp.bfloat16), v_h,
                     preferred_element_type=jnp.float32)                   # (H, Sq, dh)

    # merge heads in registers (no VMEM scratch, no masked narrow stores)
    attn = jnp.concatenate([ctx[h] for h in range(num_heads)], axis=-1)    # (Sq, D)
    proj = jnp.dot(attn.astype(jnp.bfloat16), wo,
                   preferred_element_type=jnp.float32) + bo

    return _layernorm(proj + x_res, gamma, beta, eps)


# ----------------------------------------------------------------------------
# Fused decoder-stack kernel: grid = (B, L), activation carried in VMEM scratch
# ----------------------------------------------------------------------------

def _decoder_stack_kernel(
        x_ref, enc_ref, la_ref, pad_ref,
        wq1_ref, bq1_ref, wkv1_ref, bkv1_ref, wo1_ref, bo1_ref, g1_ref, be1_ref,
        wq2_ref, bq2_ref, wkv2_ref, bkv2_ref, wo2_ref, bo2_ref, g2_ref, be2_ref,
        w1_ref, b1_ref, w2_ref, b2_ref, g3_ref, be3_ref,
        o_ref, act_ref, *, num_heads, eps):
    l = pl.program_id(1)

    # layer 0: load the embedded input into the resident activation scratch
    @pl.when(l == 0)
    def _():
        act_ref[...] = x_ref[0]

    x = act_ref[...]                                   # (S, D)  f32
    la_bias = la_ref[0]                                # (S, S)  additive causal bias
    pad_bias = pad_ref[0]                              # (1, Se) additive key-pad bias

    # --- self-attention block (q = k = v = x, single bf16 cast of x) ---------
    x_bf = x.astype(jnp.bfloat16)
    out1 = _mha_ln(x, x_bf, x_bf, la_bias,
                   wq1_ref[0], bq1_ref[0], wkv1_ref[0], bkv1_ref[0],
                   wo1_ref[0], bo1_ref[0], g1_ref[0], be1_ref[0],
                   num_heads=num_heads, eps=eps)

    # --- cross-attention block (q = out1, k = v = encoder output) ------------
    enc_bf = enc_ref[0].astype(jnp.bfloat16)
    out2 = _mha_ln(out1, out1.astype(jnp.bfloat16), enc_bf, pad_bias,
                   wq2_ref[0], bq2_ref[0], wkv2_ref[0], bkv2_ref[0],
                   wo2_ref[0], bo2_ref[0], g2_ref[0], be2_ref[0],
                   num_heads=num_heads, eps=eps)

    # --- feed-forward block ---------------------------------------------------
    h = jnp.dot(out2.astype(jnp.bfloat16), w1_ref[0],
                preferred_element_type=jnp.float32) + b1_ref[0]            # (S, F)
    h = jnp.maximum(h, 0.0)
    y = jnp.dot(h.astype(jnp.bfloat16), w2_ref[0],
                preferred_element_type=jnp.float32) + b2_ref[0]            # (S, D)
    out3 = _layernorm(y + out2, g3_ref[0], be3_ref[0], eps)

    # carry the activation to the next layer; write HBM output only once
    act_ref[...] = out3

    @pl.when(l == pl.num_programs(1) - 1)
    def _():
        o_ref[0] = out3


_STACK_KEYS = ["wq1", "bq1", "wkv1", "bkv1", "wo1", "bo1", "g1", "be1",
               "wq2", "bq2", "wkv2", "bkv2", "wo2", "bo2", "g2", "be2",
               "w1", "b1", "w2", "b2", "g3", "be3"]


def decoder_stack(x, enc, la_bias, pad_bias, stacked, *, num_heads):
    """x: (B,S,D), enc: (B,Se,D), la_bias: (1,S,S), pad_bias: (B,1,Se)."""
    B, S, D = x.shape
    Se = enc.shape[1]
    L = stacked["wq1"].shape[0]

    def wspec(arr):
        _, d1, d2 = arr.shape
        return pl.BlockSpec((1, d1, d2), lambda b, l: (l, 0, 0))

    kern = functools.partial(_decoder_stack_kernel, num_heads=num_heads, eps=LN_EPS)
    return pl.pallas_call(
        kern,
        out_shape=jax.ShapeDtypeStruct((B, S, D), jnp.float32),
        grid=(B, L),
        in_specs=[
            pl.BlockSpec((1, S, D), lambda b, l: (b, 0, 0)),      # embedded input
            pl.BlockSpec((1, Se, D), lambda b, l: (b, 0, 0)),     # encoder output
            pl.BlockSpec((1, S, S), lambda b, l: (0, 0, 0)),      # causal bias (batch-invariant)
            pl.BlockSpec((1, 1, Se), lambda b, l: (b, 0, 0)),     # key-padding bias per batch
        ] + [wspec(stacked[k]) for k in _STACK_KEYS],
        out_specs=pl.BlockSpec((1, S, D), lambda b, l: (b, 0, 0)),
        scratch_shapes=[pltpu.VMEM((S, D), jnp.float32)],         # resident activation
        compiler_params=pltpu.CompilerParams(
            dimension_semantics=("parallel", "arbitrary")),
    )(x, enc, la_bias, pad_bias, *[stacked[k] for k in _STACK_KEYS])


# ----------------------------------------------------------------------------
# Model glue (plain JAX: embedding gather, positional encoding, mask -> bias)
# ----------------------------------------------------------------------------

def decoder_forward(params, tokens, enc_output, look_ahead_mask, padding_mask,
                    *, num_heads, model_dim):
    """tokens: (B,S) int32, enc_output: (B,Se,D),
    look_ahead_mask: (S,S) with 1.0 = masked, padding_mask: (B,Se) with 1.0 = masked."""
    B, S = tokens.shape
    # TODO(synk): embedding gather kept as XLA glue (data-dependent gather kernel
    # not worthwhile at this size).
    x = params["embedding"][tokens]                               # (B, S, D)
    x = x * jnp.sqrt(jnp.float32(model_dim))
    x = x + params["pos_encoding"][:S, :][None, :, :]
    # additive biases computed once (mask * -1e9), passed un-broadcast
    la_bias = (look_ahead_mask.astype(jnp.float32) * jnp.float32(-1e9)).reshape(1, S, S)
    pad_bias = (padding_mask.astype(jnp.float32) * jnp.float32(-1e9)).reshape(B, 1, -1)
    # dropout == identity (eval mode)
    return decoder_stack(x, enc_output, la_bias, pad_bias, params["stacked"],
                         num_heads=num_heads)


# ----------------------------------------------------------------------------
# Deterministic parameter construction (per-layer weights stacked on axis 0)
# ----------------------------------------------------------------------------

def make_pos_encoding(max_pos, d):
    pos = jnp.arange(max_pos, dtype=jnp.float32)[:, None]
    i = jnp.arange(d)[None, :]
    angle_rates = 1.0 / jnp.power(
        10000.0, (2.0 * (i // 2).astype(jnp.float32)) / float(d))
    angles = pos * angle_rates
    return jnp.where(i % 2 == 0, jnp.sin(angles), jnp.cos(angles)).astype(jnp.float32)


def init_params(key, num_layers, D, F, vocab, max_pos, num_heads):
    dh = D // num_heads
    qscale = 1.0 / math.sqrt(dh)
    keys = jax.random.split(key, num_layers + 1)
    embedding = 0.05 * jax.random.normal(keys[0], (vocab, D), jnp.float32)
    pos_encoding = make_pos_encoding(max_pos, D)

    def mha_weights(k):
        ks = jax.random.split(k, 4)
        wq = 0.05 * jax.random.normal(ks[0], (D, D), jnp.float32)
        wk = 0.05 * jax.random.normal(ks[1], (D, D), jnp.float32)
        wv = 0.05 * jax.random.normal(ks[2], (D, D), jnp.float32)
        wo = 0.05 * jax.random.normal(ks[3], (D, D), jnp.float32)
        return {
            # 1/sqrt(dh) folded into the Q projection; matmul weights stored bf16
            "wq": (wq * qscale).astype(jnp.bfloat16),
            "bq": jnp.zeros((1, D), jnp.float32),
            "wkv": jnp.concatenate([wk, wv], axis=1).astype(jnp.bfloat16),
            "bkv": jnp.zeros((1, 2 * D), jnp.float32),
            "wo": wo.astype(jnp.bfloat16),
            "bo": jnp.zeros((1, D), jnp.float32),
        }

    per_layer = []
    for i in range(num_layers):
        ks = jax.random.split(keys[i + 1], 4)
        m1 = mha_weights(ks[0])
        m2 = mha_weights(ks[1])
        layer = {
            "wq1": m1["wq"], "bq1": m1["bq"], "wkv1": m1["wkv"], "bkv1": m1["bkv"],
            "wo1": m1["wo"], "bo1": m1["bo"],
            "g1": jnp.ones((1, D), jnp.float32), "be1": jnp.zeros((1, D), jnp.float32),
            "wq2": m2["wq"], "bq2": m2["bq"], "wkv2": m2["wkv"], "bkv2": m2["bkv"],
            "wo2": m2["wo"], "bo2": m2["bo"],
            "g2": jnp.ones((1, D), jnp.float32), "be2": jnp.zeros((1, D), jnp.float32),
            "w1": (0.05 * jax.random.normal(ks[2], (D, F), jnp.float32)).astype(jnp.bfloat16),
            "b1": jnp.zeros((1, F), jnp.float32),
            "w2": (0.05 * jax.random.normal(ks[3], (F, D), jnp.float32)).astype(jnp.bfloat16),
            "b2": jnp.zeros((1, D), jnp.float32),
            "g3": jnp.ones((1, D), jnp.float32), "be3": jnp.zeros((1, D), jnp.float32),
        }
        per_layer.append(layer)

    stacked = {k: jnp.stack([lp[k] for lp in per_layer], axis=0) for k in _STACK_KEYS}
    return {"embedding": embedding, "pos_encoding": pos_encoding, "stacked": stacked}


# ----------------------------------------------------------------------------
# Main
# ----------------------------------------------------------------------------

if __name__ == "__main__":
    NUM_LAYERS = 2
    MODEL_DIM = 32
    NUM_HEADS = 4
    FF_DIM = 64
    VOCAB = 50
    MAX_POS = 16
    B, S, S_ENC = 2, 8, 8

    root = jax.random.PRNGKey(0)
    k_param, k_tok, k_enc = jax.random.split(root, 3)

    params = init_params(k_param, NUM_LAYERS, MODEL_DIM, FF_DIM, VOCAB, MAX_POS,
                         NUM_HEADS)

    tokens = jax.random.randint(k_tok, (B, S), 0, VOCAB, dtype=jnp.int32)
    enc_output = 0.1 * jax.random.normal(k_enc, (B, S_ENC, MODEL_DIM), jnp.float32)

    # look-ahead mask (S, S): 1.0 where a query may NOT attend (strictly future
    # keys); applied as logits += mask * -1e9, identical for every batch element.
    look_ahead_mask = jnp.triu(jnp.ones((S, S), jnp.float32), k=1)
    # padding mask (B, S_ENC): 1.0 marks masked encoder key positions
    # (last 2 positions of batch element 1 masked).
    padding_mask = jnp.stack(
        [jnp.zeros((S_ENC,), jnp.float32),
         jnp.concatenate([jnp.zeros((S_ENC - 2,), jnp.float32),
                          jnp.ones((2,), jnp.float32)])],
        axis=0)

    fwd = jax.jit(functools.partial(decoder_forward,
                                    num_heads=NUM_HEADS, model_dim=MODEL_DIM))
    out = fwd(params, tokens, enc_output, look_ahead_mask, padding_mask)
    out = jax.block_until_ready(out)

    assert out.shape == (B, S, MODEL_DIM)
    assert bool(jnp.all(jnp.isfinite(out)))
    print("KERNEL_OK")
</pallas_src>

<mosaic_0001>
module attributes {stable_mosaic.version = 11 : i64} {
  func.func @_decoder_stack_kernel(%arg0: i32, %arg1: i32, %arg2: memref<1x8x32xf32, #tpu.memory_space<vmem>>, %arg3: memref<1x8x32xf32, #tpu.memory_space<vmem>>, %arg4: memref<1x8x8xf32, #tpu.memory_space<vmem>>, %arg5: memref<1x1x8xf32, #tpu.memory_space<vmem>>, %arg6: memref<1x32x32xbf16, #tpu.memory_space<vmem>>, %arg7: memref<1x1x32xf32, #tpu.memory_space<vmem>>, %arg8: memref<1x32x64xbf16, #tpu.memory_space<vmem>>, %arg9: memref<1x1x64xf32, #tpu.memory_space<vmem>>, %arg10: memref<1x32x32xbf16, #tpu.memory_space<vmem>>, %arg11: memref<1x1x32xf32, #tpu.memory_space<vmem>>, %arg12: memref<1x1x32xf32, #tpu.memory_space<vmem>>, %arg13: memref<1x1x32xf32, #tpu.memory_space<vmem>>, %arg14: memref<1x32x32xbf16, #tpu.memory_space<vmem>>, %arg15: memref<1x1x32xf32, #tpu.memory_space<vmem>>, %arg16: memref<1x32x64xbf16, #tpu.memory_space<vmem>>, %arg17: memref<1x1x64xf32, #tpu.memory_space<vmem>>, %arg18: memref<1x32x32xbf16, #tpu.memory_space<vmem>>, %arg19: memref<1x1x32xf32, #tpu.memory_space<vmem>>, %arg20: memref<1x1x32xf32, #tpu.memory_space<vmem>>, %arg21: memref<1x1x32xf32, #tpu.memory_space<vmem>>, %arg22: memref<1x32x64xbf16, #tpu.memory_space<vmem>>, %arg23: memref<1x1x64xf32, #tpu.memory_space<vmem>>, %arg24: memref<1x64x32xbf16, #tpu.memory_space<vmem>>, %arg25: memref<1x1x32xf32, #tpu.memory_space<vmem>>, %arg26: memref<1x1x32xf32, #tpu.memory_space<vmem>>, %arg27: memref<1x1x32xf32, #tpu.memory_space<vmem>>, %arg28: memref<1x8x32xf32, #tpu.memory_space<vmem>>, %arg29: memref<8x32xf32, #tpu.memory_space<vmem>>) attributes {dimension_semantics = [#tpu.dimension_semantics<parallel>, #tpu.dimension_semantics<arbitrary>], iteration_bounds = array<i64: 2, 2>, scalar_prefetch = 0 : i64, scratch_operands = 1 : i64, tpu.core_type = #tpu.core_type<tc>, window_params = [{transform_indices = @transform_0, window_bounds = array<i64: 1, 8, 32>}, {transform_indices = @transform_1, window_bounds = array<i64: 1, 8, 32>}, {pipeline_mode = #tpu.pipeline_mode<synchronous>, transform_indices = @transform_2, window_bounds = array<i64: 1, 8, 8>}, {transform_indices = @transform_3, window_bounds = array<i64: 1, 1, 8>}, {transform_indices = @transform_4, window_bounds = array<i64: 1, 32, 32>}, {transform_indices = @transform_5, window_bounds = array<i64: 1, 1, 32>}, {transform_indices = @transform_6, window_bounds = array<i64: 1, 32, 64>}, {transform_indices = @transform_7, window_bounds = array<i64: 1, 1, 64>}, {transform_indices = @transform_8, window_bounds = array<i64: 1, 32, 32>}, {transform_indices = @transform_9, window_bounds = array<i64: 1, 1, 32>}, {transform_indices = @transform_10, window_bounds = array<i64: 1, 1, 32>}, {transform_indices = @transform_11, window_bounds = array<i64: 1, 1, 32>}, {transform_indices = @transform_12, window_bounds = array<i64: 1, 32, 32>}, {transform_indices = @transform_13, window_bounds = array<i64: 1, 1, 32>}, {transform_indices = @transform_14, window_bounds = array<i64: 1, 32, 64>}, {transform_indices = @transform_15, window_bounds = array<i64: 1, 1, 64>}, {transform_indices = @transform_16, window_bounds = array<i64: 1, 32, 32>}, {transform_indices = @transform_17, window_bounds = array<i64: 1, 1, 32>}, {transform_indices = @transform_18, window_bounds = array<i64: 1, 1, 32>}, {transform_indices = @transform_19, window_bounds = array<i64: 1, 1, 32>}, {transform_indices = @transform_20, window_bounds = array<i64: 1, 32, 64>}, {transform_indices = @transform_21, window_bounds = array<i64: 1, 1, 64>}, {transform_indices = @transform_22, window_bounds = array<i64: 1, 64, 32>}, {transform_indices = @transform_23, window_bounds = array<i64: 1, 1, 32>}, {transform_indices = @transform_24, window_bounds = array<i64: 1, 1, 32>}, {transform_indices = @transform_25, window_bounds = array<i64: 1, 1, 32>}, {transform_indices = @transform_26, window_bounds = array<i64: 1, 8, 32>}]} {
    %c0_i32 = arith.constant 0 : i32
    %0 = arith.cmpi eq, %arg1, %c0_i32 : i32
    %1 = arith.extui %0 : i1 to i32
    %c0_i32_0 = arith.constant 0 : i32
    %2 = arith.cmpi ne, %1, %c0_i32_0 : i32
    scf.if %2 {
      %c0_111 = arith.constant 0 : index
      %c0_112 = arith.constant 0 : index
      %c0_113 = arith.constant 0 : index
      %268 = vector.load %arg2[%c0_111, %c0_112, %c0_113] : memref<1x8x32xf32, #tpu.memory_space<vmem>>, vector<1x8x32xf32>
      %269 = vector.shape_cast %268 : vector<1x8x32xf32> to vector<8x32xf32>
      %c0_114 = arith.constant 0 : index
      %c0_115 = arith.constant 0 : index
      %270 = vector.load %arg29[%c0_114, %c0_115] : memref<8x32xf32, #tpu.memory_space<vmem>>, vector<8x32xf32>
      tpu.vector_store %arg29[%c0_114, %c0_115], %269 {strides = array<i32>} : memref<8x32xf32, #tpu.memory_space<vmem>>, vector<8x32xf32>,
    } else {
    }
    %c0 = arith.constant 0 : index
    %c0_1 = arith.constant 0 : index
    %3 = vector.load %arg29[%c0, %c0_1] : memref<8x32xf32, #tpu.memory_space<vmem>>, vector<8x32xf32>
    %c0_2 = arith.constant 0 : index
    %c0_3 = arith.constant 0 : index
    %c0_4 = arith.constant 0 : index
    %4 = vector.load %arg4[%c0_2, %c0_3, %c0_4] : memref<1x8x8xf32, #tpu.memory_space<vmem>>, vector<1x8x8xf32>
    %5 = vector.shape_cast %4 : vector<1x8x8xf32> to vector<8x8xf32>
    %c0_5 = arith.constant 0 : index
    %c0_6 = arith.constant 0 : index
    %c0_7 = arith.constant 0 : index
    %6 = vector.load %arg5[%c0_5, %c0_6, %c0_7] : memref<1x1x8xf32, #tpu.memory_space<vmem>>, vector<1x1x8xf32>
    %7 = vector.shape_cast %6 : vector<1x1x8xf32> to vector<1x8xf32>
    %8 = arith.truncf %3 : vector<8x32xf32> to vector<8x32xbf16>
    %c0_8 = arith.constant 0 : index
    %c0_9 = arith.constant 0 : index
    %c0_10 = arith.constant 0 : index
    %9 = vector.load %arg6[%c0_8, %c0_9, %c0_10] : memref<1x32x32xbf16, #tpu.memory_space<vmem>>, vector<1x32x32xbf16>
    %10 = vector.shape_cast %9 : vector<1x32x32xbf16> to vector<32x32xbf16>
    %c0_11 = arith.constant 0 : index
    %c0_12 = arith.constant 0 : index
    %c0_13 = arith.constant 0 : index
    %11 = vector.load %arg7[%c0_11, %c0_12, %c0_13] : memref<1x1x32xf32, #tpu.memory_space<vmem>>, vector<1x1x32xf32>
    %12 = vector.shape_cast %11 : vector<1x1x32xf32> to vector<1x32xf32>
    %c0_14 = arith.constant 0 : index
    %c0_15 = arith.constant 0 : index
    %c0_16 = arith.constant 0 : index
    %13 = vector.load %arg8[%c0_14, %c0_15, %c0_16] : memref<1x32x64xbf16, #tpu.memory_space<vmem>>, vector<1x32x64xbf16>
    %14 = vector.shape_cast %13 : vector<1x32x64xbf16> to vector<32x64xbf16>
    %c0_17 = arith.constant 0 : index
    %c0_18 = arith.constant 0 : index
    %c0_19 = arith.constant 0 : index
    %15 = vector.load %arg9[%c0_17, %c0_18, %c0_19] : memref<1x1x64xf32, #tpu.memory_space<vmem>>, vector<1x1x64xf32>
    %16 = vector.shape_cast %15 : vector<1x1x64xf32> to vector<1x64xf32>
    %c0_20 = arith.constant 0 : index
    %c0_21 = arith.constant 0 : index
    %c0_22 = arith.constant 0 : index
    %17 = vector.load %arg10[%c0_20, %c0_21, %c0_22] : memref<1x32x32xbf16, #tpu.memory_space<vmem>>, vector<1x32x32xbf16>
    %18 = vector.shape_cast %17 : vector<1x32x32xbf16> to vector<32x32xbf16>
    %c0_23 = arith.constant 0 : index
    %c0_24 = arith.constant 0 : index
    %c0_25 = arith.constant 0 : index
    %19 = vector.load %arg11[%c0_23, %c0_24, %c0_25] : memref<1x1x32xf32, #tpu.memory_space<vmem>>, vector<1x1x32xf32>
    %20 = vector.shape_cast %19 : vector<1x1x32xf32> to vector<1x32xf32>
    %c0_26 = arith.constant 0 : index
    %c0_27 = arith.constant 0 : index
    %c0_28 = arith.constant 0 : index
    %21 = vector.load %arg12[%c0_26, %c0_27, %c0_28] : memref<1x1x32xf32, #tpu.memory_space<vmem>>, vector<1x1x32xf32>
    %22 = vector.shape_cast %21 : vector<1x1x32xf32> to vector<1x32xf32>
    %c0_29 = arith.constant 0 : index
    %c0_30 = arith.constant 0 : index
    %c0_31 = arith.constant 0 : index
    %23 = vector.load %arg13[%c0_29, %c0_30, %c0_31] : memref<1x1x32xf32, #tpu.memory_space<vmem>>, vector<1x1x32xf32>
    %24 = vector.shape_cast %23 : vector<1x1x32xf32> to vector<1x32xf32>
    %cst = arith.constant dense<0.000000e+00> : vector<8x32xf32>
    %25 = tpu.matmul %8, %10, %cst {dimension_numbers = #tpu.dot_dimension_numbers<[1], [0], [0], [1], [0, 0, 1, 1], [], []>} : vector<8x32xbf16>, vector<32x32xbf16>, vector<8x32xf32> -> vector<8x32xf32>
    %26 = vector.broadcast %12 : vector<1x32xf32> to vector<8x32xf32>
    %27 = arith.addf %25, %26 : vector<8x32xf32>
    %cst_32 = arith.constant dense<0.000000e+00> : vector<8x64xf32>
    %28 = tpu.matmul %8, %14, %cst_32 {dimension_numbers = #tpu.dot_dimension_numbers<[1], [0], [0], [1], [0, 0, 1, 1], [], []>} : vector<8x32xbf16>, vector<32x64xbf16>, vector<8x64xf32> -> vector<8x64xf32>
    %29 = vector.broadcast %16 : vector<1x64xf32> to vector<8x64xf32>
    %30 = arith.addf %28, %29 : vector<8x64xf32>
    %31 = arith.truncf %27 : vector<8x32xf32> to vector<8x32xbf16>
    %32 = arith.truncf %30 : vector<8x64xf32> to vector<8x64xbf16>
    %33 = vector.extract_strided_slice %31 {offsets = [0, 0], sizes = [8, 8], strides = [1, 1]} : vector<8x32xbf16> to vector<8x8xbf16>
    %34 = vector.extract_strided_slice %31 {offsets = [0, 8], sizes = [8, 8], strides = [1, 1]} : vector<8x32xbf16> to vector<8x8xbf16>
    %35 = vector.extract_strided_slice %31 {offsets = [0, 16], sizes = [8, 8], strides = [1, 1]} : vector<8x32xbf16> to vector<8x8xbf16>
    %36 = vector.extract_strided_slice %31 {offsets = [0, 24], sizes = [8, 8], strides = [1, 1]} : vector<8x32xbf16> to vector<8x8xbf16>
    %37 = vector.shape_cast %33 : vector<8x8xbf16> to vector<1x8x8xbf16>
    %38 = vector.shape_cast %34 : vector<8x8xbf16> to vector<1x8x8xbf16>
    %39 = vector.shape_cast %35 : vector<8x8xbf16> to vector<1x8x8xbf16>
    %40 = vector.shape_cast %36 : vector<8x8xbf16> to vector<1x8x8xbf16>
    %41 = tpu.concatenate %37, %38, %39, %40 in 0 : vector<1x8x8xbf16>, vector<1x8x8xbf16>, vector<1x8x8xbf16>, vector<1x8x8xbf16> -> vector<4x8x8xbf16>
    %42 = vector.extract_strided_slice %32 {offsets = [0, 0], sizes = [8, 8], strides = [1, 1]} : vector<8x64xbf16> to vector<8x8xbf16>
    %43 = vector.extract_strided_slice %32 {offsets = [0, 8], sizes = [8, 8], strides = [1, 1]} : vector<8x64xbf16> to vector<8x8xbf16>
    %44 = vector.extract_strided_slice %32 {offsets = [0, 16], sizes = [8, 8], strides = [1, 1]} : vector<8x64xbf16> to vector<8x8xbf16>
    %45 = vector.extract_strided_slice %32 {offsets = [0, 24], sizes = [8, 8], strides = [1, 1]} : vector<8x64xbf16> to vector<8x8xbf16>
    %46 = vector.shape_cast %42 : vector<8x8xbf16> to vector<1x8x8xbf16>
    %47 = vector.shape_cast %43 : vector<8x8xbf16> to vector<1x8x8xbf16>
    %48 = vector.shape_cast %44 : vector<8x8xbf16> to vector<1x8x8xbf16>
    %49 = vector.shape_cast %45 : vector<8x8xbf16> to vector<1x8x8xbf16>
    %50 = tpu.concatenate %46, %47, %48, %49 in 0 : vector<1x8x8xbf16>, vector<1x8x8xbf16>, vector<1x8x8xbf16>, vector<1x8x8xbf16> -> vector<4x8x8xbf16>
    %51 = vector.extract_strided_slice %32 {offsets = [0, 32], sizes = [8, 8], strides = [1, 1]} : vector<8x64xbf16> to vector<8x8xbf16>
    %52 = vector.extract_strided_slice %32 {offsets = [0, 40], sizes = [8, 8], strides = [1, 1]} : vector<8x64xbf16> to vector<8x8xbf16>
    %53 = vector.extract_strided_slice %32 {offsets = [0, 48], sizes = [8, 8], strides = [1, 1]} : vector<8x64xbf16> to vector<8x8xbf16>
    %54 = vector.extract_strided_slice %32 {offsets = [0, 56], sizes = [8, 8], strides = [1, 1]} : vector<8x64xbf16> to vector<8x8xbf16>
    %55 = vector.shape_cast %51 : vector<8x8xbf16> to vector<1x8x8xbf16>
    %56 = vector.shape_cast %52 : vector<8x8xbf16> to vector<1x8x8xbf16>
    %57 = vector.shape_cast %53 : vector<8x8xbf16> to vector<1x8x8xbf16>
    %58 = vector.shape_cast %54 : vector<8x8xbf16> to vector<1x8x8xbf16>
    %59 = tpu.concatenate %55, %56, %57, %58 in 0 : vector<1x8x8xbf16>, vector<1x8x8xbf16>, vector<1x8x8xbf16>, vector<1x8x8xbf16> -> vector<4x8x8xbf16>
    "tpu.trace_start"() <{level = 10 : i32, message = "hqd,hkd->hqk"}> : () -> ()
    %cst_33 = arith.constant dense<0.000000e+00> : vector<4x8x8xf32>
    %60 = tpu.matmul %41, %50, %cst_33 {dimension_numbers = #tpu.dot_dimension_numbers<[2], [2], [1], [1], [0, 0, 0, 1, 1, 1], [0], [0]>} : vector<4x8x8xbf16>, vector<4x8x8xbf16>, vector<4x8x8xf32> -> vector<4x8x8xf32>
    "tpu.trace_stop"() : () -> ()
    %61 = vector.shape_cast %5 : vector<8x8xf32> to vector<1x8x8xf32>
    %62 = vector.broadcast %61 : vector<1x8x8xf32> to vector<4x8x8xf32>
    %63 = arith.addf %60, %62 : vector<4x8x8xf32>
    %cst_34 = arith.constant dense<0xFF800000> : vector<4x8xf32>
    %64 = vector.multi_reduction <maximumf>, %63, %cst_34 [2] : vector<4x8x8xf32> to vector<4x8xf32>
    %65 = vector.shape_cast %64 : vector<4x8xf32> to vector<4x8x1xf32>
    %66 = vector.broadcast %65 : vector<4x8x1xf32> to vector<4x8x8xf32>
    %67 = arith.subf %63, %66 : vector<4x8x8xf32>
    %68 = math.exp %67 : vector<4x8x8xf32>
    %cst_35 = arith.constant dense<0.000000e+00> : vector<4x8xf32>
    %69 = vector.multi_reduction <add>, %68, %cst_35 [2] : vector<4x8x8xf32> to vector<4x8xf32>
    %70 = vector.shape_cast %69 : vector<4x8xf32> to vector<4x8x1xf32>
    %71 = tpu.reciprocal %70 {approx = true} : vector<4x8x1xf32> -> vector<4x8x1xf32>
    %72 = vector.broadcast %71 : vector<4x8x1xf32> to vector<4x8x8xf32>
    %73 = arith.mulf %68, %72 : vector<4x8x8xf32>
    %74 = arith.truncf %73 : vector<4x8x8xf32> to vector<4x8x8xbf16>
    "tpu.trace_start"() <{level = 10 : i32, message = "hqk,hkd->hqd"}> : () -> ()
    %cst_36 = arith.constant dense<0.000000e+00> : vector<4x8x8xf32>
    %75 = tpu.matmul %74, %59, %cst_36 {dimension_numbers = #tpu.dot_dimension_numbers<[2], [1], [1], [2], [0, 0, 0, 1, 1, 2], [0], [0]>} : vector<4x8x8xbf16>, vector<4x8x8xbf16>, vector<4x8x8xf32> -> vector<4x8x8xf32>
    "tpu.trace_stop"() : () -> ()
    %76 = vector.extract_strided_slice %75 {offsets = [0, 0, 0], sizes = [1, 8, 8], strides = [1, 1, 1]} : vector<4x8x8xf32> to vector<1x8x8xf32>
    %77 = vector.shape_cast %76 : vector<1x8x8xf32> to vector<8x8xf32>
    %78 = vector.extract_strided_slice %75 {offsets = [1, 0, 0], sizes = [1, 8, 8], strides = [1, 1, 1]} : vector<4x8x8xf32> to vector<1x8x8xf32>
    %79 = vector.shape_cast %78 : vector<1x8x8xf32> to vector<8x8xf32>
    %80 = vector.extract_strided_slice %75 {offsets = [2, 0, 0], sizes = [1, 8, 8], strides = [1, 1, 1]} : vector<4x8x8xf32> to vector<1x8x8xf32>
    %81 = vector.shape_cast %80 : vector<1x8x8xf32> to vector<8x8xf32>
    %82 = vector.extract_strided_slice %75 {offsets = [3, 0, 0], sizes = [1, 8, 8], strides = [1, 1, 1]} : vector<4x8x8xf32> to vector<1x8x8xf32>
    %83 = vector.shape_cast %82 : vector<1x8x8xf32> to vector<8x8xf32>
    %84 = tpu.concatenate %77, %79, %81, %83 in 1 : vector<8x8xf32>, vector<8x8xf32>, vector<8x8xf32>, vector<8x8xf32> -> vector<8x32xf32>
    %85 = arith.truncf %84 : vector<8x32xf32> to vector<8x32xbf16>
    %cst_37 = arith.constant dense<0.000000e+00> : vector<8x32xf32>
    %86 = tpu.matmul %85, %18, %cst_37 {dimension_numbers = #tpu.dot_dimension_numbers<[1], [0], [0], [1], [0, 0, 1, 1], [], []>} : vector<8x32xbf16>, vector<32x32xbf16>, vector<8x32xf32> -> vector<8x32xf32>
    %87 = vector.broadcast %20 : vector<1x32xf32> to vector<8x32xf32>
    %88 = arith.addf %86, %87 : vector<8x32xf32>
    %89 = arith.addf %88, %3 : vector<8x32xf32>
    %cst_38 = arith.constant dense<0.000000e+00> : vector<8xf32>
    %90 = vector.multi_reduction <add>, %89, %cst_38 [1] : vector<8x32xf32> to vector<8xf32>
    %91 = vector.shape_cast %90 : vector<8xf32> to vector<8x1xf32>
    %cst_39 = arith.constant 3.200000e+01 : f32
    %92 = vector.broadcast %cst_39 : f32 to vector<8x1xf32>
    %93 = arith.divf %91, %92 : vector<8x1xf32>
    %94 = vector.broadcast %93 : vector<8x1xf32> to vector<8x32xf32>
    %95 = arith.subf %89, %94 : vector<8x32xf32>
    %96 = arith.mulf %95, %95 : vector<8x32xf32>
    %cst_40 = arith.constant dense<0.000000e+00> : vector<8xf32>
    %97 = vector.multi_reduction <add>, %96, %cst_40 [1] : vector<8x32xf32> to vector<8xf32>
    %98 = vector.shape_cast %97 : vector<8xf32> to vector<8x1xf32>
    %cst_41 = arith.constant 3.200000e+01 : f32
    %99 = vector.broadcast %cst_41 : f32 to vector<8x1xf32>
    %100 = arith.divf %98, %99 : vector<8x1xf32>
    %101 = vector.broadcast %93 : vector<8x1xf32> to vector<8x32xf32>
    %102 = arith.subf %89, %101 : vector<8x32xf32>
    %cst_42 = arith.constant 9.99999997E-7 : f32
    %103 = vector.broadcast %cst_42 : f32 to vector<8x1xf32>
    %104 = arith.addf %100, %103 : vector<8x1xf32>
    %105 = math.rsqrt %104 : vector<8x1xf32>
    %106 = vector.broadcast %105 : vector<8x1xf32> to vector<8x32xf32>
    %107 = arith.mulf %102, %106 : vector<8x32xf32>
    %108 = vector.broadcast %22 : vector<1x32xf32> to vector<8x32xf32>
    %109 = arith.mulf %107, %108 : vector<8x32xf32>
    %110 = vector.broadcast %24 : vector<1x32xf32> to vector<8x32xf32>
    %111 = arith.addf %109, %110 : vector<8x32xf32>
    %c0_43 = arith.constant 0 : index
    %c0_44 = arith.constant 0 : index
    %c0_45 = arith.constant 0 : index
    %112 = vector.load %arg3[%c0_43, %c0_44, %c0_45] : memref<1x8x32xf32, #tpu.memory_space<vmem>>, vector<1x8x32xf32>
    %113 = vector.shape_cast %112 : vector<1x8x32xf32> to vector<8x32xf32>
    %114 = arith.truncf %113 : vector<8x32xf32> to vector<8x32xbf16>
    %115 = arith.truncf %111 : vector<8x32xf32> to vector<8x32xbf16>
    %c0_46 = arith.constant 0 : index
    %c0_47 = arith.constant 0 : index
    %c0_48 = arith.constant 0 : index
    %116 = vector.load %arg14[%c0_46, %c0_47, %c0_48] : memref<1x32x32xbf16, #tpu.memory_space<vmem>>, vector<1x32x32xbf16>
    %117 = vector.shape_cast %116 : vector<1x32x32xbf16> to vector<32x32xbf16>
    %c0_49 = arith.constant 0 : index
    %c0_50 = arith.constant 0 : index
    %c0_51 = arith.constant 0 : index
    %118 = vector.load %arg15[%c0_49, %c0_50, %c0_51] : memref<1x1x32xf32, #tpu.memory_space<vmem>>, vector<1x1x32xf32>
    %119 = vector.shape_cast %118 : vector<1x1x32xf32> to vector<1x32xf32>
    %c0_52 = arith.constant 0 : index
    %c0_53 = arith.constant 0 : index
    %c0_54 = arith.constant 0 : index
    %120 = vector.load %arg16[%c0_52, %c0_53, %c0_54] : memref<1x32x64xbf16, #tpu.memory_space<vmem>>, vector<1x32x64xbf16>
    %121 = vector.shape_cast %120 : vector<1x32x64xbf16> to vector<32x64xbf16>
    %c0_55 = arith.constant 0 : index
    %c0_56 = arith.constant 0 : index
    %c0_57 = arith.constant 0 : index
    %122 = vector.load %arg17[%c0_55, %c0_56, %c0_57] : memref<1x1x64xf32, #tpu.memory_space<vmem>>, vector<1x1x64xf32>
    %123 = vector.shape_cast %122 : vector<1x1x64xf32> to vector<1x64xf32>
    %c0_58 = arith.constant 0 : index
    %c0_59 = arith.constant 0 : index
    %c0_60 = arith.constant 0 : index
    %124 = vector.load %arg18[%c0_58, %c0_59, %c0_60] : memref<1x32x32xbf16, #tpu.memory_space<vmem>>, vector<1x32x32xbf16>
    %125 = vector.shape_cast %124 : vector<1x32x32xbf16> to vector<32x32xbf16>
    %c0_61 = arith.constant 0 : index
    %c0_62 = arith.constant 0 : index
    %c0_63 = arith.constant 0 : index
    %126 = vector.load %arg19[%c0_61, %c0_62, %c0_63] : memref<1x1x32xf32, #tpu.memory_space<vmem>>, vector<1x1x32xf32>
    %127 = vector.shape_cast %126 : vector<1x1x32xf32> to vector<1x32xf32>
    %c0_64 = arith.constant 0 : index
    %c0_65 = arith.constant 0 : index
    %c0_66 = arith.constant 0 : index
    %128 = vector.load %arg20[%c0_64, %c0_65, %c0_66] : memref<1x1x32xf32, #tpu.memory_space<vmem>>, vector<1x1x32xf32>
    %129 = vector.shape_cast %128 : vector<1x1x32xf32> to vector<1x32xf32>
    %c0_67 = arith.constant 0 : index
    %c0_68 = arith.constant 0 : index
    %c0_69 = arith.constant 0 : index
    %130 = vector.load %arg21[%c0_67, %c0_68, %c0_69] : memref<1x1x32xf32, #tpu.memory_space<vmem>>, vector<1x1x32xf32>
    %131 = vector.shape_cast %130 : vector<1x1x32xf32> to vector<1x32xf32>
    %cst_70 = arith.constant dense<0.000000e+00> : vector<8x32xf32>
    %132 = tpu.matmul %115, %117, %cst_70 {dimension_numbers = #tpu.dot_dimension_numbers<[1], [0], [0], [1], [0, 0, 1, 1], [], []>} : vector<8x32xbf16>, vector<32x32xbf16>, vector<8x32xf32> -> vector<8x32xf32>
    %133 = vector.broadcast %119 : vector<1x32xf32> to vector<8x32xf32>
    %134 = arith.addf %132, %133 : vector<8x32xf32>
    %cst_71 = arith.constant dense<0.000000e+00> : vector<8x64xf32>
    %135 = tpu.matmul %114, %121, %cst_71 {dimension_numbers = #tpu.dot_dimension_numbers<[1], [0], [0], [1], [0, 0, 1, 1], [], []>} : vector<8x32xbf16>, vector<32x64xbf16>, vector<8x64xf32> -> vector<8x64xf32>
    %136 = vector.broadcast %123 : vector<1x64xf32> to vector<8x64xf32>
    %137 = arith.addf %135, %136 : vector<8x64xf32>
    %138 = arith.truncf %134 : vector<8x32xf32> to vector<8x32xbf16>
    %139 = arith.truncf %137 : vector<8x64xf32> to vector<8x64xbf16>
    %140 = vector.extract_strided_slice %138 {offsets = [0, 0], sizes = [8, 8], strides = [1, 1]} : vector<8x32xbf16> to vector<8x8xbf16>
    %141 = vector.extract_strided_slice %138 {offsets = [0, 8], sizes = [8, 8], strides = [1, 1]} : vector<8x32xbf16> to vector<8x8xbf16>
    %142 = vector.extract_strided_slice %138 {offsets = [0, 16], sizes = [8, 8], strides = [1, 1]} : vector<8x32xbf16> to vector<8x8xbf16>
    %143 = vector.extract_strided_slice %138 {offsets = [0, 24], sizes = [8, 8], strides = [1, 1]} : vector<8x32xbf16> to vector<8x8xbf16>
    %144 = vector.shape_cast %140 : vector<8x8xbf16> to vector<1x8x8xbf16>
    %145 = vector.shape_cast %141 : vector<8x8xbf16> to vector<1x8x8xbf16>
    %146 = vector.shape_cast %142 : vector<8x8xbf16> to vector<1x8x8xbf16>
    %147 = vector.shape_cast %143 : vector<8x8xbf16> to vector<1x8x8xbf16>
    %148 = tpu.concatenate %144, %145, %146, %147 in 0 : vector<1x8x8xbf16>, vector<1x8x8xbf16>, vector<1x8x8xbf16>, vector<1x8x8xbf16> -> vector<4x8x8xbf16>
    %149 = vector.extract_strided_slice %139 {offsets = [0, 0], sizes = [8, 8], strides = [1, 1]} : vector<8x64xbf16> to vector<8x8xbf16>
    %150 = vector.extract_strided_slice %139 {offsets = [0, 8], sizes = [8, 8], strides = [1, 1]} : vector<8x64xbf16> to vector<8x8xbf16>
    %151 = vector.extract_strided_slice %139 {offsets = [0, 16], sizes = [8, 8], strides = [1, 1]} : vector<8x64xbf16> to vector<8x8xbf16>
    %152 = vector.extract_strided_slice %139 {offsets = [0, 24], sizes = [8, 8], strides = [1, 1]} : vector<8x64xbf16> to vector<8x8xbf16>
    %153 = vector.shape_cast %149 : vector<8x8xbf16> to vector<1x8x8xbf16>
    %154 = vector.shape_cast %150 : vector<8x8xbf16> to vector<1x8x8xbf16>
    %155 = vector.shape_cast %151 : vector<8x8xbf16> to vector<1x8x8xbf16>
    %156 = vector.shape_cast %152 : vector<8x8xbf16> to vector<1x8x8xbf16>
    %157 = tpu.concatenate %153, %154, %155, %156 in 0 : vector<1x8x8xbf16>, vector<1x8x8xbf16>, vector<1x8x8xbf16>, vector<1x8x8xbf16> -> vector<4x8x8xbf16>
    %158 = vector.extract_strided_slice %139 {offsets = [0, 32], sizes = [8, 8], strides = [1, 1]} : vector<8x64xbf16> to vector<8x8xbf16>
    %159 = vector.extract_strided_slice %139 {offsets = [0, 40], sizes = [8, 8], strides = [1, 1]} : vector<8x64xbf16> to vector<8x8xbf16>
    %160 = vector.extract_strided_slice %139 {offsets = [0, 48], sizes = [8, 8], strides = [1, 1]} : vector<8x64xbf16> to vector<8x8xbf16>
    %161 = vector.extract_strided_slice %139 {offsets = [0, 56], sizes = [8, 8], strides = [1, 1]} : vector<8x64xbf16> to vector<8x8xbf16>
    %162 = vector.shape_cast %158 : vector<8x8xbf16> to vector<1x8x8xbf16>
    %163 = vector.shape_cast %159 : vector<8x8xbf16> to vector<1x8x8xbf16>
    %164 = vector.shape_cast %160 : vector<8x8xbf16> to vector<1x8x8xbf16>
    %165 = vector.shape_cast %161 : vector<8x8xbf16> to vector<1x8x8xbf16>
    %166 = tpu.concatenate %162, %163, %164, %165 in 0 : vector<1x8x8xbf16>, vector<1x8x8xbf16>, vector<1x8x8xbf16>, vector<1x8x8xbf16> -> vector<4x8x8xbf16>
    "tpu.trace_start"() <{level = 10 : i32, message = "hqd,hkd->hqk"}> : () -> ()
    %cst_72 = arith.constant dense<0.000000e+00> : vector<4x8x8xf32>
    %167 = tpu.matmul %148, %157, %cst_72 {dimension_numbers = #tpu.dot_dimension_numbers<[2], [2], [1], [1], [0, 0, 0, 1, 1, 1], [0], [0]>} : vector<4x8x8xbf16>, vector<4x8x8xbf16>, vector<4x8x8xf32> -> vector<4x8x8xf32>
    "tpu.trace_stop"() : () -> ()
    %168 = vector.shape_cast %7 : vector<1x8xf32> to vector<1x1x8xf32>
    %169 = vector.broadcast %168 : vector<1x1x8xf32> to vector<4x8x8xf32>
    %170 = arith.addf %167, %169 : vector<4x8x8xf32>
    %cst_73 = arith.constant dense<0xFF800000> : vector<4x8xf32>
    %171 = vector.multi_reduction <maximumf>, %170, %cst_73 [2] : vector<4x8x8xf32> to vector<4x8xf32>
    %172 = vector.shape_cast %171 : vector<4x8xf32> to vector<4x8x1xf32>
    %173 = vector.broadcast %172 : vector<4x8x1xf32> to vector<4x8x8xf32>
    %174 = arith.subf %170, %173 : vector<4x8x8xf32>
    %175 = math.exp %174 : vector<4x8x8xf32>
    %cst_74 = arith.constant dense<0.000000e+00> : vector<4x8xf32>
    %176 = vector.multi_reduction <add>, %175, %cst_74 [2] : vector<4x8x8xf32> to vector<4x8xf32>
    %177 = vector.shape_cast %176 : vector<4x8xf32> to vector<4x8x1xf32>
    %178 = tpu.reciprocal %177 {approx = true} : vector<4x8x1xf32> -> vector<4x8x1xf32>
    %179 = vector.broadcast %178 : vector<4x8x1xf32> to vector<4x8x8xf32>
    %180 = arith.mulf %175, %179 : vector<4x8x8xf32>
    %181 = arith.truncf %180 : vector<4x8x8xf32> to vector<4x8x8xbf16>
    "tpu.trace_start"() <{level = 10 : i32, message = "hqk,hkd->hqd"}> : () -> ()
    %cst_75 = arith.constant dense<0.000000e+00> : vector<4x8x8xf32>
    %182 = tpu.matmul %181, %166, %cst_75 {dimension_numbers = #tpu.dot_dimension_numbers<[2], [1], [1], [2], [0, 0, 0, 1, 1, 2], [0], [0]>} : vector<4x8x8xbf16>, vector<4x8x8xbf16>, vector<4x8x8xf32> -> vector<4x8x8xf32>
    "tpu.trace_stop"() : () -> ()
    %183 = vector.extract_strided_slice %182 {offsets = [0, 0, 0], sizes = [1, 8, 8], strides = [1, 1, 1]} : vector<4x8x8xf32> to vector<1x8x8xf32>
    %184 = vector.shape_cast %183 : vector<1x8x8xf32> to vector<8x8xf32>
    %185 = vector.extract_strided_slice %182 {offsets = [1, 0, 0], sizes = [1, 8, 8], strides = [1, 1, 1]} : vector<4x8x8xf32> to vector<1x8x8xf32>
    %186 = vector.shape_cast %185 : vector<1x8x8xf32> to vector<8x8xf32>
    %187 = vector.extract_strided_slice %182 {offsets = [2, 0, 0], sizes = [1, 8, 8], strides = [1, 1, 1]} : vector<4x8x8xf32> to vector<1x8x8xf32>
    %188 = vector.shape_cast %187 : vector<1x8x8xf32> to vector<8x8xf32>
    %189 = vector.extract_strided_slice %182 {offsets = [3, 0, 0], sizes = [1, 8, 8], strides = [1, 1, 1]} : vector<4x8x8xf32> to vector<1x8x8xf32>
    %190 = vector.shape_cast %189 : vector<1x8x8xf32> to vector<8x8xf32>
    %191 = tpu.concatenate %184, %186, %188, %190 in 1 : vector<8x8xf32>, vector<8x8xf32>, vector<8x8xf32>, vector<8x8xf32> -> vector<8x32xf32>
    %192 = arith.truncf %191 : vector<8x32xf32> to vector<8x32xbf16>
    %cst_76 = arith.constant dense<0.000000e+00> : vector<8x32xf32>
    %193 = tpu.matmul %192, %125, %cst_76 {dimension_numbers = #tpu.dot_dimension_numbers<[1], [0], [0], [1], [0, 0, 1, 1], [], []>} : vector<8x32xbf16>, vector<32x32xbf16>, vector<8x32xf32> -> vector<8x32xf32>
    %194 = vector.broadcast %127 : vector<1x32xf32> to vector<8x32xf32>
    %195 = arith.addf %193, %194 : vector<8x32xf32>
    %196 = arith.addf %195, %111 : vector<8x32xf32>
    %cst_77 = arith.constant dense<0.000000e+00> : vector<8xf32>
    %197 = vector.multi_reduction <add>, %196, %cst_77 [1] : vector<8x32xf32> to vector<8xf32>
    %198 = vector.shape_cast %197 : vector<8xf32> to vector<8x1xf32>
    %cst_78 = arith.constant 3.200000e+01 : f32
    %199 = vector.broadcast %cst_78 : f32 to vector<8x1xf32>
    %200 = arith.divf %198, %199 : vector<8x1xf32>
    %201 = vector.broadcast %200 : vector<8x1xf32> to vector<8x32xf32>
    %202 = arith.subf %196, %201 : vector<8x32xf32>
    %203 = arith.mulf %202, %202 : vector<8x32xf32>
    %cst_79 = arith.constant dense<0.000000e+00> : vector<8xf32>
    %204 = vector.multi_reduction <add>, %203, %cst_79 [1] : vector<8x32xf32> to vector<8xf32>
    %205 = vector.shape_cast %204 : vector<8xf32> to vector<8x1xf32>
    %cst_80 = arith.constant 3.200000e+01 : f32
    %206 = vector.broadcast %cst_80 : f32 to vector<8x1xf32>
    %207 = arith.divf %205, %206 : vector<8x1xf32>
    %208 = vector.broadcast %200 : vector<8x1xf32> to vector<8x32xf32>
    %209 = arith.subf %196, %208 : vector<8x32xf32>
    %cst_81 = arith.constant 9.99999997E-7 : f32
    %210 = vector.broadcast %cst_81 : f32 to vector<8x1xf32>
    %211 = arith.addf %207, %210 : vector<8x1xf32>
    %212 = math.rsqrt %211 : vector<8x1xf32>
    %213 = vector.broadcast %212 : vector<8x1xf32> to vector<8x32xf32>
    %214 = arith.mulf %209, %213 : vector<8x32xf32>
    %215 = vector.broadcast %129 : vector<1x32xf32> to vector<8x32xf32>
    %216 = arith.mulf %214, %215 : vector<8x32xf32>
    %217 = vector.broadcast %131 : vector<1x32xf32> to vector<8x32xf32>
    %218 = arith.addf %216, %217 : vector<8x32xf32>
    %219 = arith.truncf %218 : vector<8x32xf32> to vector<8x32xbf16>
    %c0_82 = arith.constant 0 : index
    %c0_83 = arith.constant 0 : index
    %c0_84 = arith.constant 0 : index
    %220 = vector.load %arg22[%c0_82, %c0_83, %c0_84] : memref<1x32x64xbf16, #tpu.memory_space<vmem>>, vector<1x32x64xbf16>
    %221 = vector.shape_cast %220 : vector<1x32x64xbf16> to vector<32x64xbf16>
    %cst_85 = arith.constant dense<0.000000e+00> : vector<8x64xf32>
    %222 = tpu.matmul %219, %221, %cst_85 {dimension_numbers = #tpu.dot_dimension_numbers<[1], [0], [0], [1], [0, 0, 1, 1], [], []>} : vector<8x32xbf16>, vector<32x64xbf16>, vector<8x64xf32> -> vector<8x64xf32>
    %c0_86 = arith.constant 0 : index
    %c0_87 = arith.constant 0 : index
    %c0_88 = arith.constant 0 : index
    %223 = vector.load %arg23[%c0_86, %c0_87, %c0_88] : memref<1x1x64xf32, #tpu.memory_space<vmem>>, vector<1x1x64xf32>
    %224 = vector.shape_cast %223 : vector<1x1x64xf32> to vector<1x64xf32>
    %225 = vector.broadcast %224 : vector<1x64xf32> to vector<8x64xf32>
    %226 = arith.addf %222, %225 : vector<8x64xf32>
    %cst_89 = arith.constant 0.000000e+00 : f32
    %227 = vector.broadcast %cst_89 : f32 to vector<8x64xf32>
    %228 = arith.maximumf %226, %227 : vector<8x64xf32>
    %229 = arith.truncf %228 : vector<8x64xf32> to vector<8x64xbf16>
    %c0_90 = arith.constant 0 : index
    %c0_91 = arith.constant 0 : index
    %c0_92 = arith.constant 0 : index
    %230 = vector.load %arg24[%c0_90, %c0_91, %c0_92] : memref<1x64x32xbf16, #tpu.memory_space<vmem>>, vector<1x64x32xbf16>
    %231 = vector.shape_cast %230 : vector<1x64x32xbf16> to vector<64x32xbf16>
    %cst_93 = arith.constant dense<0.000000e+00> : vector<8x32xf32>
    %232 = tpu.matmul %229, %231, %cst_93 {dimension_numbers = #tpu.dot_dimension_numbers<[1], [0], [0], [1], [0, 0, 1, 1], [], []>} : vector<8x64xbf16>, vector<64x32xbf16>, vector<8x32xf32> -> vector<8x32xf32>
    %c0_94 = arith.constant 0 : index
    %c0_95 = arith.constant 0 : index
    %c0_96 = arith.constant 0 : index
    %233 = vector.load %arg25[%c0_94, %c0_95, %c0_96] : memref<1x1x32xf32, #tpu.memory_space<vmem>>, vector<1x1x32xf32>
    %234 = vector.shape_cast %233 : vector<1x1x32xf32> to vector<1x32xf32>
    %235 = vector.broadcast %234 : vector<1x32xf32> to vector<8x32xf32>
    %236 = arith.addf %232, %235 : vector<8x32xf32>
    %237 = arith.addf %236, %218 : vector<8x32xf32>
    %c0_97 = arith.constant 0 : index
    %c0_98 = arith.constant 0 : index
    %c0_99 = arith.constant 0 : index
    %238 = vector.load %arg26[%c0_97, %c0_98, %c0_99] : memref<1x1x32xf32, #tpu.memory_space<vmem>>, vector<1x1x32xf32>
    %239 = vector.shape_cast %238 : vector<1x1x32xf32> to vector<1x32xf32>
    %c0_100 = arith.constant 0 : index
    %c0_101 = arith.constant 0 : index
    %c0_102 = arith.constant 0 : index
    %240 = vector.load %arg27[%c0_100, %c0_101, %c0_102] : memref<1x1x32xf32, #tpu.memory_space<vmem>>, vector<1x1x32xf32>
    %241 = vector.shape_cast %240 : vector<1x1x32xf32> to vector<1x32xf32>
    %cst_103 = arith.constant dense<0.000000e+00> : vector<8xf32>
    %242 = vector.multi_reduction <add>, %237, %cst_103 [1] : vector<8x32xf32> to vector<8xf32>
    %243 = vector.shape_cast %242 : vector<8xf32> to vector<8x1xf32>
    %cst_104 = arith.constant 3.200000e+01 : f32
    %244 = vector.broadcast %cst_104 : f32 to vector<8x1xf32>
    %245 = arith.divf %243, %244 : vector<8x1xf32>
    %246 = vector.broadcast %245 : vector<8x1xf32> to vector<8x32xf32>
    %247 = arith.subf %237, %246 : vector<8x32xf32>
    %248 = arith.mulf %247, %247 : vector<8x32xf32>
    %cst_105 = arith.constant dense<0.000000e+00> : vector<8xf32>
    %249 = vector.multi_reduction <add>, %248, %cst_105 [1] : vector<8x32xf32> to vector<8xf32>
    %250 = vector.shape_cast %249 : vector<8xf32> to vector<8x1xf32>
    %cst_106 = arith.constant 3.200000e+01 : f32
    %251 = vector.broadcast %cst_106 : f32 to vector<8x1xf32>
    %252 = arith.divf %250, %251 : vector<8x1xf32>
    %253 = vector.broadcast %245 : vector<8x1xf32> to vector<8x32xf32>
    %254 = arith.subf %237, %253 : vector<8x32xf32>
    %cst_107 = arith.constant 9.99999997E-7 : f32
    %255 = vector.broadcast %cst_107 : f32 to vector<8x1xf32>
    %256 = arith.addf %252, %255 : vector<8x1xf32>
    %257 = math.rsqrt %256 : vector<8x1xf32>
    %258 = vector.broadcast %257 : vector<8x1xf32> to vector<8x32xf32>
    %259 = arith.mulf %254, %258 : vector<8x32xf32>
    %260 = vector.broadcast %239 : vector<1x32xf32> to vector<8x32xf32>
    %261 = arith.mulf %259, %260 : vector<8x32xf32>
    %262 = vector.broadcast %241 : vector<1x32xf32> to vector<8x32xf32>
    %263 = arith.addf %261, %262 : vector<8x32xf32>
    %c0_108 = arith.constant 0 : index
    %c0_109 = arith.constant 0 : index
    %264 = vector.load %arg29[%c0_108, %c0_109] : memref<8x32xf32, #tpu.memory_space<vmem>>, vector<8x32xf32>
    tpu.vector_store %arg29[%c0_108, %c0_109], %263 {strides = array<i32>} : memref<8x32xf32, #tpu.memory_space<vmem>>, vector<8x32xf32>,
    %c1_i32 = arith.constant 1 : i32
    %265 = arith.cmpi eq, %arg1, %c1_i32 : i32
    %266 = arith.extui %265 : i1 to i32
    %c0_i32_110 = arith.constant 0 : i32
    %267 = arith.cmpi ne, %266, %c0_i32_110 : i32
    scf.if %267 {
      %c0_111 = arith.constant 0 : index
      %c0_112 = arith.constant 0 : index
      %c0_113 = arith.constant 0 : index
      %268 = vector.load %arg28[%c0_111, %c0_112, %c0_113] : memref<1x8x32xf32, #tpu.memory_space<vmem>>, vector<1x8x32xf32>
      %269 = vector.shape_cast %268 : vector<1x8x32xf32> to vector<8x32xf32>
      %270 = vector.shape_cast %263 : vector<8x32xf32> to vector<1x8x32xf32>
      tpu.vector_store %arg28[%c0_111, %c0_112, %c0_113], %270 {strides = array<i32>} : memref<1x8x32xf32, #tpu.memory_space<vmem>>, vector<1x8x32xf32>,
    } else {
    }
    return
  }
  func.func @transform_0(%arg0: i32, %arg1: i32) -> (i32, i32, i32) {
    %c0_i32 = arith.constant 0 : i32
    %c0_i32_0 = arith.constant 0 : i32
    %c0_i32_1 = arith.constant 0 : i32
    return %arg0, %c0_i32, %c0_i32_0 : i32, i32, i32
  }
  func.func @transform_1(%arg0: i32, %arg1: i32) -> (i32, i32, i32) {
    %c0_i32 = arith.constant 0 : i32
    %c0_i32_0 = arith.constant 0 : i32
    %c0_i32_1 = arith.constant 0 : i32
    return %arg0, %c0_i32, %c0_i32_0 : i32, i32, i32
  }
  func.func @transform_2(%arg0: i32, %arg1: i32) -> (i32, i32, i32) {
    %c0_i32 = arith.constant 0 : i32
    %c0_i32_0 = arith.constant 0 : i32
    %c0_i32_1 = arith.constant 0 : i32
    %c0_i32_2 = arith.constant 0 : i32
    return %c0_i32, %c0_i32_0, %c0_i32_1 : i32, i32, i32
  }
  func.func @transform_3(%arg0: i32, %arg1: i32) -> (i32, i32, i32) {
    %c0_i32 = arith.constant 0 : i32
    %c0_i32_0 = arith.constant 0 : i32
    %c0_i32_1 = arith.constant 0 : i32
    return %arg0, %c0_i32, %c0_i32_0 : i32, i32, i32
  }
  func.func @transform_4(%arg0: i32, %arg1: i32) -> (i32, i32, i32) {
    %c0_i32 = arith.constant 0 : i32
    %c0_i32_0 = arith.constant 0 : i32
    %c0_i32_1 = arith.constant 0 : i32
    return %arg1, %c0_i32, %c0_i32_0 : i32, i32, i32
  }
  func.func @transform_5(%arg0: i32, %arg1: i32) -> (i32, i32, i32) {
    %c0_i32 = arith.constant 0 : i32
    %c0_i32_0 = arith.constant 0 : i32
    %c0_i32_1 = arith.constant 0 : i32
    return %arg1, %c0_i32, %c0_i32_0 : i32, i32, i32
  }
  func.func @transform_6(%arg0: i32, %arg1: i32) -> (i32, i32, i32) {
    %c0_i32 = arith.constant 0 : i32
    %c0_i32_0 = arith.constant 0 : i32
    %c0_i32_1 = arith.constant 0 : i32
    return %arg1, %c0_i32, %c0_i32_0 : i32, i32, i32
  }
  func.func @transform_7(%arg0: i32, %arg1: i32) -> (i32, i32, i32) {
    %c0_i32 = arith.constant 0 : i32
    %c0_i32_0 = arith.constant 0 : i32
    %c0_i32_1 = arith.constant 0 : i32
    return %arg1, %c0_i32, %c0_i32_0 : i32, i32, i32
  }
  func.func @transform_8(%arg0: i32, %arg1: i32) -> (i32, i32, i32) {
    %c0_i32 = arith.constant 0 : i32
    %c0_i32_0 = arith.constant 0 : i32
    %c0_i32_1 = arith.constant 0 : i32
    return %arg1, %c0_i32, %c0_i32_0 : i32, i32, i32
  }
  func.func @transform_9(%arg0: i32, %arg1: i32) -> (i32, i32, i32) {
    %c0_i32 = arith.constant 0 : i32
    %c0_i32_0 = arith.constant 0 : i32
    %c0_i32_1 = arith.constant 0 : i32
    return %arg1, %c0_i32, %c0_i32_0 : i32, i32, i32
  }
  func.func @transform_10(%arg0: i32, %arg1: i32) -> (i32, i32, i32) {
    %c0_i32 = arith.constant 0 : i32
    %c0_i32_0 = arith.constant 0 : i32
    %c0_i32_1 = arith.constant 0 : i32
    return %arg1, %c0_i32, %c0_i32_0 : i32, i32, i32
  }
  func.func @transform_11(%arg0: i32, %arg1: i32) -> (i32, i32, i32) {
    %c0_i32 = arith.constant 0 : i32
    %c0_i32_0 = arith.constant 0 : i32
    %c0_i32_1 = arith.constant 0 : i32
    return %arg1, %c0_i32, %c0_i32_0 : i32, i32, i32
  }
  func.func @transform_12(%arg0: i32, %arg1: i32) -> (i32, i32, i32) {
    %c0_i32 = arith.constant 0 : i32
    %c0_i32_0 = arith.constant 0 : i32
    %c0_i32_1 = arith.constant 0 : i32
    return %arg1, %c0_i32, %c0_i32_0 : i32, i32, i32
  }
  func.func @transform_13(%arg0: i32, %arg1: i32) -> (i32, i32, i32) {
    %c0_i32 = arith.constant 0 : i32
    %c0_i32_0 = arith.constant 0 : i32
    %c0_i32_1 = arith.constant 0 : i32
    return %arg1, %c0_i32, %c0_i32_0 : i32, i32, i32
  }
  func.func @transform_14(%arg0: i32, %arg1: i32) -> (i32, i32, i32) {
    %c0_i32 = arith.constant 0 : i32
    %c0_i32_0 = arith.constant 0 : i32
    %c0_i32_1 = arith.constant 0 : i32
    return %arg1, %c0_i32, %c0_i32_0 : i32, i32, i32
  }
  func.func @transform_15(%arg0: i32, %arg1: i32) -> (i32, i32, i32) {
    %c0_i32 = arith.constant 0 : i32
    %c0_i32_0 = arith.constant 0 : i32
    %c0_i32_1 = arith.constant 0 : i32
    return %arg1, %c0_i32, %c0_i32_0 : i32, i32, i32
  }
  func.func @transform_16(%arg0: i32, %arg1: i32) -> (i32, i32, i32) {
    %c0_i32 = arith.constant 0 : i32
    %c0_i32_0 = arith.constant 0 : i32
    %c0_i32_1 = arith.constant 0 : i32
    return %arg1, %c0_i32, %c0_i32_0 : i32, i32, i32
  }
  func.func @transform_17(%arg0: i32, %arg1: i32) -> (i32, i32, i32) {
    %c0_i32 = arith.constant 0 : i32
    %c0_i32_0 = arith.constant 0 : i32
    %c0_i32_1 = arith.constant 0 : i32
    return %arg1, %c0_i32, %c0_i32_0 : i32, i32, i32
  }
  func.func @transform_18(%arg0: i32, %arg1: i32) -> (i32, i32, i32) {
    %c0_i32 = arith.constant 0 : i32
    %c0_i32_0 = arith.constant 0 : i32
    %c0_i32_1 = arith.constant 0 : i32
    return %arg1, %c0_i32, %c0_i32_0 : i32, i32, i32
  }
  func.func @transform_19(%arg0: i32, %arg1: i32) -> (i32, i32, i32) {
    %c0_i32 = arith.constant 0 : i32
    %c0_i32_0 = arith.constant 0 : i32
    %c0_i32_1 = arith.constant 0 : i32
    return %arg1, %c0_i32, %c0_i32_0 : i32, i32, i32
  }
  func.func @transform_20(%arg0: i32, %arg1: i32) -> (i32, i32, i32) {
    %c0_i32 = arith.constant 0 : i32
    %c0_i32_0 = arith.constant 0 : i32
    %c0_i32_1 = arith.constant 0 : i32
    return %arg1, %c0_i32, %c0_i32_0 : i32, i32, i32
  }
  func.func @transform_21(%arg0: i32, %arg1: i32) -> (i32, i32, i32) {
    %c0_i32 = arith.constant 0 : i32
    %c0_i32_0 = arith.constant 0 : i32
    %c0_i32_1 = arith.constant 0 : i32
    return %arg1, %c0_i32, %c0_i32_0 : i32, i32, i32
  }
  func.func @transform_22(%arg0: i32, %arg1: i32) -> (i32, i32, i32) {
    %c0_i32 = arith.constant 0 : i32
    %c0_i32_0 = arith.constant 0 : i32
    %c0_i32_1 = arith.constant 0 : i32
    return %arg1, %c0_i32, %c0_i32_0 : i32, i32, i32
  }
  func.func @transform_23(%arg0: i32, %arg1: i32) -> (i32, i32, i32) {
    %c0_i32 = arith.constant 0 : i32
    %c0_i32_0 = arith.constant 0 : i32
    %c0_i32_1 = arith.constant 0 : i32
    return %arg1, %c0_i32, %c0_i32_0 : i32, i32, i32
  }
  func.func @transform_24(%arg0: i32, %arg1: i32) -> (i32, i32, i32) {
    %c0_i32 = arith.constant 0 : i32
    %c0_i32_0 = arith.constant 0 : i32
    %c0_i32_1 = arith.constant 0 : i32
    return %arg1, %c0_i32, %c0_i32_0 : i32, i32, i32
  }
  func.func @transform_25(%arg0: i32, %arg1: i32) -> (i32, i32, i32) {
    %c0_i32 = arith.constant 0 : i32
    %c0_i32_0 = arith.constant 0 : i32
    %c0_i32_1 = arith.constant 0 : i32
    return %arg1, %c0_i32, %c0_i32_0 : i32, i32, i32
  }
  func.func @transform_26(%arg0: i32, %arg1: i32) -> (i32, i32, i32) {
    %c0_i32 = arith.constant 0 : i32
    %c0_i32_0 = arith.constant 0 : i32
    %c0_i32_1 = arith.constant 0 : i32
    return %arg0, %c0_i32, %c0_i32_0 : i32, i32, i32
  }
}

</mosaic_0001>

<llo_original>
// kernel: decoder_forward.1
$region0: #{decoder_forward.1}
  #allocation0 [shape = 'u32[]', space=smem, size = 0x4, offset = 0x4, fixed_abs, tag = 'smem constant byte address 0x4 - core index']
  #allocation1 [shape = 'u32[144,128]{1,0:T(1,128)}', space=vmem, size = 0x12000, scoped, tag = 'internal scratch']
  #allocation2 [shape = 'f32[8,32]{1,0:T(8,128)}', space=vmem, size = 0x1000, scoped, tag = 'scratch operand']
  %s0 = inlined_call_operand.vmem [shape: f32[2,8,32], index: 0, kind: input, shape index: {}]
  %s1 = inlined_call_operand.vmem [shape: f32[2,8,32], index: 1, kind: input, shape index: {}]
  %s2 = inlined_call_operand.vmem [shape: f32[1,8,8], index: 2, kind: input, shape index: {}]
  %s3 = inlined_call_operand.vmem [shape: f32[2,1,8], index: 3, kind: input, shape index: {}]
  %s4 = inlined_call_operand.vmem [shape: bf16[2,32,32], index: 4, kind: input, shape index: {}]
  %s5 = inlined_call_operand.vmem [shape: f32[2,1,32], index: 5, kind: input, shape index: {}]
  %s6 = inlined_call_operand.vmem [shape: bf16[2,32,64], index: 6, kind: input, shape index: {}]
  %s7 = inlined_call_operand.vmem [shape: f32[2,1,64], index: 7, kind: input, shape index: {}]
  %s8 = inlined_call_operand.vmem [shape: bf16[2,32,32], index: 8, kind: input, shape index: {}]
  %s9 = inlined_call_operand.vmem [shape: f32[2,1,32], index: 9, kind: input, shape index: {}]
  %s10 = inlined_call_operand.vmem [shape: f32[2,1,32], index: 10, kind: input, shape index: {}]
  %s11 = inlined_call_operand.vmem [shape: f32[2,1,32], index: 11, kind: input, shape index: {}]
  %s12 = inlined_call_operand.vmem [shape: bf16[2,32,32], index: 12, kind: input, shape index: {}]
  %s13 = inlined_call_operand.vmem [shape: f32[2,1,32], index: 13, kind: input, shape index: {}]
  %s14 = inlined_call_operand.vmem [shape: bf16[2,32,64], index: 14, kind: input, shape index: {}]
  %s15 = inlined_call_operand.vmem [shape: f32[2,1,64], index: 15, kind: input, shape index: {}]
  %s16 = inlined_call_operand.vmem [shape: bf16[2,32,32], index: 16, kind: input, shape index: {}]
  %s17 = inlined_call_operand.vmem [shape: f32[2,1,32], index: 17, kind: input, shape index: {}]
  %s18 = inlined_call_operand.vmem [shape: f32[2,1,32], index: 18, kind: input, shape index: {}]
  %s19 = inlined_call_operand.vmem [shape: f32[2,1,32], index: 19, kind: input, shape index: {}]
  %s20 = inlined_call_operand.vmem [shape: bf16[2,32,64], index: 20, kind: input, shape index: {}]
  %s21 = inlined_call_operand.vmem [shape: f32[2,1,64], index: 21, kind: input, shape index: {}]
  %s22 = inlined_call_operand.vmem [shape: bf16[2,64,32], index: 22, kind: input, shape index: {}]
  %s23 = inlined_call_operand.vmem [shape: f32[2,1,32], index: 23, kind: input, shape index: {}]
  %s24 = inlined_call_operand.vmem [shape: f32[2,1,32], index: 24, kind: input, shape index: {}]
  %s25 = inlined_call_operand.vmem [shape: f32[2,1,32], index: 25, kind: input, shape index: {}]
  %s26 = inlined_call_operand.hbm [shape: f32[2,8,32], index: 26, kind: output, shape index: {}]
  %s27 = sld [smem:[#allocation0]]
  $region145: #{decoder_forward.1} parent=0
    _
  %s29 = ssub.s32 1, %s27
  %s30 = scalar_select 0, %s29, %s27
  $region1: #{decoder_forward.1} parent=0
    #allocation3 [shape = 'u8[8192]{0}', space=vmem, size = 0x2000, scoped, tag = 'output window, operand 0']
    #allocation4 [shape = 's32[2]{0}', space=sflag, size = 0x8, scoped, tag = 'scoped memory for decoder_forward.1']
    %31 = vsyncpa [#allocation4], 0
    %s32 = scalar_lea.sflag [#allocation4], 1
    %33 = vsyncpa %s32, 0
    loop: start=0, step=1, limit=6
    $region2: #{decoder_forward.1} parent=1 // loop_pre_header
      _
    $region3: #{decoder_forward.1} parent=1 // loop_header
      %s35 = sphi 0, %s39
      %p36 = scmp.ge.s32.totalorder %s35, 6
      %s42 = sphi 0, %s54
      %s43 = sphi 0, %s50
      %s44 = sphi 0, %s42
      %s45 = sphi 0, %s43
      %s46 = sphi 0, %s44
      %s47 = sphi 0, %s45
      %s57 = sphi 0, %s59
      %s60 = sphi 0, %s57
      %s61 = sphi 0, %s60
      %s77 = sphi 0, %s61
      %s83 = sphi 0, %s85
      %s86 = sphi 0, %s83
      %s87 = sphi 0, %s86
      %s103 = sphi 0, %s87
      %s107 = sphi 0, %s107
      %s109 = sphi 0, %s107
      %s110 = sphi 0, %s109
      %s124 = sphi 0, %s110
      %s130 = sphi 0, %s132
      %s133 = sphi 0, %s130
      %s134 = sphi 0, %s133
      %s150 = sphi 0, %s134
      %s156 = sphi 0, %s158
      %s159 = sphi 0, %s156
      %s160 = sphi 0, %s159
      %s176 = sphi 0, %s160
      %s182 = sphi 0, %s184
      %s185 = sphi 0, %s182
      %s186 = sphi 0, %s185
      %s202 = sphi 0, %s186
      %s208 = sphi 0, %s210
      %s211 = sphi 0, %s208
      %s212 = sphi 0, %s211
      %s228 = sphi 0, %s212
      %s234 = sphi 0, %s236
      %s237 = sphi 0, %s234
      %s238 = sphi 0, %s237
      %s254 = sphi 0, %s238
      %s260 = sphi 0, %s262
      %s263 = sphi 0, %s260
      %s264 = sphi 0, %s263
      %s280 = sphi 0, %s264
      %s286 = sphi 0, %s288
      %s289 = sphi 0, %s286
      %s290 = sphi 0, %s289
      %s306 = sphi 0, %s290
      %s312 = sphi 0, %s314
      %s315 = sphi 0, %s312
      %s316 = sphi 0, %s315
      %s332 = sphi 0, %s316
      %s338 = sphi 0, %s340
      %s341 = sphi 0, %s338
      %s342 = sphi 0, %s341
      %s358 = sphi 0, %s342
      %s364 = sphi 0, %s366
      %s367 = sphi 0, %s364
      %s368 = sphi 0, %s367
      %s384 = sphi 0, %s368
      %s390 = sphi 0, %s392
      %s393 = sphi 0, %s390
      %s394 = sphi 0, %s393
      %s410 = sphi 0, %s394
      %s416 = sphi 0, %s418
      %s419 = sphi 0, %s416
      %s420 = sphi 0, %s419
      %s436 = sphi 0, %s420
      %s442 = sphi 0, %s444
      %s445 = sphi 0, %s442
      %s446 = sphi 0, %s445
      %s462 = sphi 0, %s446
      %s468 = sphi 0, %s470
      %s471 = sphi 0, %s468
      %s472 = sphi 0, %s471
      %s488 = sphi 0, %s472
      %s494 = sphi 0, %s496
      %s497 = sphi 0, %s494
      %s498 = sphi 0, %s497
      %s514 = sphi 0, %s498
      %s520 = sphi 0, %s522
      %s523 = sphi 0, %s520
      %s524 = sphi 0, %s523
      %s540 = sphi 0, %s524
      %s546 = sphi 0, %s548
      %s549 = sphi 0, %s546
      %s550 = sphi 0, %s549
      %s566 = sphi 0, %s550
      %s572 = sphi 0, %s574
      %s575 = sphi 0, %s572
      %s576 = sphi 0, %s575
      %s592 = sphi 0, %s576
      %s598 = sphi 0, %s600
      %s601 = sphi 0, %s598
      %s602 = sphi 0, %s601
      %s618 = sphi 0, %s602
      %s624 = sphi 0, %s626
      %s627 = sphi 0, %s624
      %s628 = sphi 0, %s627
      %s644 = sphi 0, %s628
      %s650 = sphi 0, %s652
      %s653 = sphi 0, %s650
      %s654 = sphi 0, %s653
      %s670 = sphi 0, %s654
      %s676 = sphi 0, %s678
      %s679 = sphi 0, %s676
      %s680 = sphi 0, %s679
      %s696 = sphi 0, %s680
      %s702 = sphi 0, %s704
      %s705 = sphi 0, %s702
      %s706 = sphi 0, %s705
      %s722 = sphi 0, %s706
      %s728 = sphi 0, %s730
      %s731 = sphi 0, %s728
      %s732 = sphi 0, %s731
      %s748 = sphi 0, %s732
    $region4: #{decoder_forward.1} parent=1 // loop_header_branch
      %38 = sbr.rel (%p36) target = $region8
    $region5: #{decoder_forward.1} parent=1 // loop_body
      %s40 = ssub.s32 %s35, 1
      %s41 = ssub.s32 %s35, 2
      %s48 = sadd.s32 1, %s43
      %p49 = scmp.ge.s32.totalorder %s48, 2
      %s50 = scalar_select %p49, 0, %s48
      %s51 = sadd.s32 1, %s42
      %s52 = scalar_select %p49, %s51, %s42
      %p53 = scmp.ge.s32.totalorder %s52, 2
      %s54 = scalar_select %p53, 0, %s52
      %s55 = ssub.s32 %s42, %s54
      %p56 = scmp.eq.s32.totalorder %s55, 0
      %s58 = sadd.s32 %s57, 1
      %s59 = scalar_select %p56, %s57, %s58
      %p62 = pneg %p56
      %p63 = scmp.eq.s32.totalorder %s35, 3
      %p64 = por %p62, %p63
      %p65 = scmp.ne.s32.totalorder %s57, %s60
      %p66 = scmp.eq.s32.totalorder %s35, 0
      %p67 = por %p65, %p66
      %p68 = scmp.ne.s32.totalorder %s57, %s60
      %p69 = scmp.eq.s32.totalorder %s40, 3
      %p70 = por %p68, %p69
      %p71 = scmp.ne.s32.totalorder %s60, %s61
      %p72 = scmp.eq.s32.totalorder %s40, 0
      %p73 = por %p71, %p72
      %p74 = scmp.ne.s32.totalorder %s60, %s61
      %p75 = scmp.eq.s32.totalorder %s41, 3
      %p76 = por %p74, %p75
      %p78 = scmp.ne.s32.totalorder %s61, %s77
      %p79 = scmp.eq.s32.totalorder %s41, 0
      %p80 = por %p78, %p79
      %s81 = ssub.s32 %s42, %s54
      %p82 = scmp.eq.s32.totalorder %s81, 0
      %s84 = sadd.s32 %s83, 1
      %s85 = scalar_select %p82, %s83, %s84
      %p88 = pneg %p82
      %p89 = scmp.eq.s32.totalorder %s35, 3
      %p90 = por %p88, %p89
      %p91 = scmp.ne.s32.totalorder %s83, %s86
      %p92 = scmp.eq.s32.totalorder %s35, 0
      %p93 = por %p91, %p92
      %p94 = scmp.ne.s32.totalorder %s83, %s86
      %p95 = scmp.eq.s32.totalorder %s40, 3
      %p96 = por %p94, %p95
      %p97 = scmp.ne.s32.totalorder %s86, %s87
      %p98 = scmp.eq.s32.totalorder %s40, 0
      %p99 = por %p97, %p98
      %p100 = scmp.ne.s32.totalorder %s86, %s87
      %p101 = scmp.eq.s32.totalorder %s41, 3
      %p102 = por %p100, %p101
      %p104 = scmp.ne.s32.totalorder %s87, %s103
      %p105 = scmp.eq.s32.totalorder %s41, 0
      %p106 = por %p104, %p105
      %s108 = sadd.s32 %s107, 1
      %p111 = scmp.eq.s32.totalorder %s35, 3
      %p112 = scmp.ne.s32.totalorder %s107, %s109
      %p113 = scmp.eq.s32.totalorder %s35, 0
      %p114 = por %p112, %p113
      %p115 = scmp.ne.s32.totalorder %s107, %s109
      %p116 = scmp.eq.s32.totalorder %s40, 3
      %p117 = por %p115, %p116
      %p118 = scmp.ne.s32.totalorder %s109, %s110
      %p119 = scmp.eq.s32.totalorder %s40, 0
      %p120 = por %p118, %p119
      %p121 = scmp.ne.s32.totalorder %s109, %s110
      %p122 = scmp.eq.s32.totalorder %s41, 3
      %p123 = por %p121, %p122
      %p125 = scmp.ne.s32.totalorder %s110, %s124
      %p126 = scmp.eq.s32.totalorder %s41, 0
      %p127 = por %p125, %p126
      %s128 = ssub.s32 %s42, %s54
      %p129 = scmp.eq.s32.totalorder %s128, 0
      %s131 = sadd.s32 %s130, 1
      %s132 = scalar_select %p129, %s130, %s131
      %p135 = pneg %p129
      %p136 = scmp.eq.s32.totalorder %s35, 3
      %p137 = por %p135, %p136
      %p138 = scmp.ne.s32.totalorder %s130, %s133
      %p139 = scmp.eq.s32.totalorder %s35, 0
      %p140 = por %p138, %p139
      %p141 = scmp.ne.s32.totalorder %s130, %s133
      %p142 = scmp.eq.s32.totalorder %s40, 3
      %p143 = por %p141, %p142
      %p144 = scmp.ne.s32.totalorder %s133, %s134
      %p145 = scmp.eq.s32.totalorder %s40, 0
      %p146 = por %p144, %p145
      %p147 = scmp.ne.s32.totalorder %s133, %s134
      %p148 = scmp.eq.s32.totalorder %s41, 3
      %p149 = por %p147, %p148
      %p151 = scmp.ne.s32.totalorder %s134, %s150
      %p152 = scmp.eq.s32.totalorder %s41, 0
      %p153 = por %p151, %p152
      %s154 = ssub.s32 %s43, %s50
      %p155 = scmp.eq.s32.totalorder %s154, 0
      %s157 = sadd.s32 %s156, 1
      %s158 = scalar_select %p155, %s156, %s157
      %p161 = pneg %p155
      %p162 = scmp.eq.s32.totalorder %s35, 3
      %p163 = por %p161, %p162
      %p164 = scmp.ne.s32.totalorder %s156, %s159
      %p165 = scmp.eq.s32.totalorder %s35, 0
      %p166 = por %p164, %p165
      %p167 = scmp.ne.s32.totalorder %s156, %s159
      %p168 = scmp.eq.s32.totalorder %s40, 3
      %p169 = por %p167, %p168
      %p170 = scmp.ne.s32.totalorder %s159, %s160
      %p171 = scmp.eq.s32.totalorder %s40, 0
      %p172 = por %p170, %p171
      %p173 = scmp.ne.s32.totalorder %s159, %s160
      %p174 = scmp.eq.s32.totalorder %s41, 3
      %p175 = por %p173, %p174
      %p177 = scmp.ne.s32.totalorder %s160, %s176
      %p178 = scmp.eq.s32.totalorder %s41, 0
      %p179 = por %p177, %p178
      %s180 = ssub.s32 %s43, %s50
      %p181 = scmp.eq.s32.totalorder %s180, 0
      %s183 = sadd.s32 %s182, 1
      %s184 = scalar_select %p181, %s182, %s183
      %p187 = pneg %p181
      %p188 = scmp.eq.s32.totalorder %s35, 3
      %p189 = por %p187, %p188
      %p190 = scmp.ne.s32.totalorder %s182, %s185
      %p191 = scmp.eq.s32.totalorder %s35, 0
      %p192 = por %p190, %p191
      %p193 = scmp.ne.s32.totalorder %s182, %s185
      %p194 = scmp.eq.s32.totalorder %s40, 3
      %p195 = por %p193, %p194
      %p196 = scmp.ne.s32.totalorder %s185, %s186
      %p197 = scmp.eq.s32.totalorder %s40, 0
      %p198 = por %p196, %p197
      %p199 = scmp.ne.s32.totalorder %s185, %s186
      %p200 = scmp.eq.s32.totalorder %s41, 3
      %p201 = por %p199, %p200
      %p203 = scmp.ne.s32.totalorder %s186, %s202
      %p204 = scmp.eq.s32.totalorder %s41, 0
      %p205 = por %p203, %p204
      %s206 = ssub.s32 %s43, %s50
      %p207 = scmp.eq.s32.totalorder %s206, 0
      %s209 = sadd.s32 %s208, 1
      %s210 = scalar_select %p207, %s208, %s209
      %p213 = pneg %p207
      %p214 = scmp.eq.s32.totalorder %s35, 3
      %p215 = por %p213, %p214
      %p216 = scmp.ne.s32.totalorder %s208, %s211
      %p217 = scmp.eq.s32.totalorder %s35, 0
      %p218 = por %p216, %p217
      %p219 = scmp.ne.s32.totalorder %s208, %s211
      %p220 = scmp.eq.s32.totalorder %s40, 3
      %p221 = por %p219, %p220
      %p222 = scmp.ne.s32.totalorder %s211, %s212
      %p223 = scmp.eq.s32.totalorder %s40, 0
      %p224 = por %p222, %p223
      %p225 = scmp.ne.s32.totalorder %s211, %s212
      %p226 = scmp.eq.s32.totalorder %s41, 3
      %p227 = por %p225, %p226
      %p229 = scmp.ne.s32.totalorder %s212, %s228
      %p230 = scmp.eq.s32.totalorder %s41, 0
      %p231 = por %p229, %p230
      %s232 = ssub.s32 %s43, %s50
      %p233 = scmp.eq.s32.totalorder %s232, 0
      %s235 = sadd.s32 %s234, 1
      %s236 = scalar_select %p233, %s234, %s235
      %p239 = pneg %p233
      %p240 = scmp.eq.s32.totalorder %s35, 3
      %p241 = por %p239, %p240
      %p242 = scmp.ne.s32.totalorder %s234, %s237
      %p243 = scmp.eq.s32.totalorder %s35, 0
      %p244 = por %p242, %p243
      %p245 = scmp.ne.s32.totalorder %s234, %s237
      %p246 = scmp.eq.s32.totalorder %s40, 3
      %p247 = por %p245, %p246
      %p248 = scmp.ne.s32.totalorder %s237, %s238
      %p249 = scmp.eq.s32.totalorder %s40, 0
      %p250 = por %p248, %p249
      %p251 = scmp.ne.s32.totalorder %s237, %s238
      %p252 = scmp.eq.s32.totalorder %s41, 3
      %p253 = por %p251, %p252
      %p255 = scmp.ne.s32.totalorder %s238, %s254
      %p256 = scmp.eq.s32.totalorder %s41, 0
      %p257 = por %p255, %p256
      %s258 = ssub.s32 %s43, %s50
      %p259 = scmp.eq.s32.totalorder %s258, 0
      %s261 = sadd.s32 %s260, 1
      %s262 = scalar_select %p259, %s260, %s261
      %p265 = pneg %p259
      %p266 = scmp.eq.s32.totalorder %s35, 3
      %p267 = por %p265, %p266
      %p268 = scmp.ne.s32.totalorder %s260, %s263
      %p269 = scmp.eq.s32.totalorder %s35, 0
      %p270 = por %p268, %p269
      %p271 = scmp.ne.s32.totalorder %s260, %s263
      %p272 = scmp.eq.s32.totalorder %s40, 3
      %p273 = por %p271, %p272
      %p274 = scmp.ne.s32.totalorder %s263, %s264
      %p275 = scmp.eq.s32.totalorder %s40, 0
      %p276 = por %p274, %p275
      %p277 = scmp.ne.s32.totalorder %s263, %s264
      %p278 = scmp.eq.s32.totalorder %s41, 3
      %p279 = por %p277, %p278
      %p281 = scmp.ne.s32.totalorder %s264, %s280
      %p282 = scmp.eq.s32.totalorder %s41, 0
      %p283 = por %p281, %p282
      %s284 = ssub.s32 %s43, %s50
      %p285 = scmp.eq.s32.totalorder %s284, 0
      %s287 = sadd.s32 %s286, 1
      %s288 = scalar_select %p285, %s286, %s287
      %p291 = pneg %p285
      %p292 = scmp.eq.s32.totalorder %s35, 3
      %p293 = por %p291, %p292
      %p294 = scmp.ne.s32.totalorder %s286, %s289
      %p295 = scmp.eq.s32.totalorder %s35, 0
      %p296 = por %p294, %p295
      %p297 = scmp.ne.s32.totalorder %s286, %s289
      %p298 = scmp.eq.s32.totalorder %s40, 3
      %p299 = por %p297, %p298
      %p300 = scmp.ne.s32.totalorder %s289, %s290
      %p301 = scmp.eq.s32.totalorder %s40, 0
      %p302 = por %p300, %p301
      %p303 = scmp.ne.s32.totalorder %s289, %s290
      %p304 = scmp.eq.s32.totalorder %s41, 3
      %p305 = por %p303, %p304
      %p307 = scmp.ne.s32.totalorder %s290, %s306
      %p308 = scmp.eq.s32.totalorder %s41, 0
      %p309 = por %p307, %p308
      %s310 = ssub.s32 %s43, %s50
      %p311 = scmp.eq.s32.totalorder %s310, 0
      %s313 = sadd.s32 %s312, 1
      %s314 = scalar_select %p311, %s312, %s313
      %p317 = pneg %p311
      %p318 = scmp.eq.s32.totalorder %s35, 3
      %p319 = por %p317, %p318
      %p320 = scmp.ne.s32.totalorder %s312, %s315
      %p321 = scmp.eq.s32.totalorder %s35, 0
      %p322 = por %p320, %p321
      %p323 = scmp.ne.s32.totalorder %s312, %s315
      %p324 = scmp.eq.s32.totalorder %s40, 3
      %p325 = por %p323, %p324
      %p326 = scmp.ne.s32.totalorder %s315, %s316
      %p327 = scmp.eq.s32.totalorder %s40, 0
      %p328 = por %p326, %p327
      %p329 = scmp.ne.s32.totalorder %s315, %s316
      %p330 = scmp.eq.s32.totalorder %s41, 3
      %p331 = por %p329, %p330
      %p333 = scmp.ne.s32.totalorder %s316, %s332
      %p334 = scmp.eq.s32.totalorder %s41, 0
      %p335 = por %p333, %p334
      %s336 = ssub.s32 %s43, %s50
      %p337 = scmp.eq.s32.totalorder %s336, 0
      %s339 = sadd.s32 %s338, 1
      %s340 = scalar_select %p337, %s338, %s339
      %p343 = pneg %p337
      %p344 = scmp.eq.s32.totalorder %s35, 3
      %p345 = por %p343, %p344
      %p346 = scmp.ne.s32.totalorder %s338, %s341
      %p347 = scmp.eq.s32.totalorder %s35, 0
      %p348 = por %p346, %p347
      %p349 = scmp.ne.s32.totalorder %s338, %s341
      %p350 = scmp.eq.s32.totalorder %s40, 3
      %p351 = por %p349, %p350
      %p352 = scmp.ne.s32.totalorder %s341, %s342
      %p353 = scmp.eq.s32.totalorder %s40, 0
      %p354 = por %p352, %p353
      %p355 = scmp.ne.s32.totalorder %s341, %s342
      %p356 = scmp.eq.s32.totalorder %s41, 3
      %p357 = por %p355, %p356
      %p359 = scmp.ne.s32.totalorder %s342, %s358
      %p360 = scmp.eq.s32.totalorder %s41, 0
      %p361 = por %p359, %p360
      %s362 = ssub.s32 %s43, %s50
      %p363 = scmp.eq.s32.totalorder %s362, 0
      %s365 = sadd.s32 %s364, 1
      %s366 = scalar_select %p363, %s364, %s365
      %p369 = pneg %p363
      %p370 = scmp.eq.s32.totalorder %s35, 3
      %p371 = por %p369, %p370
      %p372 = scmp.ne.s32.totalorder %s364, %s367
      %p373 = scmp.eq.s32.totalorder %s35, 0
      %p374 = por %p372, %p373
      %p375 = scmp.ne.s32.totalorder %s364, %s367
      %p376 = scmp.eq.s32.totalorder %s40, 3
      %p377 = por %p375, %p376
      %p378 = scmp.ne.s32.totalorder %s367, %s368
      %p379 = scmp.eq.s32.totalorder %s40, 0
      %p380 = por %p378, %p379
      %p381 = scmp.ne.s32.totalorder %s367, %s368
      %p382 = scmp.eq.s32.totalorder %s41, 3
      %p383 = por %p381, %p382
      %p385 = scmp.ne.s32.totalorder %s368, %s384
      %p386 = scmp.eq.s32.totalorder %s41, 0
      %p387 = por %p385, %p386
      %s388 = ssub.s32 %s43, %s50
      %p389 = scmp.eq.s32.totalorder %s388, 0
      %s391 = sadd.s32 %s390, 1
      %s392 = scalar_select %p389, %s390, %s391
      %p395 = pneg %p389
      %p396 = scmp.eq.s32.totalorder %s35, 3
      %p397 = por %p395, %p396
      %p398 = scmp.ne.s32.totalorder %s390, %s393
      %p399 = scmp.eq.s32.totalorder %s35, 0
      %p400 = por %p398, %p399
      %p401 = scmp.ne.s32.totalorder %s390, %s393
      %p402 = scmp.eq.s32.totalorder %s40, 3
      %p403 = por %p401, %p402
      %p404 = scmp.ne.s32.totalorder %s393, %s394
      %p405 = scmp.eq.s32.totalorder %s40, 0
      %p406 = por %p404, %p405
      %p407 = scmp.ne.s32.totalorder %s393, %s394
      %p408 = scmp.eq.s32.totalorder %s41, 3
      %p409 = por %p407, %p408
      %p411 = scmp.ne.s32.totalorder %s394, %s410
      %p412 = scmp.eq.s32.totalorder %s41, 0
      %p413 = por %p411, %p412
      %s414 = ssub.s32 %s43, %s50
      %p415 = scmp.eq.s32.totalorder %s414, 0
      %s417 = sadd.s32 %s416, 1
      %s418 = scalar_select %p415, %s416, %s417
      %p421 = pneg %p415
      %p422 = scmp.eq.s32.totalorder %s35, 3
      %p423 = por %p421, %p422
      %p424 = scmp.ne.s32.totalorder %s416, %s419
      %p425 = scmp.eq.s32.totalorder %s35, 0
      %p426 = por %p424, %p425
      %p427 = scmp.ne.s32.totalorder %s416, %s419
      %p428 = scmp.eq.s32.totalorder %s40, 3
      %p429 = por %p427, %p428
      %p430 = scmp.ne.s32.totalorder %s419, %s420
      %p431 = scmp.eq.s32.totalorder %s40, 0
      %p432 = por %p430, %p431
      %p433 = scmp.ne.s32.totalorder %s419, %s420
      %p434 = scmp.eq.s32.totalorder %s41, 3
      %p435 = por %p433, %p434
      %p437 = scmp.ne.s32.totalorder %s420, %s436
      %p438 = scmp.eq.s32.totalorder %s41, 0
      %p439 = por %p437, %p438
      %s440 = ssub.s32 %s43, %s50
      %p441 = scmp.eq.s32.totalorder %s440, 0
      %s443 = sadd.s32 %s442, 1
      %s444 = scalar_select %p441, %s442, %s443
      %p447 = pneg %p441
      %p448 = scmp.eq.s32.totalorder %s35, 3
      %p449 = por %p447, %p448
      %p450 = scmp.ne.s32.totalorder %s442, %s445
      %p451 = scmp.eq.s32.totalorder %s35, 0
      %p452 = por %p450, %p451
      %p453 = scmp.ne.s32.totalorder %s442, %s445
      %p454 = scmp.eq.s32.totalorder %s40, 3
      %p455 = por %p453, %p454
      %p456 = scmp.ne.s32.totalorder %s445, %s446
      %p457 = scmp.eq.s32.totalorder %s40, 0
      %p458 = por %p456, %p457
      %p459 = scmp.ne.s32.totalorder %s445, %s446
      %p460 = scmp.eq.s32.totalorder %s41, 3
      %p461 = por %p459, %p460
      %p463 = scmp.ne.s32.totalorder %s446, %s462
      %p464 = scmp.eq.s32.totalorder %s41, 0
      %p465 = por %p463, %p464
      %s466 = ssub.s32 %s43, %s50
      %p467 = scmp.eq.s32.totalorder %s466, 0
      %s469 = sadd.s32 %s468, 1
      %s470 = scalar_select %p467, %s468, %s469
      %p473 = pneg %p467
      %p474 = scmp.eq.s32.totalorder %s35, 3
      %p475 = por %p473, %p474
      %p476 = scmp.ne.s32.totalorder %s468, %s471
      %p477 = scmp.eq.s32.totalorder %s35, 0
      %p478 = por %p476, %p477
      %p479 = scmp.ne.s32.totalorder %s468, %s471
      %p480 = scmp.eq.s32.totalorder %s40, 3
      %p481 = por %p479, %p480
      %p482 = scmp.ne.s32.totalorder %s471, %s472
      %p483 = scmp.eq.s32.totalorder %s40, 0
      %p484 = por %p482, %p483
      %p485 = scmp.ne.s32.totalorder %s471, %s472
      %p486 = scmp.eq.s32.totalorder %s41, 3
      %p487 = por %p485, %p486
      %p489 = scmp.ne.s32.totalorder %s472, %s488
      %p490 = scmp.eq.s32.totalorder %s41, 0
      %p491 = por %p489, %p490
      %s492 = ssub.s32 %s43, %s50
      %p493 = scmp.eq.s32.totalorder %s492, 0
      %s495 = sadd.s32 %s494, 1
      %s496 = scalar_select %p493, %s494, %s495
      %p499 = pneg %p493
      %p500 = scmp.eq.s32.totalorder %s35, 3
      %p501 = por %p499, %p500
      %p502 = scmp.ne.s32.totalorder %s494, %s497
      %p503 = scmp.eq.s32.totalorder %s35, 0
      %p504 = por %p502, %p503
      %p505 = scmp.ne.s32.totalorder %s494, %s497
      %p506 = scmp.eq.s32.totalorder %s40, 3
      %p507 = por %p505, %p506
      %p508 = scmp.ne.s32.totalorder %s497, %s498
      %p509 = scmp.eq.s32.totalorder %s40, 0
      %p510 = por %p508, %p509
      %p511 = scmp.ne.s32.totalorder %s497, %s498
      %p512 = scmp.eq.s32.totalorder %s41, 3
      %p513 = por %p511, %p512
      %p515 = scmp.ne.s32.totalorder %s498, %s514
      %p516 = scmp.eq.s32.totalorder %s41, 0
      %p517 = por %p515, %p516
      %s518 = ssub.s32 %s43, %s50
      %p519 = scmp.eq.s32.totalorder %s518, 0
      %s521 = sadd.s32 %s520, 1
      %s522 = scalar_select %p519, %s520, %s521
      %p525 = pneg %p519
      %p526 = scmp.eq.s32.totalorder %s35, 3
      %p527 = por %p525, %p526
      %p528 = scmp.ne.s32.totalorder %s520, %s523
      %p529 = scmp.eq.s32.totalorder %s35, 0
      %p530 = por %p528, %p529
      %p531 = scmp.ne.s32.totalorder %s520, %s523
      %p532 = scmp.eq.s32.totalorder %s40, 3
      %p533 = por %p531, %p532
      %p534 = scmp.ne.s32.totalorder %s523, %s524
      %p535 = scmp.eq.s32.totalorder %s40, 0
      %p536 = por %p534, %p535
      %p537 = scmp.ne.s32.totalorder %s523, %s524
      %p538 = scmp.eq.s32.totalorder %s41, 3
      %p539 = por %p537, %p538
      %p541 = scmp.ne.s32.totalorder %s524, %s540
      %p542 = scmp.eq.s32.totalorder %s41, 0
      %p543 = por %p541, %p542
      %s544 = ssub.s32 %s43, %s50
      %p545 = scmp.eq.s32.totalorder %s544, 0
      %s547 = sadd.s32 %s546, 1
      %s548 = scalar_select %p545, %s546, %s547
      %p551 = pneg %p545
      %p552 = scmp.eq.s32.totalorder %s35, 3
      %p553 = por %p551, %p552
      %p554 = scmp.ne.s32.totalorder %s546, %s549
      %p555 = scmp.eq.s32.totalorder %s35, 0
      %p556 = por %p554, %p555
      %p557 = scmp.ne.s32.totalorder %s546, %s549
      %p558 = scmp.eq.s32.totalorder %s40, 3
      %p559 = por %p557, %p558
      %p560 = scmp.ne.s32.totalorder %s549, %s550
      %p561 = scmp.eq.s32.totalorder %s40, 0
      %p562 = por %p560, %p561
      %p563 = scmp.ne.s32.totalorder %s549, %s550
      %p564 = scmp.eq.s32.totalorder %s41, 3
      %p565 = por %p563, %p564
      %p567 = scmp.ne.s32.totalorder %s550, %s566
      %p568 = scmp.eq.s32.totalorder %s41, 0
      %p569 = por %p567, %p568
      %s570 = ssub.s32 %s43, %s50
      %p571 = scmp.eq.s32.totalorder %s570, 0
      %s573 = sadd.s32 %s572, 1
      %s574 = scalar_select %p571, %s572, %s573
      %p577 = pneg %p571
      %p578 = scmp.eq.s32.totalorder %s35, 3
      %p579 = por %p577, %p578
      %p580 = scmp.ne.s32.totalorder %s572, %s575
      %p581 = scmp.eq.s32.totalorder %s35, 0
      %p582 = por %p580, %p581
      %p583 = scmp.ne.s32.totalorder %s572, %s575
      %p584 = scmp.eq.s32.totalorder %s40, 3
      %p585 = por %p583, %p584
      %p586 = scmp.ne.s32.totalorder %s575, %s576
      %p587 = scmp.eq.s32.totalorder %s40, 0
      %p588 = por %p586, %p587
      %p589 = scmp.ne.s32.totalorder %s575, %s576
      %p590 = scmp.eq.s32.totalorder %s41, 3
      %p591 = por %p589, %p590
      %p593 = scmp.ne.s32.totalorder %s576, %s592
      %p594 = scmp.eq.s32.totalorder %s41, 0
      %p595 = por %p593, %p594
      %s596 = ssub.s32 %s43, %s50
      %p597 = scmp.eq.s32.totalorder %s596, 0
      %s599 = sadd.s32 %s598, 1
      %s600 = scalar_select %p597, %s598, %s599
      %p603 = pneg %p597
      %p604 = scmp.eq.s32.totalorder %s35, 3
      %p605 = por %p603, %p604
      %p606 = scmp.ne.s32.totalorder %s598, %s601
      %p607 = scmp.eq.s32.totalorder %s35, 0
      %p608 = por %p606, %p607
      %p609 = scmp.ne.s32.totalorder %s598, %s601
      %p610 = scmp.eq.s32.totalorder %s40, 3
      %p611 = por %p609, %p610
      %p612 = scmp.ne.s32.totalorder %s601, %s602
      %p613 = scmp.eq.s32.totalorder %s40, 0
      %p614 = por %p612, %p613
      %p615 = scmp.ne.s32.totalorder %s601, %s602
      %p616 = scmp.eq.s32.totalorder %s41, 3
      %p617 = por %p615, %p616
      %p619 = scmp.ne.s32.totalorder %s602, %s618
      %p620 = scmp.eq.s32.totalorder %s41, 0
      %p621 = por %p619, %p620
      %s622 = ssub.s32 %s43, %s50
      %p623 = scmp.eq.s32.totalorder %s622, 0
      %s625 = sadd.s32 %s624, 1
      %s626 = scalar_select %p623, %s624, %s625
      %p629 = pneg %p623
      %p630 = scmp.eq.s32.totalorder %s35, 3
      %p631 = por %p629, %p630
      %p632 = scmp.ne.s32.totalorder %s624, %s627
      %p633 = scmp.eq.s32.totalorder %s35, 0
      %p634 = por %p632, %p633
      %p635 = scmp.ne.s32.totalorder %s624, %s627
      %p636 = scmp.eq.s32.totalorder %s40, 3
      %p637 = por %p635, %p636
      %p638 = scmp.ne.s32.totalorder %s627, %s628
      %p639 = scmp.eq.s32.totalorder %s40, 0
      %p640 = por %p638, %p639
      %p641 = scmp.ne.s32.totalorder %s627, %s628
      %p642 = scmp.eq.s32.totalorder %s41, 3
      %p643 = por %p641, %p642
      %p645 = scmp.ne.s32.totalorder %s628, %s644
      %p646 = scmp.eq.s32.totalorder %s41, 0
      %p647 = por %p645, %p646
      %s648 = ssub.s32 %s43, %s50
      %p649 = scmp.eq.s32.totalorder %s648, 0
      %s651 = sadd.s32 %s650, 1
      %s652 = scalar_select %p649, %s650, %s651
      %p655 = pneg %p649
      %p656 = scmp.eq.s32.totalorder %s35, 3
      %p657 = por %p655, %p656
      %p658 = scmp.ne.s32.totalorder %s650, %s653
      %p659 = scmp.eq.s32.totalorder %s35, 0
      %p660 = por %p658, %p659
      %p661 = scmp.ne.s32.totalorder %s650, %s653
      %p662 = scmp.eq.s32.totalorder %s40, 3
      %p663 = por %p661, %p662
      %p664 = scmp.ne.s32.totalorder %s653, %s654
      %p665 = scmp.eq.s32.totalorder %s40, 0
      %p666 = por %p664, %p665
      %p667 = scmp.ne.s32.totalorder %s653, %s654
      %p668 = scmp.eq.s32.totalorder %s41, 3
      %p669 = por %p667, %p668
      %p671 = scmp.ne.s32.totalorder %s654, %s670
      %p672 = scmp.eq.s32.totalorder %s41, 0
      %p673 = por %p671, %p672
      %s674 = ssub.s32 %s43, %s50
      %p675 = scmp.eq.s32.totalorder %s674, 0
      %s677 = sadd.s32 %s676, 1
      %s678 = scalar_select %p675, %s676, %s677
      %p681 = pneg %p675
      %p682 = scmp.eq.s32.totalorder %s35, 3
      %p683 = por %p681, %p682
      %p684 = scmp.ne.s32.totalorder %s676, %s679
      %p685 = scmp.eq.s32.totalorder %s35, 0
      %p686 = por %p684, %p685
      %p687 = scmp.ne.s32.totalorder %s676, %s679
      %p688 = scmp.eq.s32.totalorder %s40, 3
      %p689 = por %p687, %p688
      %p690 = scmp.ne.s32.totalorder %s679, %s680
      %p691 = scmp.eq.s32.totalorder %s40, 0
      %p692 = por %p690, %p691
      %p693 = scmp.ne.s32.totalorder %s679, %s680
      %p694 = scmp.eq.s32.totalorder %s41, 3
      %p695 = por %p693, %p694
      %p697 = scmp.ne.s32.totalorder %s680, %s696
      %p698 = scmp.eq.s32.totalorder %s41, 0
      %p699 = por %p697, %p698
      %s700 = ssub.s32 %s43, %s50
      %p701 = scmp.eq.s32.totalorder %s700, 0
      %s703 = sadd.s32 %s702, 1
      %s704 = scalar_select %p701, %s702, %s703
      %p707 = pneg %p701
      %p708 = scmp.eq.s32.totalorder %s35, 3
      %p709 = por %p707, %p708
      %p710 = scmp.ne.s32.totalorder %s702, %s705
      %p711 = scmp.eq.s32.totalorder %s35, 0
      %p712 = por %p710, %p711
      %p713 = scmp.ne.s32.totalorder %s702, %s705
      %p714 = scmp.eq.s32.totalorder %s40, 3
      %p715 = por %p713, %p714
      %p716 = scmp.ne.s32.totalorder %s705, %s706
      %p717 = scmp.eq.s32.totalorder %s40, 0
      %p718 = por %p716, %p717
      %p719 = scmp.ne.s32.totalorder %s705, %s706
      %p720 = scmp.eq.s32.totalorder %s41, 3
      %p721 = por %p719, %p720
      %p723 = scmp.ne.s32.totalorder %s706, %s722
      %p724 = scmp.eq.s32.totalorder %s41, 0
      %p725 = por %p723, %p724
      %s726 = ssub.s32 %s42, %s54
      %p727 = scmp.eq.s32.totalorder %s726, 0
      %s729 = sadd.s32 %s728, 1
      %s730 = scalar_select %p727, %s728, %s729
      %p733 = pneg %p727
      %p734 = scmp.eq.s32.totalorder %s35, 3
      %p735 = por %p733, %p734
      %p736 = scmp.ne.s32.totalorder %s728, %s731
      %p737 = scmp.eq.s32.totalorder %s35, 0
      %p738 = por %p736, %p737
      %p739 = scmp.ne.s32.totalorder %s728, %s731
      %p740 = scmp.eq.s32.totalorder %s40, 3
      %p741 = por %p739, %p740
      %p742 = scmp.ne.s32.totalorder %s731, %s732
      %p743 = scmp.eq.s32.totalorder %s40, 0
      %p744 = por %p742, %p743
      %p745 = scmp.ne.s32.totalorder %s731, %s732
      %p746 = scmp.eq.s32.totalorder %s41, 3
      %p747 = por %p745, %p746
      %p749 = scmp.ne.s32.totalorder %s732, %s748
      %p750 = scmp.eq.s32.totalorder %s41, 0
      %p751 = por %p749, %p750
      %p752 = scmp.le.s32.totalorder 1, %s35
      %p753 = scmp.lt.s32.totalorder %s35, 5
      %p754 = pnand %p752, %p753
      %p755 = pneg %p754
      // Predicated region
      $region9: #{decoder_forward.1} parent=5 // pred_check
        _
      $region10: #{decoder_forward.1} parent=5 // pred_check_branch
        %757 = sbr.rel (%p754) target = $region12
      $region11: #{decoder_forward.1} parent=5 // pred_region
        %s758 = ssub.s32 %s35, 1
        // Predicated region
        $region13: #{decoder_forward.1} parent=11 // pred_check
          %p759 = pneg %p120
        $region14: #{decoder_forward.1} parent=11 // pred_check_branch
          %761 = sbr.rel (%p759) target = $region16
        $region15: #{decoder_forward.1} parent=11 // pred_region
          _
        $region16: #{decoder_forward.1} parent=11 // pred_fallthru
          _
      $region12: #{decoder_forward.1} parent=5 // pred_fallthru
        _
      %p762 = scmp.lt.s32.totalorder %s35, 4
      // Predicated region
      $region17: #{decoder_forward.1} parent=5 // pred_check
        %p763 = pneg %p762
      $region18: #{decoder_forward.1} parent=5 // pred_check_branch
        %765 = sbr.rel (%p763) target = $region20
      $region19: #{decoder_forward.1} parent=5 // pred_region
        // Predicated region
        $region21: #{decoder_forward.1} parent=19 // pred_check
          %p766 = pneg %p67
        $region22: #{decoder_forward.1} parent=19 // pred_check_branch
          %768 = sbr.rel (%p766) target = $region24
        $region23: #{decoder_forward.1} parent=19 // pred_region
          %p769 = scmp.lt.s32.totalorder %s42, 1
          %s770 = scalar_select %p769, %s42, 1
          %s771 = smul.addr %s770, 8
          %s772 = scalar_lea.vmem %s0, %s771
        $region24: #{decoder_forward.1} parent=19 // pred_fallthru
          _
        // Predicated region
        $region25: #{decoder_forward.1} parent=19 // pred_check
          %p773 = pneg %p93
        $region26: #{decoder_forward.1} parent=19 // pred_check_branch
          %775 = sbr.rel (%p773) target = $region28
        $region27: #{decoder_forward.1} parent=19 // pred_region
          %p776 = scmp.lt.s32.totalorder %s42, 1
          %s777 = scalar_select %p776, %s42, 1
          %s778 = smul.addr %s777, 8
          %s779 = scalar_lea.vmem %s1, %s778
        $region28: #{decoder_forward.1} parent=19 // pred_fallthru
          _
        // Predicated region
        $region29: #{decoder_forward.1} parent=19 // pred_check
          %p780 = pneg %p140
        $region30: #{decoder_forward.1} parent=19 // pred_check_branch
          %782 = sbr.rel (%p780) target = $region32
        $region31: #{decoder_forward.1} parent=19 // pred_region
          %p783 = scmp.lt.s32.totalorder %s42, 1
          %s784 = scalar_select %p783, %s42, 1
          %s785 = scalar_lea.vmem %s3, %s784
        $region32: #{decoder_forward.1} parent=19 // pred_fallthru
          _
        // Predicated region
        $region33: #{decoder_forward.1} parent=19 // pred_check
          %p786 = pneg %p166
        $region34: #{decoder_forward.1} parent=19 // pred_check_branch
          %788 = sbr.rel (%p786) target = $region36
        $region35: #{decoder_forward.1} parent=19 // pred_region
          %p789 = scmp.lt.s32.totalorder %s43, 1
          %s790 = scalar_select %p789, %s43, 1
          %s791 = smul.addr %s790, 4
          %s792 = smul.addr %s791, 4
          %s793 = scalar_lea.vmem %s4, %s792
        $region36: #{decoder_forward.1} parent=19 // pred_fallthru
          _
        // Predicated region
        $region37: #{decoder_forward.1} parent=19 // pred_check
          %p794 = pneg %p192
        $region38: #{decoder_forward.1} parent=19 // pred_check_branch
          %796 = sbr.rel (%p794) target = $region40
        $region39: #{decoder_forward.1} parent=19 // pred_region
          %p797 = scmp.lt.s32.totalorder %s43, 1
          %s798 = scalar_select %p797, %s43, 1
          %s799 = scalar_lea.vmem %s5, %s798
        $region40: #{decoder_forward.1} parent=19 // pred_fallthru
          _
        // Predicated region
        $region41: #{decoder_forward.1} parent=19 // pred_check
          %p800 = pneg %p218
        $region42: #{decoder_forward.1} parent=19 // pred_check_branch
          %802 = sbr.rel (%p800) target = $region44
        $region43: #{decoder_forward.1} parent=19 // pred_region
          %p803 = scmp.lt.s32.totalorder %s43, 1
          %s804 = scalar_select %p803, %s43, 1
          %s805 = smul.addr %s804, 4
          %s806 = smul.addr %s805, 4
          %s807 = scalar_lea.vmem %s6, %s806
        $region44: #{decoder_forward.1} parent=19 // pred_fallthru
          _
        // Predicated region
        $region45: #{decoder_forward.1} parent=19 // pred_check
          %p808 = pneg %p244
        $region46: #{decoder_forward.1} parent=19 // pred_check_branch
          %810 = sbr.rel (%p808) target = $region48
        $region47: #{decoder_forward.1} parent=19 // pred_region
          %p811 = scmp.lt.s32.totalorder %s43, 1
          %s812 = scalar_select %p811, %s43, 1
          %s813 = scalar_lea.vmem %s7, %s812
        $region48: #{decoder_forward.1} parent=19 // pred_fallthru
          _
        // Predicated region
        $region49: #{decoder_forward.1} parent=19 // pred_check
          %p814 = pneg %p270
        $region50: #{decoder_forward.1} parent=19 // pred_check_branch
          %816 = sbr.rel (%p814) target = $region52
        $region51: #{decoder_forward.1} parent=19 // pred_region
          %p817 = scmp.lt.s32.totalorder %s43, 1
          %s818 = scalar_select %p817, %s43, 1
          %s819 = smul.addr %s818, 4
          %s820 = smul.addr %s819, 4
          %s821 = scalar_lea.vmem %s8, %s820
        $region52: #{decoder_forward.1} parent=19 // pred_fallthru
          _
        // Predicated region
        $region53: #{decoder_forward.1} parent=19 // pred_check
          %p822 = pneg %p296
        $region54: #{decoder_forward.1} parent=19 // pred_check_branch
          %824 = sbr.rel (%p822) target = $region56
        $region55: #{decoder_forward.1} parent=19 // pred_region
          %p825 = scmp.lt.s32.totalorder %s43, 1
          %s826 = scalar_select %p825, %s43, 1
          %s827 = scalar_lea.vmem %s9, %s826
        $region56: #{decoder_forward.1} parent=19 // pred_fallthru
          _
        // Predicated region
        $region57: #{decoder_forward.1} parent=19 // pred_check
          %p828 = pneg %p322
        $region58: #{decoder_forward.1} parent=19 // pred_check_branch
          %830 = sbr.rel (%p828) target = $region60
        $region59: #{decoder_forward.1} parent=19 // pred_region
          %p831 = scmp.lt.s32.totalorder %s43, 1
          %s832 = scalar_select %p831, %s43, 1
          %s833 = scalar_lea.vmem %s10, %s832
        $region60: #{decoder_forward.1} parent=19 // pred_fallthru
          _
        // Predicated region
        $region61: #{decoder_forward.1} parent=19 // pred_check
          %p834 = pneg %p348
        $region62: #{decoder_forward.1} parent=19 // pred_check_branch
          %836 = sbr.rel (%p834) target = $region64
        $region63: #{decoder_forward.1} parent=19 // pred_region
          %p837 = scmp.lt.s32.totalorder %s43, 1
          %s838 = scalar_select %p837, %s43, 1
          %s839 = scalar_lea.vmem %s11, %s838
        $region64: #{decoder_forward.1} parent=19 // pred_fallthru
          _
        // Predicated region
        $region65: #{decoder_forward.1} parent=19 // pred_check
          %p840 = pneg %p374
        $region66: #{decoder_forward.1} parent=19 // pred_check_branch
          %842 = sbr.rel (%p840) target = $region68
        $region67: #{decoder_forward.1} parent=19 // pred_region
          %p843 = scmp.lt.s32.totalorder %s43, 1
          %s844 = scalar_select %p843, %s43, 1
          %s845 = smul.addr %s844, 4
          %s846 = smul.addr %s845, 4
          %s847 = scalar_lea.vmem %s12, %s846
        $region68: #{decoder_forward.1} parent=19 // pred_fallthru
          _
        // Predicated region
        $region69: #{decoder_forward.1} parent=19 // pred_check
          %p848 = pneg %p400
        $region70: #{decoder_forward.1} parent=19 // pred_check_branch
          %850 = sbr.rel (%p848) target = $region72
        $region71: #{decoder_forward.1} parent=19 // pred_region
          %p851 = scmp.lt.s32.totalorder %s43, 1
          %s852 = scalar_select %p851, %s43, 1
          %s853 = scalar_lea.vmem %s13, %s852
        $region72: #{decoder_forward.1} parent=19 // pred_fallthru
          _
        // Predicated region
        $region73: #{decoder_forward.1} parent=19 // pred_check
          %p854 = pneg %p426
        $region74: #{decoder_forward.1} parent=19 // pred_check_branch
          %856 = sbr.rel (%p854) target = $region76
        $region75: #{decoder_forward.1} parent=19 // pred_region
          %p857 = scmp.lt.s32.totalorder %s43, 1
          %s858 = scalar_select %p857, %s43, 1
          %s859 = smul.addr %s858, 4
          %s860 = smul.addr %s859, 4
          %s861 = scalar_lea.vmem %s14, %s860
        $region76: #{decoder_forward.1} parent=19 // pred_fallthru
          _
        // Predicated region
        $region77: #{decoder_forward.1} parent=19 // pred_check
          %p862 = pneg %p452
        $region78: #{decoder_forward.1} parent=19 // pred_check_branch
          %864 = sbr.rel (%p862) target = $region80
        $region79: #{decoder_forward.1} parent=19 // pred_region
          %p865 = scmp.lt.s32.totalorder %s43, 1
          %s866 = scalar_select %p865, %s43, 1
          %s867 = scalar_lea.vmem %s15, %s866
        $region80: #{decoder_forward.1} parent=19 // pred_fallthru
          _
        // Predicated region
        $region81: #{decoder_forward.1} parent=19 // pred_check
          %p868 = pneg %p478
        $region82: #{decoder_forward.1} parent=19 // pred_check_branch
          %870 = sbr.rel (%p868) target = $region84
        $region83: #{decoder_forward.1} parent=19 // pred_region
          %p871 = scmp.lt.s32.totalorder %s43, 1
          %s872 = scalar_select %p871, %s43, 1
          %s873 = smul.addr %s872, 4
          %s874 = smul.addr %s873, 4
          %s875 = scalar_lea.vmem %s16, %s874
        $region84: #{decoder_forward.1} parent=19 // pred_fallthru
          _
        // Predicated region
        $region85: #{decoder_forward.1} parent=19 // pred_check
          %p876 = pneg %p504
        $region86: #{decoder_forward.1} parent=19 // pred_check_branch
          %878 = sbr.rel (%p876) target = $region88
        $region87: #{decoder_forward.1} parent=19 // pred_region
          %p879 = scmp.lt.s32.totalorder %s43, 1
          %s880 = scalar_select %p879, %s43, 1
          %s881 = scalar_lea.vmem %s17, %s880
        $region88: #{decoder_forward.1} parent=19 // pred_fallthru
          _
        // Predicated region
        $region89: #{decoder_forward.1} parent=19 // pred_check
          %p882 = pneg %p530
        $region90: #{decoder_forward.1} parent=19 // pred_check_branch
          %884 = sbr.rel (%p882) target = $region92
        $region91: #{decoder_forward.1} parent=19 // pred_region
          %p885 = scmp.lt.s32.totalorder %s43, 1
          %s886 = scalar_select %p885, %s43, 1
          %s887 = scalar_lea.vmem %s18, %s886
        $region92: #{decoder_forward.1} parent=19 // pred_fallthru
          _
        // Predicated region
        $region93: #{decoder_forward.1} parent=19 // pred_check
          %p888 = pneg %p556
        $region94: #{decoder_forward.1} parent=19 // pred_check_branch
          %890 = sbr.rel (%p888) target = $region96
        $region95: #{decoder_forward.1} parent=19 // pred_region
          %p891 = scmp.lt.s32.totalorder %s43, 1
          %s892 = scalar_select %p891, %s43, 1
          %s893 = scalar_lea.vmem %s19, %s892
        $region96: #{decoder_forward.1} parent=19 // pred_fallthru
          _
        // Predicated region
        $region97: #{decoder_forward.1} parent=19 // pred_check
          %p894 = pneg %p582
        $region98: #{decoder_forward.1} parent=19 // pred_check_branch
          %896 = sbr.rel (%p894) target = $region100
        $region99: #{decoder_forward.1} parent=19 // pred_region
          %p897 = scmp.lt.s32.totalorder %s43, 1
          %s898 = scalar_select %p897, %s43, 1
          %s899 = smul.addr %s898, 4
          %s900 = smul.addr %s899, 4
          %s901 = scalar_lea.vmem %s20, %s900
        $region100: #{decoder_forward.1} parent=19 // pred_fallthru
          _
        // Predicated region
        $region101: #{decoder_forward.1} parent=19 // pred_check
          %p902 = pneg %p608
        $region102: #{decoder_forward.1} parent=19 // pred_check_branch
          %904 = sbr.rel (%p902) target = $region104
        $region103: #{decoder_forward.1} parent=19 // pred_region
          %p905 = scmp.lt.s32.totalorder %s43, 1
          %s906 = scalar_select %p905, %s43, 1
          %s907 = scalar_lea.vmem %s21, %s906
        $region104: #{decoder_forward.1} parent=19 // pred_fallthru
          _
        // Predicated region
        $region105: #{decoder_forward.1} parent=19 // pred_check
          %p908 = pneg %p634
        $region106: #{decoder_forward.1} parent=19 // pred_check_branch
          %910 = sbr.rel (%p908) target = $region108
        $region107: #{decoder_forward.1} parent=19 // pred_region
          %p911 = scmp.lt.s32.totalorder %s43, 1
          %s912 = scalar_select %p911, %s43, 1
          %s913 = smul.addr %s912, 8
          %s914 = smul.addr %s913, 4
          %s915 = scalar_lea.vmem %s22, %s914
        $region108: #{decoder_forward.1} parent=19 // pred_fallthru
          _
        // Predicated region
        $region109: #{decoder_forward.1} parent=19 // pred_check
          %p916 = pneg %p660
        $region110: #{decoder_forward.1} parent=19 // pred_check_branch
          %918 = sbr.rel (%p916) target = $region112
        $region111: #{decoder_forward.1} parent=19 // pred_region
          %p919 = scmp.lt.s32.totalorder %s43, 1
          %s920 = scalar_select %p919, %s43, 1
          %s921 = scalar_lea.vmem %s23, %s920
        $region112: #{decoder_forward.1} parent=19 // pred_fallthru
          _
        // Predicated region
        $region113: #{decoder_forward.1} parent=19 // pred_check
          %p922 = pneg %p686
        $region114: #{decoder_forward.1} parent=19 // pred_check_branch
          %924 = sbr.rel (%p922) target = $region116
        $region115: #{decoder_forward.1} parent=19 // pred_region
          %p925 = scmp.lt.s32.totalorder %s43, 1
          %s926 = scalar_select %p925, %s43, 1
          %s927 = scalar_lea.vmem %s24, %s926
        $region116: #{decoder_forward.1} parent=19 // pred_fallthru
          _
        // Predicated region
        $region117: #{decoder_forward.1} parent=19 // pred_check
          %p928 = pneg %p712
        $region118: #{decoder_forward.1} parent=19 // pred_check_branch
          %930 = sbr.rel (%p928) target = $region120
        $region119: #{decoder_forward.1} parent=19 // pred_region
          %p931 = scmp.lt.s32.totalorder %s43, 1
          %s932 = scalar_select %p931, %s43, 1
          %s933 = scalar_lea.vmem %s25, %s932
        $region120: #{decoder_forward.1} parent=19 // pred_fallthru
          _
      $region20: #{decoder_forward.1} parent=5 // pred_fallthru
        _
      %p934 = scmp.le.s32.totalorder 1, %s35
      %p935 = scmp.lt.s32.totalorder %s35, 5
      %p936 = pnand %p934, %p935
      %p937 = pneg %p936
      // Predicated region
      $region121: #{decoder_forward.1} parent=5 // pred_check
        _
      $region122: #{decoder_forward.1} parent=5 // pred_check_branch
        %939 = sbr.rel (%p936) target = $region124
      $region123: #{decoder_forward.1} parent=5 // pred_region
        %s940 = ssub.s32 %s35, 1
        %p941 = scmp.lt.s32.totalorder %s44, 1
        %s942 = scalar_select %p941, %s44, 1
        %s943 = smul.addr %s942, 8
        %s944 = scalar_lea.vmem %s0, %s943
        %p945 = pneg %p73
        %p946 = pneg %p70
        %p947 = scmp.lt.s32.totalorder %s44, 1
        %s948 = scalar_select %p947, %s44, 1
        %s949 = smul.addr %s948, 8
        %s950 = scalar_lea.vmem %s1, %s949
        %p951 = pneg %p99
        %p952 = pneg %p96
        %p953 = pneg %p120
        %p954 = pneg %p117
        %p955 = scmp.lt.s32.totalorder %s44, 1
        %s956 = scalar_select %p955, %s44, 1
        %s957 = scalar_lea.vmem %s3, %s956
        %p958 = pneg %p146
        %p959 = pneg %p143
        %p960 = scmp.lt.s32.totalorder %s45, 1
        %s961 = scalar_select %p960, %s45, 1
        %s962 = smul.addr %s961, 4
        %s963 = smul.addr %s962, 4
        %s964 = scalar_lea.vmem %s4, %s963
        %p965 = pneg %p172
        %p966 = pneg %p169
        %p967 = scmp.lt.s32.totalorder %s45, 1
        %s968 = scalar_select %p967, %s45, 1
        %s969 = scalar_lea.vmem %s5, %s968
        %p970 = pneg %p198
        %p971 = pneg %p195
        %p972 = scmp.lt.s32.totalorder %s45, 1
        %s973 = scalar_select %p972, %s45, 1
        %s974 = smul.addr %s973, 4
        %s975 = smul.addr %s974, 4
        %s976 = scalar_lea.vmem %s6, %s975
        %p977 = pneg %p224
        %p978 = pneg %p221
        %p979 = scmp.lt.s32.totalorder %s45, 1
        %s980 = scalar_select %p979, %s45, 1
        %s981 = scalar_lea.vmem %s7, %s980
        %p982 = pneg %p250
        %p983 = pneg %p247
        %p984 = scmp.lt.s32.totalorder %s45, 1
        %s985 = scalar_select %p984, %s45, 1
        %s986 = smul.addr %s985, 4
        %s987 = smul.addr %s986, 4
        %s988 = scalar_lea.vmem %s8, %s987
        %p989 = pneg %p276
        %p990 = pneg %p273
        %p991 = scmp.lt.s32.totalorder %s45, 1
        %s992 = scalar_select %p991, %s45, 1
        %s993 = scalar_lea.vmem %s9, %s992
        %p994 = pneg %p302
        %p995 = pneg %p299
        %p996 = scmp.lt.s32.totalorder %s45, 1
        %s997 = scalar_select %p996, %s45, 1
        %s998 = scalar_lea.vmem %s10, %s997
        %p999 = pneg %p328
        %p1000 = pneg %p325
        %p1001 = scmp.lt.s32.totalorder %s45, 1
        %s1002 = scalar_select %p1001, %s45, 1
        %s1003 = scalar_lea.vmem %s11, %s1002
        %p1004 = pneg %p354
        %p1005 = pneg %p351
        %p1006 = scmp.lt.s32.totalorder %s45, 1
        %s1007 = scalar_select %p1006, %s45, 1
        %s1008 = smul.addr %s1007, 4
        %s1009 = smul.addr %s1008, 4
        %s1010 = scalar_lea.vmem %s12, %s1009
        %p1011 = pneg %p380
        %p1012 = pneg %p377
        %p1013 = scmp.lt.s32.totalorder %s45, 1
        %s1014 = scalar_select %p1013, %s45, 1
        %s1015 = scalar_lea.vmem %s13, %s1014
        %p1016 = pneg %p406
        %p1017 = pneg %p403
        %p1018 = scmp.lt.s32.totalorder %s45, 1
        %s1019 = scalar_select %p1018, %s45, 1
        %s1020 = smul.addr %s1019, 4
        %s1021 = smul.addr %s1020, 4
        %s1022 = scalar_lea.vmem %s14, %s1021
        %p1023 = pneg %p432
        %p1024 = pneg %p429
        %p1025 = scmp.lt.s32.totalorder %s45, 1
        %s1026 = scalar_select %p1025, %s45, 1
        %s1027 = scalar_lea.vmem %s15, %s1026
        %p1028 = pneg %p458
        %p1029 = pneg %p455
        %p1030 = scmp.lt.s32.totalorder %s45, 1
        %s1031 = scalar_select %p1030, %s45, 1
        %s1032 = smul.addr %s1031, 4
        %s1033 = smul.addr %s1032, 4
        %s1034 = scalar_lea.vmem %s16, %s1033
        %p1035 = pneg %p484
        %p1036 = pneg %p481
        %p1037 = scmp.lt.s32.totalorder %s45, 1
        %s1038 = scalar_select %p1037, %s45, 1
        %s1039 = scalar_lea.vmem %s17, %s1038
        %p1040 = pneg %p510
        %p1041 = pneg %p507
        %p1042 = scmp.lt.s32.totalorder %s45, 1
        %s1043 = scalar_select %p1042, %s45, 1
        %s1044 = scalar_lea.vmem %s18, %s1043
        %p1045 = pneg %p536
        %p1046 = pneg %p533
        %p1047 = scmp.lt.s32.totalorder %s45, 1
        %s1048 = scalar_select %p1047, %s45, 1
        %s1049 = scalar_lea.vmem %s19, %s1048
        %p1050 = pneg %p562
        %p1051 = pneg %p559
        %p1052 = scmp.lt.s32.totalorder %s45, 1
        %s1053 = scalar_select %p1052, %s45, 1
        %s1054 = smul.addr %s1053, 4
        %s1055 = smul.addr %s1054, 4
        %s1056 = scalar_lea.vmem %s20, %s1055
        %p1057 = pneg %p588
        %p1058 = pneg %p585
        %p1059 = scmp.lt.s32.totalorder %s45, 1
        %s1060 = scalar_select %p1059, %s45, 1
        %s1061 = scalar_lea.vmem %s21, %s1060
        %p1062 = pneg %p614
        %p1063 = pneg %p611
        %p1064 = scmp.lt.s32.totalorder %s45, 1
        %s1065 = scalar_select %p1064, %s45, 1
        %s1066 = smul.addr %s1065, 8
        %s1067 = smul.addr %s1066, 4
        %s1068 = scalar_lea.vmem %s22, %s1067
        %p1069 = pneg %p640
        %p1070 = pneg %p637
        %p1071 = scmp.lt.s32.totalorder %s45, 1
        %s1072 = scalar_select %p1071, %s45, 1
        %s1073 = scalar_lea.vmem %s23, %s1072
        %p1074 = pneg %p666
        %p1075 = pneg %p663
        %p1076 = scmp.lt.s32.totalorder %s45, 1
        %s1077 = scalar_select %p1076, %s45, 1
        %s1078 = scalar_lea.vmem %s24, %s1077
        %p1079 = pneg %p692
        %p1080 = pneg %p689
        %p1081 = scmp.lt.s32.totalorder %s45, 1
        %s1082 = scalar_select %p1081, %s45, 1
        %s1083 = scalar_lea.vmem %s25, %s1082
        %p1084 = pneg %p718
        %p1085 = pneg %p715
        %p1086 = pneg %p744
        %p1087 = pneg %p741
        %s1088 = sand.u32 %s731, 1
        %s1089 = scalar_lea.sflag [#allocation4], %s1088
        %s1090 = sand.u32 %s731, 1
        %s1091 = smul.addr %s1090, 8
        %s1092 = scalar_lea.vmem [#allocation3], %s1091
        %p1093 = scmp.lt.s32.totalorder %s44, 1
        %s1094 = scalar_select %p1093, %s44, 1
        %s1095 = smul.addr %s1094, 8
        %s1096 = scalar_lea.vmem %s0, %s1095
        %p1097 = scmp.lt.s32.totalorder %s44, 1
        %s1098 = scalar_select %p1097, %s44, 1
        %s1099 = smul.addr %s1098, 8
        %s1100 = scalar_lea.vmem %s1, %s1099
        %p1101 = scmp.lt.s32.totalorder %s44, 1
        %s1102 = scalar_select %p1101, %s44, 1
        %s1103 = scalar_lea.vmem %s3, %s1102
        %p1104 = scmp.lt.s32.totalorder %s45, 1
        %s1105 = scalar_select %p1104, %s45, 1
        %s1106 = smul.addr %s1105, 4
        %s1107 = smul.addr %s1106, 4
        %s1108 = scalar_lea.vmem %s4, %s1107
        %p1109 = scmp.lt.s32.totalorder %s45, 1
        %s1110 = scalar_select %p1109, %s45, 1
        %s1111 = scalar_lea.vmem %s5, %s1110
        %p1112 = scmp.lt.s32.totalorder %s45, 1
        %s1113 = scalar_select %p1112, %s45, 1
        %s1114 = smul.addr %s1113, 4
        %s1115 = smul.addr %s1114, 4
        %s1116 = scalar_lea.vmem %s6, %s1115
        %p1117 = scmp.lt.s32.totalorder %s45, 1
        %s1118 = scalar_select %p1117, %s45, 1
        %s1119 = scalar_lea.vmem %s7, %s1118
        %p1120 = scmp.lt.s32.totalorder %s45, 1
        %s1121 = scalar_select %p1120, %s45, 1
        %s1122 = smul.addr %s1121, 4
        %s1123 = smul.addr %s1122, 4
        %s1124 = scalar_lea.vmem %s8, %s1123
        %p1125 = scmp.lt.s32.totalorder %s45, 1
        %s1126 = scalar_select %p1125, %s45, 1
        %s1127 = scalar_lea.vmem %s9, %s1126
        %p1128 = scmp.lt.s32.totalorder %s45, 1
        %s1129 = scalar_select %p1128, %s45, 1
        %s1130 = scalar_lea.vmem %s10, %s1129
        %p1131 = scmp.lt.s32.totalorder %s45, 1
        %s1132 = scalar_select %p1131, %s45, 1
        %s1133 = scalar_lea.vmem %s11, %s1132
        %p1134 = scmp.lt.s32.totalorder %s45, 1
        %s1135 = scalar_select %p1134, %s45, 1
        %s1136 = smul.addr %s1135, 4
        %s1137 = smul.addr %s1136, 4
        %s1138 = scalar_lea.vmem %s12, %s1137
        %p1139 = scmp.lt.s32.totalorder %s45, 1
        %s1140 = scalar_select %p1139, %s45, 1
        %s1141 = scalar_lea.vmem %s13, %s1140
        %p1142 = scmp.lt.s32.totalorder %s45, 1
        %s1143 = scalar_select %p1142, %s45, 1
        %s1144 = smul.addr %s1143, 4
        %s1145 = smul.addr %s1144, 4
        %s1146 = scalar_lea.vmem %s14, %s1145
        %p1147 = scmp.lt.s32.totalorder %s45, 1
        %s1148 = scalar_select %p1147, %s45, 1
        %s1149 = scalar_lea.vmem %s15, %s1148
        %p1150 = scmp.lt.s32.totalorder %s45, 1
        %s1151 = scalar_select %p1150, %s45, 1
        %s1152 = smul.addr %s1151, 4
        %s1153 = smul.addr %s1152, 4
        %s1154 = scalar_lea.vmem %s16, %s1153
        %p1155 = scmp.lt.s32.totalorder %s45, 1
        %s1156 = scalar_select %p1155, %s45, 1
        %s1157 = scalar_lea.vmem %s17, %s1156
        %p1158 = scmp.lt.s32.totalorder %s45, 1
        %s1159 = scalar_select %p1158, %s45, 1
        %s1160 = scalar_lea.vmem %s18, %s1159
        %p1161 = scmp.lt.s32.totalorder %s45, 1
        %s1162 = scalar_select %p1161, %s45, 1
        %s1163 = scalar_lea.vmem %s19, %s1162
        %p1164 = scmp.lt.s32.totalorder %s45, 1
        %s1165 = scalar_select %p1164, %s45, 1
        %s1166 = smul.addr %s1165, 4
        %s1167 = smul.addr %s1166, 4
        %s1168 = scalar_lea.vmem %s20, %s1167
        %p1169 = scmp.lt.s32.totalorder %s45, 1
        %s1170 = scalar_select %p1169, %s45, 1
        %s1171 = scalar_lea.vmem %s21, %s1170
        %p1172 = scmp.lt.s32.totalorder %s45, 1
        %s1173 = scalar_select %p1172, %s45, 1
        %s1174 = smul.addr %s1173, 8
        %s1175 = smul.addr %s1174, 4
        %s1176 = scalar_lea.vmem %s22, %s1175
        %p1177 = scmp.lt.s32.totalorder %s45, 1
        %s1178 = scalar_select %p1177, %s45, 1
        %s1179 = scalar_lea.vmem %s23, %s1178
        %p1180 = scmp.lt.s32.totalorder %s45, 1
        %s1181 = scalar_select %p1180, %s45, 1
        %s1182 = scalar_lea.vmem %s24, %s1181
        %p1183 = scmp.lt.s32.totalorder %s45, 1
        %s1184 = scalar_select %p1183, %s45, 1
        %s1185 = scalar_lea.vmem %s25, %s1184
        %p1187 = scmp.eq.s32.totalorder %s45, 0
        // Predicated region
        $region125: #{decoder_forward.1} parent=123 // pred_check
          %p1188 = pneg %p1187
        $region126: #{decoder_forward.1} parent=123 // pred_check_branch
          %1190 = sbr.rel (%p1188) target = $region128
        $region127: #{decoder_forward.1} parent=123 // pred_region
          %v1191 = vld [vmem:[%s1096] sm:$0xff]
          %vm1192 = vcmask 261120
          %1193 = vst.msk [vmem:[#allocation2] sm:$0xff] %vm1192, %v1191
        $region128: #{decoder_forward.1} parent=123 // pred_fallthru
          _
        %v1194 = vld [vmem:[#allocation2] sm:$0xff]
        %v1195 = vld [vmem:[%s2] sm:$0xff]
        %v1196 = vld [vmem:[%s1103] sm:$0x1]
        %v1197 = vpack.c.bf16 %v1194, %v1194
        %v1198 = vld [vmem:[%s1108] sm:$0xf]
        %v1199 = vld [vmem:[%s1108 + $0x4] sm:$0xf]
        %v1200 = vld [vmem:[%s1108 + $0x8] sm:$0xf]
        %v1201 = vld [vmem:[%s1108 + $0xc] sm:$0xf]
        %v1202 = vld [vmem:[%s1111] sm:$0x1]
        %v1203 = vld [vmem:[%s1116] sm:$0xf]
        %v1204 = vld [vmem:[%s1116 + $0x4] sm:$0xf]
        %v1205 = vld [vmem:[%s1116 + $0x8] sm:$0xf]
        %v1206 = vld [vmem:[%s1116 + $0xc] sm:$0xf]
        %v1207 = vld [vmem:[%s1119] sm:$0x1]
        %v1208 = vld [vmem:[%s1124] sm:$0xf]
        %v1209 = vld [vmem:[%s1124 + $0x4] sm:$0xf]
        %v1210 = vld [vmem:[%s1124 + $0x8] sm:$0xf]
        %v1211 = vld [vmem:[%s1124 + $0xc] sm:$0xf]
        %v1212 = vld [vmem:[%s1127] sm:$0x1]
        %v1213 = vld [vmem:[%s1130] sm:$0x1]
        %v1214 = vld [vmem:[%s1133] sm:$0x1]
        %v1216 = vlaneseq
        %v1217 = vshrl.u32 %v1216, 7
        %v1218 = vsub.s32 0, %v1217
        %v1219 = vrot.slane %v1202, %v1218
        %v1225 = vunpack.c.l.b16 %v1198
        %v1226 = vunpack.c.l.b16 %v1199
        %v1227 = vunpack.c.l.b16 %v1200
        %v1228 = vunpack.c.l.b16 %v1201
        %v1229 = vpack.c.b16 %v1226, %v1225
        %v1230 = vpack.c.b16 %v1228, %v1227
        %vm1233 = vcmask 261120
        %v1235 = vsel %vm1233, %v1197, 0
        %1237 = vmatprep.subr.bf16.mxu0 0
        %1238 = vmatpush1.bf16.msra.mxu0 %v1229
        %1239 = vmatprep.subr.bf16.mxu0 0
        %1240 = vmatpush1.bf16.msra.mxu0 %v1230
        %1241 = vmatprep.subr.bf16.mxu0 0
        %1242 = vmatpush1.bf16.msra.mxu0 0
        %1243 = vmatprep.subr.bf16.mxu0 0
        %1244 = vmatpush1.bf16.msra.mxu0 0
        %1245 = vmatprep.subr.bf16.mxu0 0
        %1246 = vmatpush1.bf16.msra.mxu0 0
        %1247 = vmatprep.subr.bf16.mxu0 0
        %1248 = vmatpush1.bf16.msra.mxu0 0
        %1249 = vmatprep.subr.bf16.mxu0 0
        %1250 = vmatpush1.bf16.msra.mxu0 0
        %1251 = vmatprep.subr.bf16.mxu0 0
        %1252 = vmatpush1.bf16.msra.mxu0 0
        %1253 = vmatprep.subr.bf16.mxu0 0
        %1254 = vmatpush1.bf16.msra.mxu0 0
        %1255 = vmatprep.subr.bf16.mxu0 0
        %1256 = vmatpush1.bf16.msra.mxu0 0
        %1257 = vmatprep.subr.bf16.mxu0 0
        %1258 = vmatpush1.bf16.msra.mxu0 0
        %1259 = vmatprep.subr.bf16.mxu0 0
        %1260 = vmatpush1.bf16.msra.mxu0 0
        %1261 = vmatprep.subr.bf16.mxu0 0
        %1262 = vmatpush1.bf16.msra.mxu0 0
        %1263 = vmatprep.subr.bf16.mxu0 0
        %1264 = vmatpush1.bf16.msra.mxu0 0
        %1265 = vmatprep.subr.bf16.mxu0 0
        %1266 = vmatpush1.bf16.msra.mxu0 0
        %1267 = vmatprep.subr.bf16.mxu0 0
        %1268 = vmatpush1.bf16.msra.mxu0 0
        %1269 = vmatprep.mubr.bf16.mxu0 0
        %1270 = vmatmul.mubr.bf16.gmra.mrb[0].mxu0 %v1235
        %v1271 = vpop.f32.mrb[0].mxu0
        %v1272 = vadd.f32 %v1219, %v1271
        %v1273 = vpop.f32.mrb[0].mxu0
        %v1274 = vpop.f32.mrb[0].mxu0
        %v1275 = vpop.f32.mrb[0].mxu0
        %1276 = vdwg.mxu0
        %v1278 = vlaneseq
        %v1279 = vshrl.u32 %v1278, 7
        %v1280 = vsub.s32 0, %v1279
        %v1281 = vrot.slane %v1207, %v1280
        %v1287 = vunpack.c.l.b16 %v1203
        %v1288 = vunpack.c.l.b16 %v1204
        %v1289 = vunpack.c.l.b16 %v1205
        %v1290 = vunpack.c.l.b16 %v1206
        %v1291 = vpack.c.b16 %v1288, %v1287
        %v1292 = vpack.c.b16 %v1290, %v1289
        %1295 = vmatprep.subr.bf16.mxu0 0
        %1296 = vmatpush1.bf16.msra.mxu0 %v1291
        %1297 = vmatprep.subr.bf16.mxu0 0
        %1298 = vmatpush1.bf16.msra.mxu0 %v1292
        %1299 = vmatprep.subr.bf16.mxu0 0
        %1300 = vmatpush1.bf16.msra.mxu0 0
        %1301 = vmatprep.subr.bf16.mxu0 0
        %1302 = vmatpush1.bf16.msra.mxu0 0
        %1303 = vmatprep.subr.bf16.mxu0 0
        %1304 = vmatpush1.bf16.msra.mxu0 0
        %1305 = vmatprep.subr.bf16.mxu0 0
        %1306 = vmatpush1.bf16.msra.mxu0 0
        %1307 = vmatprep.subr.bf16.mxu0 0
        %1308 = vmatpush1.bf16.msra.mxu0 0
        %1309 = vmatprep.subr.bf16.mxu0 0
        %1310 = vmatpush1.bf16.msra.mxu0 0
        %1311 = vmatprep.subr.bf16.mxu0 0
        %1312 = vmatpush1.bf16.msra.mxu0 0
        %1313 = vmatprep.subr.bf16.mxu0 0
        %1314 = vmatpush1.bf16.msra.mxu0 0
        %1315 = vmatprep.subr.bf16.mxu0 0
        %1316 = vmatpush1.bf16.msra.mxu0 0
        %1317 = vmatprep.subr.bf16.mxu0 0
        %1318 = vmatpush1.bf16.msra.mxu0 0
        %1319 = vmatprep.subr.bf16.mxu0 0
        %1320 = vmatpush1.bf16.msra.mxu0 0
        %1321 = vmatprep.subr.bf16.mxu0 0
        %1322 = vmatpush1.bf16.msra.mxu0 0
        %1323 = vmatprep.subr.bf16.mxu0 0
        %1324 = vmatpush1.bf16.msra.mxu0 0
        %1325 = vmatprep.subr.bf16.mxu0 0
        %1326 = vmatpush1.bf16.msra.mxu0 0
        %1327 = vmatprep.mubr.bf16.mxu0 0
        %1328 = vmatmul.mubr.bf16.gmra.mrb[0].mxu0 %v1235
        %v1329 = vpop.f32.mrb[0].mxu0
        %v1330 = vadd.f32 %v1281, %v1329
        %v1331 = vpop.f32.mrb[0].mxu0
        %v1332 = vpop.f32.mrb[0].mxu0
        %v1333 = vpop.f32.mrb[0].mxu0
        %1334 = vdwg.mxu0
        %v1335 = vpack.c.bf16 %v1272, %v1272
        %v1336 = vpack.c.bf16 %v1330, %v1330
        %1338 = vrot.lane.b32.xlu0 %v1335, 120
        %v1339 = vpop.permute.xlu0 %1338
        %1340 = vrot.lane.b32.xlu0 %v1335, 112
        %v1341 = vpop.permute.xlu0 %1340
        %1342 = vrot.lane.b32.xlu0 %v1335, 104
        %v1343 = vpop.permute.xlu0 %1342
        %1345 = vrot.lane.b32.xlu0 %v1336, 120
        %v1346 = vpop.permute.xlu0 %1345
        %1347 = vrot.lane.b32.xlu0 %v1336, 112
        %v1348 = vpop.permute.xlu0 %1347
        %1349 = vrot.lane.b32.xlu0 %v1336, 104
        %v1350 = vpop.permute.xlu0 %1349
        %vm1351 = vcmask 64512
        %v1353 = vsel %vm1351, %v1335, 0
        %v1356 = vsel %vm1351, %v1336, 0
        %1358 = vmatprep.subr.bf16.mxu0 0
        %1359 = vmatpush1.bf16.xpose.msra.mxu0 %v1356
        %1360 = vmatprep.subr.bf16.mxu0 0
        %1361 = vmatpush1.bf16.xpose.msra.mxu0 0
        %1362 = vmatprep.subr.bf16.mxu0 0
        %1363 = vmatpush1.bf16.xpose.msra.mxu0 0
        %1364 = vmatprep.subr.bf16.mxu0 0
        %1365 = vmatpush1.bf16.xpose.msra.mxu0 0
        %1366 = vmatprep.subr.bf16.mxu0 0
        %1367 = vmatpush1.bf16.xpose.msra.mxu0 0
        %1368 = vmatprep.subr.bf16.mxu0 0
        %1369 = vmatpush1.bf16.xpose.msra.mxu0 0
        %1370 = vmatprep.subr.bf16.mxu0 0
        %1371 = vmatpush1.bf16.xpose.msra.mxu0 0
        %1372 = vmatprep.subr.bf16.mxu0 0
        %1373 = vmatpush1.bf16.xpose.msra.mxu0 0
        %1374 = vmatprep.subr.bf16.mxu0 0
        %1375 = vmatpush1.bf16.xpose.msra.mxu0 0
        %1376 = vmatprep.subr.bf16.mxu0 0
        %1377 = vmatpush1.bf16.xpose.msra.mxu0 0
        %1378 = vmatprep.subr.bf16.mxu0 0
        %1379 = vmatpush1.bf16.xpose.msra.mxu0 0
        %1380 = vmatprep.subr.bf16.mxu0 0
        %1381 = vmatpush1.bf16.xpose.msra.mxu0 0
        %1382 = vmatprep.subr.bf16.mxu0 0
        %1383 = vmatpush1.bf16.xpose.msra.mxu0 0
        %1384 = vmatprep.subr.bf16.mxu0 0
        %1385 = vmatpush1.bf16.xpose.msra.mxu0 0
        %1386 = vmatprep.subr.bf16.mxu0 0
        %1387 = vmatpush1.bf16.xpose.msra.mxu0 0
        %1388 = vmatprep.subr.bf16.mxu0 0
        %1389 = vmatpush1.bf16.xpose.msra.mxu0 0
        %1390 = vmatprep.mubr.bf16.mxu0 0
        %1391 = vmatmul.mubr.bf16.gmra.mrb[0].mxu0 %v1353
        %v1392 = vpop.f32.mrb[0].mxu0
        %v1393 = vadd.f32 %v1195, %v1392
        %v1394 = vpop.f32.mrb[0].mxu0
        %v1395 = vpop.f32.mrb[0].mxu0
        %v1396 = vpop.f32.mrb[0].mxu0
        %1397 = vdwg.mxu0
        %v1399 = vsel %vm1351, %v1339, 0
        %v1402 = vsel %vm1351, %v1346, 0
        %1404 = vmatprep.subr.bf16.mxu0 0
        %1405 = vmatpush1.bf16.xpose.msra.mxu0 %v1402
        %1406 = vmatprep.subr.bf16.mxu0 0
        %1407 = vmatpush1.bf16.xpose.msra.mxu0 0
        %1408 = vmatprep.subr.bf16.mxu0 0
        %1409 = vmatpush1.bf16.xpose.msra.mxu0 0
        %1410 = vmatprep.subr.bf16.mxu0 0
        %1411 = vmatpush1.bf16.xpose.msra.mxu0 0
        %1412 = vmatprep.subr.bf16.mxu0 0
        %1413 = vmatpush1.bf16.xpose.msra.mxu0 0
        %1414 = vmatprep.subr.bf16.mxu0 0
        %1415 = vmatpush1.bf16.xpose.msra.mxu0 0
        %1416 = vmatprep.subr.bf16.mxu0 0
        %1417 = vmatpush1.bf16.xpose.msra.mxu0 0
        %1418 = vmatprep.subr.bf16.mxu0 0
        %1419 = vmatpush1.bf16.xpose.msra.mxu0 0
        %1420 = vmatprep.subr.bf16.mxu0 0
        %1421 = vmatpush1.bf16.xpose.msra.mxu0 0
        %1422 = vmatprep.subr.bf16.mxu0 0
        %1423 = vmatpush1.bf16.xpose.msra.mxu0 0
        %1424 = vmatprep.subr.bf16.mxu0 0
        %1425 = vmatpush1.bf16.xpose.msra.mxu0 0
        %1426 = vmatprep.subr.bf16.mxu0 0
        %1427 = vmatpush1.bf16.xpose.msra.mxu0 0
        %1428 = vmatprep.subr.bf16.mxu0 0
        %1429 = vmatpush1.bf16.xpose.msra.mxu0 0
        %1430 = vmatprep.subr.bf16.mxu0 0
        %1431 = vmatpush1.bf16.xpose.msra.mxu0 0
        %1432 = vmatprep.subr.bf16.mxu0 0
        %1433 = vmatpush1.bf16.xpose.msra.mxu0 0
        %1434 = vmatprep.subr.bf16.mxu0 0
        %1435 = vmatpush1.bf16.xpose.msra.mxu0 0
        %1436 = vmatprep.mubr.bf16.mxu0 0
        %1437 = vmatmul.mubr.bf16.gmra.mrb[0].mxu0 %v1399
        %v1438 = vpop.f32.mrb[0].mxu0
        %v1439 = vadd.f32 %v1195, %v1438
        %v1440 = vpop.f32.mrb[0].mxu0
        %v1441 = vpop.f32.mrb[0].mxu0
        %v1442 = vpop.f32.mrb[0].mxu0
        %1443 = vdwg.mxu0
        %v1445 = vsel %vm1351, %v1341, 0
        %v1448 = vsel %vm1351, %v1348, 0
        %1450 = vmatprep.subr.bf16.mxu0 0
        %1451 = vmatpush1.bf16.xpose.msra.mxu0 %v1448
        %1452 = vmatprep.subr.bf16.mxu0 0
        %1453 = vmatpush1.bf16.xpose.msra.mxu0 0
        %1454 = vmatprep.subr.bf16.mxu0 0
        %1455 = vmatpush1.bf16.xpose.msra.mxu0 0
        %1456 = vmatprep.subr.bf16.mxu0 0
        %1457 = vmatpush1.bf16.xpose.msra.mxu0 0
        %1458 = vmatprep.subr.bf16.mxu0 0
        %1459 = vmatpush1.bf16.xpose.msra.mxu0 0
        %1460 = vmatprep.subr.bf16.mxu0 0
        %1461 = vmatpush1.bf16.xpose.msra.mxu0 0
        %1462 = vmatprep.subr.bf16.mxu0 0
        %1463 = vmatpush1.bf16.xpose.msra.mxu0 0
        %1464 = vmatprep.subr.bf16.mxu0 0
        %1465 = vmatpush1.bf16.xpose.msra.mxu0 0
        %1466 = vmatprep.subr.bf16.mxu0 0
        %1467 = vmatpush1.bf16.xpose.msra.mxu0 0
        %1468 = vmatprep.subr.bf16.mxu0 0
        %1469 = vmatpush1.bf16.xpose.msra.mxu0 0
        %1470 = vmatprep.subr.bf16.mxu0 0
        %1471 = vmatpush1.bf16.xpose.msra.mxu0 0
        %1472 = vmatprep.subr.bf16.mxu0 0
        %1473 = vmatpush1.bf16.xpose.msra.mxu0 0
        %1474 = vmatprep.subr.bf16.mxu0 0
        %1475 = vmatpush1.bf16.xpose.msra.mxu0 0
        %1476 = vmatprep.subr.bf16.mxu0 0
        %1477 = vmatpush1.bf16.xpose.msra.mxu0 0
        %1478 = vmatprep.subr.bf16.mxu0 0
        %1479 = vmatpush1.bf16.xpose.msra.mxu0 0
        %1480 = vmatprep.subr.bf16.mxu0 0
        %1481 = vmatpush1.bf16.xpose.msra.mxu0 0
        %1482 = vmatprep.mubr.bf16.mxu0 0
        %1483 = vmatmul.mubr.bf16.gmra.mrb[0].mxu0 %v1445
        %v1484 = vpop.f32.mrb[0].mxu0
        %v1485 = vadd.f32 %v1195, %v1484
        %v1486 = vpop.f32.mrb[0].mxu0
        %v1487 = vpop.f32.mrb[0].mxu0
        %v1488 = vpop.f32.mrb[0].mxu0
        %1489 = vdwg.mxu0
        %v1491 = vsel %vm1351, %v1343, 0
        %v1494 = vsel %vm1351, %v1350, 0
        %1496 = vmatprep.subr.bf16.mxu0 0
        %1497 = vmatpush1.bf16.xpose.msra.mxu0 %v1494
        %1498 = vmatprep.subr.bf16.mxu0 0
        %1499 = vmatpush1.bf16.xpose.msra.mxu0 0
        %1500 = vmatprep.subr.bf16.mxu0 0
        %1501 = vmatpush1.bf16.xpose.msra.mxu0 0
        %1502 = vmatprep.subr.bf16.mxu0 0
        %1503 = vmatpush1.bf16.xpose.msra.mxu0 0
        %1504 = vmatprep.subr.bf16.mxu0 0
        %1505 = vmatpush1.bf16.xpose.msra.mxu0 0
        %1506 = vmatprep.subr.bf16.mxu0 0
        %1507 = vmatpush1.bf16.xpose.msra.mxu0 0
        %1508 = vmatprep.subr.bf16.mxu0 0
        %1509 = vmatpush1.bf16.xpose.msra.mxu0 0
        %1510 = vmatprep.subr.bf16.mxu0 0
        %1511 = vmatpush1.bf16.xpose.msra.mxu0 0
        %1512 = vmatprep.subr.bf16.mxu0 0
        %1513 = vmatpush1.bf16.xpose.msra.mxu0 0
        %1514 = vmatprep.subr.bf16.mxu0 0
        %1515 = vmatpush1.bf16.xpose.msra.mxu0 0
        %1516 = vmatprep.subr.bf16.mxu0 0
        %1517 = vmatpush1.bf16.xpose.msra.mxu0 0
        %1518 = vmatprep.subr.bf16.mxu0 0
        %1519 = vmatpush1.bf16.xpose.msra.mxu0 0
        %1520 = vmatprep.subr.bf16.mxu0 0
        %1521 = vmatpush1.bf16.xpose.msra.mxu0 0
        %1522 = vmatprep.subr.bf16.mxu0 0
        %1523 = vmatpush1.bf16.xpose.msra.mxu0 0
        %1524 = vmatprep.subr.bf16.mxu0 0
        %1525 = vmatpush1.bf16.xpose.msra.mxu0 0
        %1526 = vmatprep.subr.bf16.mxu0 0
        %1527 = vmatpush1.bf16.xpose.msra.mxu0 0
        %1528 = vmatprep.mubr.bf16.mxu0 0
        %1529 = vmatmul.mubr.bf16.gmra.mrb[0].mxu0 %v1491
        %v1530 = vpop.f32.mrb[0].mxu0
        %v1531 = vadd.f32 %v1195, %v1530
        %v1532 = vpop.f32.mrb[0].mxu0
        %v1533 = vpop.f32.mrb[0].mxu0
        %v1534 = vpop.f32.mrb[0].mxu0
        %1535 = vdwg.mxu0
        %v1536 = vsel %vm1351, %v1393, -inf
        %1537 = vmax.xlane.f32.xlu0 %v1536
        %v1538 = vpop.xlane.xlu0 %1537
        %v1539 = vsel %vm1351, %v1439, -inf
        %1540 = vmax.xlane.f32.xlu0 %v1539
        %v1541 = vpop.xlane.xlu0 %1540
        %v1542 = vsel %vm1351, %v1485, -inf
        %1543 = vmax.xlane.f32.xlu0 %v1542
        %v1544 = vpop.xlane.xlu0 %1543
        %v1545 = vsel %vm1351, %v1531, -inf
        %1546 = vmax.xlane.f32.xlu0 %v1545
        %v1547 = vpop.xlane.xlu0 %1546
        %v1548 = vsub.f32 %v1393, %v1538
        %v1549 = vsub.f32 %v1439, %v1541
        %v1550 = vsub.f32 %v1485, %v1544
        %v1551 = vsub.f32 %v1531, %v1547
        %v1552 = vmul.f32 %v1548, 1.442695
        %v1553 = vpow.pop %v1552
        %v1554 = vmul.f32 %v1549, 1.442695
        %v1555 = vpow.pop %v1554
        %v1556 = vmul.f32 %v1550, 1.442695
        %v1557 = vpow.pop %v1556
        %v1558 = vmul.f32 %v1551, 1.442695
        %v1559 = vpow.pop %v1558
        %v1560 = vsel %vm1351, %v1553, 0.0
        %1561 = vadd.xlane.f32.xlu0 %v1560
        %v1562 = vpop.xlane.xlu0 %1561
        %v1563 = vsel %vm1351, %v1555, 0.0
        %1564 = vadd.xlane.f32.xlu0 %v1563
        %v1565 = vpop.xlane.xlu0 %1564
        %v1566 = vsel %vm1351, %v1557, 0.0
        %1567 = vadd.xlane.f32.xlu0 %v1566
        %v1568 = vpop.xlane.xlu0 %1567
        %v1569 = vsel %vm1351, %v1559, 0.0
        %1570 = vadd.xlane.f32.xlu0 %v1569
        %v1571 = vpop.xlane.xlu0 %1570
        %v1572 = vrcp.pop %v1562
        %v1573 = vrcp.pop %v1565
        %v1574 = vrcp.pop %v1568
        %v1575 = vrcp.pop %v1571
        %v1576 = vmul.f32 %v1553, %v1572
        %v1577 = vmul.f32 %v1555, %v1573
        %v1578 = vmul.f32 %v1557, %v1574
        %v1579 = vmul.f32 %v1559, %v1575
        %v1580 = vpack.c.bf16 %v1576, %v1576
        %v1581 = vpack.c.bf16 %v1577, %v1577
        %v1582 = vpack.c.bf16 %v1578, %v1578
        %v1583 = vpack.c.bf16 %v1579, %v1579
        %1584 = vrot.lane.b32.xlu0 %v1336, 96
        %v1585 = vpop.permute.xlu0 %1584
        %v1587 = vsel %vm1351, %v1580, 0
        %vm1589 = vcmask 1043456
        %v1591 = vsel %vm1589, %v1585, 0
        %1593 = vmatprep.subr.bf16.mxu0 0
        %1594 = vmatpush1.bf16.msra.mxu0 %v1591
        %1595 = vmatprep.subr.bf16.mxu0 0
        %1596 = vmatpush1.bf16.msra.mxu0 0
        %1597 = vmatprep.subr.bf16.mxu0 0
        %1598 = vmatpush1.bf16.msra.mxu0 0
        %1599 = vmatprep.subr.bf16.mxu0 0
        %1600 = vmatpush1.bf16.msra.mxu0 0
        %1601 = vmatprep.subr.bf16.mxu0 0
        %1602 = vmatpush1.bf16.msra.mxu0 0
        %1603 = vmatprep.subr.bf16.mxu0 0
        %1604 = vmatpush1.bf16.msra.mxu0 0
        %1605 = vmatprep.subr.bf16.mxu0 0
        %1606 = vmatpush1.bf16.msra.mxu0 0
        %1607 = vmatprep.subr.bf16.mxu0 0
        %1608 = vmatpush1.bf16.msra.mxu0 0
        %1609 = vmatprep.subr.bf16.mxu0 0
        %1610 = vmatpush1.bf16.msra.mxu0 0
        %1611 = vmatprep.subr.bf16.mxu0 0
        %1612 = vmatpush1.bf16.msra.mxu0 0
        %1613 = vmatprep.subr.bf16.mxu0 0
        %1614 = vmatpush1.bf16.msra.mxu0 0
        %1615 = vmatprep.subr.bf16.mxu0 0
        %1616 = vmatpush1.bf16.msra.mxu0 0
        %1617 = vmatprep.subr.bf16.mxu0 0
        %1618 = vmatpush1.bf16.msra.mxu0 0
        %1619 = vmatprep.subr.bf16.mxu0 0
        %1620 = vmatpush1.bf16.msra.mxu0 0
        %1621 = vmatprep.subr.bf16.mxu0 0
        %1622 = vmatpush1.bf16.msra.mxu0 0
        %1623 = vmatprep.subr.bf16.mxu0 0
        %1624 = vmatpush1.bf16.msra.mxu0 0
        %1625 = vmatprep.mubr.bf16.mxu0 0
        %1626 = vmatmul.mubr.bf16.gmra.mrb[0].mxu0 %v1587
        %v1627 = vpop.f32.mrb[0].mxu0
        %v1628 = vadd.f32 0.0, %v1627
        %v1629 = vpop.f32.mrb[0].mxu0
        %v1630 = vpop.f32.mrb[0].mxu0
        %v1631 = vpop.f32.mrb[0].mxu0
        %1632 = vdwg.mxu0
        %1633 = vrot.lane.b32.xlu0 %v1346, 96
        %v1634 = vpop.permute.xlu0 %1633
        %v1636 = vsel %vm1351, %v1581, 0
        %v1639 = vsel %vm1589, %v1634, 0
        %1641 = vmatprep.subr.bf16.mxu0 0
        %1642 = vmatpush1.bf16.msra.mxu0 %v1639
        %1643 = vmatprep.subr.bf16.mxu0 0
        %1644 = vmatpush1.bf16.msra.mxu0 0
        %1645 = vmatprep.subr.bf16.mxu0 0
        %1646 = vmatpush1.bf16.msra.mxu0 0
        %1647 = vmatprep.subr.bf16.mxu0 0
        %1648 = vmatpush1.bf16.msra.mxu0 0
        %1649 = vmatprep.subr.bf16.mxu0 0
        %1650 = vmatpush1.bf16.msra.mxu0 0
        %1651 = vmatprep.subr.bf16.mxu0 0
        %1652 = vmatpush1.bf16.msra.mxu0 0
        %1653 = vmatprep.subr.bf16.mxu0 0
        %1654 = vmatpush1.bf16.msra.mxu0 0
        %1655 = vmatprep.subr.bf16.mxu0 0
        %1656 = vmatpush1.bf16.msra.mxu0 0
        %1657 = vmatprep.subr.bf16.mxu0 0
        %1658 = vmatpush1.bf16.msra.mxu0 0
        %1659 = vmatprep.subr.bf16.mxu0 0
        %1660 = vmatpush1.bf16.msra.mxu0 0
        %1661 = vmatprep.subr.bf16.mxu0 0
        %1662 = vmatpush1.bf16.msra.mxu0 0
        %1663 = vmatprep.subr.bf16.mxu0 0
        %1664 = vmatpush1.bf16.msra.mxu0 0
        %1665 = vmatprep.subr.bf16.mxu0 0
        %1666 = vmatpush1.bf16.msra.mxu0 0
        %1667 = vmatprep.subr.bf16.mxu0 0
        %1668 = vmatpush1.bf16.msra.mxu0 0
        %1669 = vmatprep.subr.bf16.mxu0 0
        %1670 = vmatpush1.bf16.msra.mxu0 0
        %1671 = vmatprep.subr.bf16.mxu0 0
        %1672 = vmatpush1.bf16.msra.mxu0 0
        %1673 = vmatprep.mubr.bf16.mxu0 0
        %1674 = vmatmul.mubr.bf16.gmra.mrb[0].mxu0 %v1636
        %v1675 = vpop.f32.mrb[0].mxu0
        %v1676 = vadd.f32 0.0, %v1675
        %v1677 = vpop.f32.mrb[0].mxu0
        %v1678 = vpop.f32.mrb[0].mxu0
        %v1679 = vpop.f32.mrb[0].mxu0
        %1680 = vdwg.mxu0
        %1681 = vrot.lane.b32.xlu0 %v1348, 96
        %v1682 = vpop.permute.xlu0 %1681
        %v1684 = vsel %vm1351, %v1582, 0
        %v1687 = vsel %vm1589, %v1682, 0
        %1689 = vmatprep.subr.bf16.mxu0 0
        %1690 = vmatpush1.bf16.msra.mxu0 %v1687
        %1691 = vmatprep.subr.bf16.mxu0 0
        %1692 = vmatpush1.bf16.msra.mxu0 0
        %1693 = vmatprep.subr.bf16.mxu0 0
        %1694 = vmatpush1.bf16.msra.mxu0 0
        %1695 = vmatprep.subr.bf16.mxu0 0
        %1696 = vmatpush1.bf16.msra.mxu0 0
        %1697 = vmatprep.subr.bf16.mxu0 0
        %1698 = vmatpush1.bf16.msra.mxu0 0
        %1699 = vmatprep.subr.bf16.mxu0 0
        %1700 = vmatpush1.bf16.msra.mxu0 0
        %1701 = vmatprep.subr.bf16.mxu0 0
        %1702 = vmatpush1.bf16.msra.mxu0 0
        %1703 = vmatprep.subr.bf16.mxu0 0
        %1704 = vmatpush1.bf16.msra.mxu0 0
        %1705 = vmatprep.subr.bf16.mxu0 0
        %1706 = vmatpush1.bf16.msra.mxu0 0
        %1707 = vmatprep.subr.bf16.mxu0 0
        %1708 = vmatpush1.bf16.msra.mxu0 0
        %1709 = vmatprep.subr.bf16.mxu0 0
        %1710 = vmatpush1.bf16.msra.mxu0 0
        %1711 = vmatprep.subr.bf16.mxu0 0
        %1712 = vmatpush1.bf16.msra.mxu0 0
        %1713 = vmatprep.subr.bf16.mxu0 0
        %1714 = vmatpush1.bf16.msra.mxu0 0
        %1715 = vmatprep.subr.bf16.mxu0 0
        %1716 = vmatpush1.bf16.msra.mxu0 0
        %1717 = vmatprep.subr.bf16.mxu0 0
        %1718 = vmatpush1.bf16.msra.mxu0 0
        %1719 = vmatprep.subr.bf16.mxu0 0
        %1720 = vmatpush1.bf16.msra.mxu0 0
        %1721 = vmatprep.mubr.bf16.mxu0 0
        %1722 = vmatmul.mubr.bf16.gmra.mrb[0].mxu0 %v1684
        %v1723 = vpop.f32.mrb[0].mxu0
        %v1724 = vadd.f32 0.0, %v1723
        %v1725 = vpop.f32.mrb[0].mxu0
        %v1726 = vpop.f32.mrb[0].mxu0
        %v1727 = vpop.f32.mrb[0].mxu0
        %1728 = vdwg.mxu0
        %1729 = vrot.lane.b32.xlu0 %v1350, 96
        %v1730 = vpop.permute.xlu0 %1729
        %v1732 = vsel %vm1351, %v1583, 0
        %v1735 = vsel %vm1589, %v1730, 0
        %1737 = vmatprep.subr.bf16.mxu0 0
        %1738 = vmatpush1.bf16.msra.mxu0 %v1735
        %1739 = vmatprep.subr.bf16.mxu0 0
        %1740 = vmatpush1.bf16.msra.mxu0 0
        %1741 = vmatprep.subr.bf16.mxu0 0
        %1742 = vmatpush1.bf16.msra.mxu0 0
        %1743 = vmatprep.subr.bf16.mxu0 0
        %1744 = vmatpush1.bf16.msra.mxu0 0
        %1745 = vmatprep.subr.bf16.mxu0 0
        %1746 = vmatpush1.bf16.msra.mxu0 0
        %1747 = vmatprep.subr.bf16.mxu0 0
        %1748 = vmatpush1.bf16.msra.mxu0 0
        %1749 = vmatprep.subr.bf16.mxu0 0
        %1750 = vmatpush1.bf16.msra.mxu0 0
        %1751 = vmatprep.subr.bf16.mxu0 0
        %1752 = vmatpush1.bf16.msra.mxu0 0
        %1753 = vmatprep.subr.bf16.mxu0 0
        %1754 = vmatpush1.bf16.msra.mxu0 0
        %1755 = vmatprep.subr.bf16.mxu0 0
        %1756 = vmatpush1.bf16.msra.mxu0 0
        %1757 = vmatprep.subr.bf16.mxu0 0
        %1758 = vmatpush1.bf16.msra.mxu0 0
        %1759 = vmatprep.subr.bf16.mxu0 0
        %1760 = vmatpush1.bf16.msra.mxu0 0
        %1761 = vmatprep.subr.bf16.mxu0 0
        %1762 = vmatpush1.bf16.msra.mxu0 0
        %1763 = vmatprep.subr.bf16.mxu0 0
        %1764 = vmatpush1.bf16.msra.mxu0 0
        %1765 = vmatprep.subr.bf16.mxu0 0
        %1766 = vmatpush1.bf16.msra.mxu0 0
        %1767 = vmatprep.subr.bf16.mxu0 0
        %1768 = vmatpush1.bf16.msra.mxu0 0
        %1769 = vmatprep.mubr.bf16.mxu0 0
        %1770 = vmatmul.mubr.bf16.gmra.mrb[0].mxu0 %v1732
        %v1771 = vpop.f32.mrb[0].mxu0
        %v1772 = vadd.f32 0.0, %v1771
        %v1773 = vpop.f32.mrb[0].mxu0
        %v1774 = vpop.f32.mrb[0].mxu0
        %v1775 = vpop.f32.mrb[0].mxu0
        %1776 = vdwg.mxu0
        %1778 = vrot.lane.b32.xlu0 %v1676, 8
        %v1779 = vpop.permute.xlu0 %1778
        %1782 = vrot.lane.b32.xlu0 %v1724, 16
        %v1783 = vpop.permute.xlu0 %1782
        %1786 = vrot.lane.b32.xlu0 %v1772, 24
        %v1787 = vpop.permute.xlu0 %1786
        %v1789 = vsel %vm1351, %v1628, %v1779
        %vm1790 = vcmask 130048
        %v1791 = vsel %vm1790, %v1789, %v1783
        %vm1792 = vcmask 195584
        %v1793 = vsel %vm1792, %v1791, %v1787
        %v1794 = vpack.c.bf16 %v1793, %v1793
        %v1796 = vlaneseq
        %v1797 = vshrl.u32 %v1796, 7
        %v1798 = vsub.s32 0, %v1797
        %v1799 = vrot.slane %v1212, %v1798
        %v1805 = vunpack.c.l.b16 %v1208
        %v1806 = vunpack.c.l.b16 %v1209
        %v1807 = vunpack.c.l.b16 %v1210
        %v1808 = vunpack.c.l.b16 %v1211
        %v1809 = vpack.c.b16 %v1806, %v1805
        %v1810 = vpack.c.b16 %v1808, %v1807
        %v1814 = vsel %vm1233, %v1794, 0
        %1816 = vmatprep.subr.bf16.mxu0 0
        %1817 = vmatpush1.bf16.msra.mxu0 %v1809
        %1818 = vmatprep.subr.bf16.mxu0 0
        %1819 = vmatpush1.bf16.msra.mxu0 %v1810
        %1820 = vmatprep.subr.bf16.mxu0 0
        %1821 = vmatpush1.bf16.msra.mxu0 0
        %1822 = vmatprep.subr.bf16.mxu0 0
        %1823 = vmatpush1.bf16.msra.mxu0 0
        %1824 = vmatprep.subr.bf16.mxu0 0
        %1825 = vmatpush1.bf16.msra.mxu0 0
        %1826 = vmatprep.subr.bf16.mxu0 0
        %1827 = vmatpush1.bf16.msra.mxu0 0
        %1828 = vmatprep.subr.bf16.mxu0 0
        %1829 = vmatpush1.bf16.msra.mxu0 0
        %1830 = vmatprep.subr.bf16.mxu0 0
        %1831 = vmatpush1.bf16.msra.mxu0 0
        %1832 = vmatprep.subr.bf16.mxu0 0
        %1833 = vmatpush1.bf16.msra.mxu0 0
        %1834 = vmatprep.subr.bf16.mxu0 0
        %1835 = vmatpush1.bf16.msra.mxu0 0
        %1836 = vmatprep.subr.bf16.mxu0 0
        %1837 = vmatpush1.bf16.msra.mxu0 0
        %1838 = vmatprep.subr.bf16.mxu0 0
        %1839 = vmatpush1.bf16.msra.mxu0 0
        %1840 = vmatprep.subr.bf16.mxu0 0
        %1841 = vmatpush1.bf16.msra.mxu0 0
        %1842 = vmatprep.subr.bf16.mxu0 0
        %1843 = vmatpush1.bf16.msra.mxu0 0
        %1844 = vmatprep.subr.bf16.mxu0 0
        %1845 = vmatpush1.bf16.msra.mxu0 0
        %1846 = vmatprep.subr.bf16.mxu0 0
        %1847 = vmatpush1.bf16.msra.mxu0 0
        %1848 = vmatprep.mubr.bf16.mxu0 0
        %1849 = vmatmul.mubr.bf16.gmra.mrb[0].mxu0 %v1814
        %v1850 = vpop.f32.mrb[0].mxu0
        %v1851 = vadd.f32 %v1799, %v1850
        %v1852 = vpop.f32.mrb[0].mxu0
        %v1853 = vpop.f32.mrb[0].mxu0
        %v1854 = vpop.f32.mrb[0].mxu0
        %1855 = vdwg.mxu0
        %v1856 = vadd.f32 %v1851, %v1194
        %v1857 = vsel %vm1233, %v1856, 0.0
        %1858 = vadd.xlane.f32.xlu0 %v1857
        %v1859 = vpop.xlane.xlu0 %1858
        %v1860 = vrcp.pop 32.0
        %v1861 = vmul.f32 %v1859, %v1860
        %v1862 = vsub.f32 %v1856, %v1861
        %v1863 = vmul.f32 %v1862, %v1862
        %v1864 = vsel %vm1233, %v1863, 0.0
        %1865 = vadd.xlane.f32.xlu0 %v1864
        %v1866 = vpop.xlane.xlu0 %1865
        %v1867 = vmul.f32 %v1866, %v1860
        %v1868 = vadd.f32 %v1867, 1e-06
        %v1869 = vrsqrt.pop %v1868
        %v1870 = vmul.f32 %v1862, %v1869
        %v1872 = vlaneseq
        %v1873 = vshrl.u32 %v1872, 7
        %v1874 = vsub.s32 0, %v1873
        %v1875 = vrot.slane %v1213, %v1874
        %v1877 = vmul.f32 %v1870, %v1875
        %v1879 = vlaneseq
        %v1880 = vshrl.u32 %v1879, 7
        %v1881 = vsub.s32 0, %v1880
        %v1882 = vrot.slane %v1214, %v1881
        %v1884 = vadd.f32 %v1877, %v1882
        %v1885 = vld [vmem:[%s1100] sm:$0xff]
        %v1886 = vpack.c.bf16 %v1885, %v1885
        %v1887 = vpack.c.bf16 %v1884, %v1884
        %v1888 = vld [vmem:[%s1138] sm:$0xf]
        %v1889 = vld [vmem:[%s1138 + $0x4] sm:$0xf]
        %v1890 = vld [vmem:[%s1138 + $0x8] sm:$0xf]
        %v1891 = vld [vmem:[%s1138 + $0xc] sm:$0xf]
        %v1892 = vld [vmem:[%s1141] sm:$0x1]
        %v1893 = vld [vmem:[%s1146] sm:$0xf]
        %v1894 = vld [vmem:[%s1146 + $0x4] sm:$0xf]
        %v1895 = vld [vmem:[%s1146 + $0x8] sm:$0xf]
        %v1896 = vld [vmem:[%s1146 + $0xc] sm:$0xf]
        %v1897 = vld [vmem:[%s1149] sm:$0x1]
        %v1898 = vld [vmem:[%s1154] sm:$0xf]
        %v1899 = vld [vmem:[%s1154 + $0x4] sm:$0xf]
        %v1900 = vld [vmem:[%s1154 + $0x8] sm:$0xf]
        %v1901 = vld [vmem:[%s1154 + $0xc] sm:$0xf]
        %v1902 = vld [vmem:[%s1157] sm:$0x1]
        %v1903 = vld [vmem:[%s1160] sm:$0x1]
        %v1904 = vld [vmem:[%s1163] sm:$0x1]
        %v1906 = vlaneseq
        %v1907 = vshrl.u32 %v1906, 7
        %v1908 = vsub.s32 0, %v1907
        %v1909 = vrot.slane %v1892, %v1908
        %v1915 = vunpack.c.l.b16 %v1888
        %v1916 = vunpack.c.l.b16 %v1889
        %v1917 = vunpack.c.l.b16 %v1890
        %v1918 = vunpack.c.l.b16 %v1891
        %v1919 = vpack.c.b16 %v1916, %v1915
        %v1920 = vpack.c.b16 %v1918, %v1917
        %v1924 = vsel %vm1233, %v1887, 0
        %1926 = vmatprep.subr.bf16.mxu0 0
        %1927 = vmatpush1.bf16.msra.mxu0 %v1919
        %1928 = vmatprep.subr.bf16.mxu0 0
        %1929 = vmatpush1.bf16.msra.mxu0 %v1920
        %1930 = vmatprep.subr.bf16.mxu0 0
        %1931 = vmatpush1.bf16.msra.mxu0 0
        %1932 = vmatprep.subr.bf16.mxu0 0
        %1933 = vmatpush1.bf16.msra.mxu0 0
        %1934 = vmatprep.subr.bf16.mxu0 0
        %1935 = vmatpush1.bf16.msra.mxu0 0
        %1936 = vmatprep.subr.bf16.mxu0 0
        %1937 = vmatpush1.bf16.msra.mxu0 0
        %1938 = vmatprep.subr.bf16.mxu0 0
        %1939 = vmatpush1.bf16.msra.mxu0 0
        %1940 = vmatprep.subr.bf16.mxu0 0
        %1941 = vmatpush1.bf16.msra.mxu0 0
        %1942 = vmatprep.subr.bf16.mxu0 0
        %1943 = vmatpush1.bf16.msra.mxu0 0
        %1944 = vmatprep.subr.bf16.mxu0 0
        %1945 = vmatpush1.bf16.msra.mxu0 0
        %1946 = vmatprep.subr.bf16.mxu0 0
        %1947 = vmatpush1.bf16.msra.mxu0 0
        %1948 = vmatprep.subr.bf16.mxu0 0
        %1949 = vmatpush1.bf16.msra.mxu0 0
        %1950 = vmatprep.subr.bf16.mxu0 0
        %1951 = vmatpush1.bf16.msra.mxu0 0
        %1952 = vmatprep.subr.bf16.mxu0 0
        %1953 = vmatpush1.bf16.msra.mxu0 0
        %1954 = vmatprep.subr.bf16.mxu0 0
        %1955 = vmatpush1.bf16.msra.mxu0 0
        %1956 = vmatprep.subr.bf16.mxu0 0
        %1957 = vmatpush1.bf16.msra.mxu0 0
        %1958 = vmatprep.mubr.bf16.mxu0 0
        %1959 = vmatmul.mubr.bf16.gmra.mrb[0].mxu0 %v1924
        %v1960 = vpop.f32.mrb[0].mxu0
        %v1961 = vadd.f32 %v1909, %v1960
        %v1962 = vpop.f32.mrb[0].mxu0
        %v1963 = vpop.f32.mrb[0].mxu0
        %v1964 = vpop.f32.mrb[0].mxu0
        %1965 = vdwg.mxu0
        %v1967 = vlaneseq
        %v1968 = vshrl.u32 %v1967, 7
        %v1969 = vsub.s32 0, %v1968
        %v1970 = vrot.slane %v1897, %v1969
        %v1976 = vunpack.c.l.b16 %v1893
        %v1977 = vunpack.c.l.b16 %v1894
        %v1978 = vunpack.c.l.b16 %v1895
        %v1979 = vunpack.c.l.b16 %v1896
        %v1980 = vpack.c.b16 %v1977, %v1976
        %v1981 = vpack.c.b16 %v1979, %v1978
        %v1985 = vsel %vm1233, %v1886, 0
        %1987 = vmatprep.subr.bf16.mxu0 0
        %1988 = vmatpush1.bf16.msra.mxu0 %v1980
        %1989 = vmatprep.subr.bf16.mxu0 0
        %1990 = vmatpush1.bf16.msra.mxu0 %v1981
        %1991 = vmatprep.subr.bf16.mxu0 0
        %1992 = vmatpush1.bf16.msra.mxu0 0
        %1993 = vmatprep.subr.bf16.mxu0 0
        %1994 = vmatpush1.bf16.msra.mxu0 0
        %1995 = vmatprep.subr.bf16.mxu0 0
        %1996 = vmatpush1.bf16.msra.mxu0 0
        %1997 = vmatprep.subr.bf16.mxu0 0
        %1998 = vmatpush1.bf16.msra.mxu0 0
        %1999 = vmatprep.subr.bf16.mxu0 0
        %2000 = vmatpush1.bf16.msra.mxu0 0
        %2001 = vmatprep.subr.bf16.mxu0 0
        %2002 = vmatpush1.bf16.msra.mxu0 0
        %2003 = vmatprep.subr.bf16.mxu0 0
        %2004 = vmatpush1.bf16.msra.mxu0 0
        %2005 = vmatprep.subr.bf16.mxu0 0
        %2006 = vmatpush1.bf16.msra.mxu0 0
        %2007 = vmatprep.subr.bf16.mxu0 0
        %2008 = vmatpush1.bf16.msra.mxu0 0
        %2009 = vmatprep.subr.bf16.mxu0 0
        %2010 = vmatpush1.bf16.msra.mxu0 0
        %2011 = vmatprep.subr.bf16.mxu0 0
        %2012 = vmatpush1.bf16.msra.mxu0 0
        %2013 = vmatprep.subr.bf16.mxu0 0
        %2014 = vmatpush1.bf16.msra.mxu0 0
        %2015 = vmatprep.subr.bf16.mxu0 0
        %2016 = vmatpush1.bf16.msra.mxu0 0
        %2017 = vmatprep.subr.bf16.mxu0 0
        %2018 = vmatpush1.bf16.msra.mxu0 0
        %2019 = vmatprep.mubr.bf16.mxu0 0
        %2020 = vmatmul.mubr.bf16.gmra.mrb[0].mxu0 %v1985
        %v2021 = vpop.f32.mrb[0].mxu0
        %v2022 = vadd.f32 %v1970, %v2021
        %v2023 = vpop.f32.mrb[0].mxu0
        %v2024 = vpop.f32.mrb[0].mxu0
        %v2025 = vpop.f32.mrb[0].mxu0
        %2026 = vdwg.mxu0
        %v2027 = vpack.c.bf16 %v1961, %v1961
        %v2028 = vpack.c.bf16 %v2022, %v2022
        %2030 = vrot.lane.b32.xlu0 %v2027, 120
        %v2031 = vpop.permute.xlu0 %2030
        %2032 = vrot.lane.b32.xlu0 %v2027, 112
        %v2033 = vpop.permute.xlu0 %2032
        %2034 = vrot.lane.b32.xlu0 %v2027, 104
        %v2035 = vpop.permute.xlu0 %2034
        %2037 = vrot.lane.b32.xlu0 %v2028, 120
        %v2038 = vpop.permute.xlu0 %2037
        %2039 = vrot.lane.b32.xlu0 %v2028, 112
        %v2040 = vpop.permute.xlu0 %2039
        %2041 = vrot.lane.b32.xlu0 %v2028, 104
        %v2042 = vpop.permute.xlu0 %2041
        %v2044 = vlaneseq
        %v2045 = vshrl.u32 %v2044, 7
        %v2046 = vsub.s32 0, %v2045
        %v2047 = vrot.slane %v1196, %v2046
        %v2050 = vsel %vm1351, %v2027, 0
        %v2053 = vsel %vm1351, %v2028, 0
        %2055 = vmatprep.subr.bf16.mxu0 0
        %2056 = vmatpush1.bf16.xpose.msra.mxu0 %v2053
        %2057 = vmatprep.subr.bf16.mxu0 0
        %2058 = vmatpush1.bf16.xpose.msra.mxu0 0
        %2059 = vmatprep.subr.bf16.mxu0 0
        %2060 = vmatpush1.bf16.xpose.msra.mxu0 0
        %2061 = vmatprep.subr.bf16.mxu0 0
        %2062 = vmatpush1.bf16.xpose.msra.mxu0 0
        %2063 = vmatprep.subr.bf16.mxu0 0
        %2064 = vmatpush1.bf16.xpose.msra.mxu0 0
        %2065 = vmatprep.subr.bf16.mxu0 0
        %2066 = vmatpush1.bf16.xpose.msra.mxu0 0
        %2067 = vmatprep.subr.bf16.mxu0 0
        %2068 = vmatpush1.bf16.xpose.msra.mxu0 0
        %2069 = vmatprep.subr.bf16.mxu0 0
        %2070 = vmatpush1.bf16.xpose.msra.mxu0 0
        %2071 = vmatprep.subr.bf16.mxu0 0
        %2072 = vmatpush1.bf16.xpose.msra.mxu0 0
        %2073 = vmatprep.subr.bf16.mxu0 0
        %2074 = vmatpush1.bf16.xpose.msra.mxu0 0
        %2075 = vmatprep.subr.bf16.mxu0 0
        %2076 = vmatpush1.bf16.xpose.msra.mxu0 0
        %2077 = vmatprep.subr.bf16.mxu0 0
        %2078 = vmatpush1.bf16.xpose.msra.mxu0 0
        %2079 = vmatprep.subr.bf16.mxu0 0
        %2080 = vmatpush1.bf16.xpose.msra.mxu0 0
        %2081 = vmatprep.subr.bf16.mxu0 0
        %2082 = vmatpush1.bf16.xpose.msra.mxu0 0
        %2083 = vmatprep.subr.bf16.mxu0 0
        %2084 = vmatpush1.bf16.xpose.msra.mxu0 0
        %2085 = vmatprep.subr.bf16.mxu0 0
        %2086 = vmatpush1.bf16.xpose.msra.mxu0 0
        %2087 = vmatprep.mubr.bf16.mxu0 0
        %2088 = vmatmul.mubr.bf16.gmra.mrb[0].mxu0 %v2050
        %v2089 = vpop.f32.mrb[0].mxu0
        %v2090 = vadd.f32 %v2047, %v2089
        %v2091 = vpop.f32.mrb[0].mxu0
        %v2092 = vpop.f32.mrb[0].mxu0
        %v2093 = vpop.f32.mrb[0].mxu0
        %2094 = vdwg.mxu0
        %v2096 = vsel %vm1351, %v2031, 0
        %v2099 = vsel %vm1351, %v2038, 0
        %2101 = vmatprep.subr.bf16.mxu0 0
        %2102 = vmatpush1.bf16.xpose.msra.mxu0 %v2099
        %2103 = vmatprep.subr.bf16.mxu0 0
        %2104 = vmatpush1.bf16.xpose.msra.mxu0 0
        %2105 = vmatprep.subr.bf16.mxu0 0
        %2106 = vmatpush1.bf16.xpose.msra.mxu0 0
        %2107 = vmatprep.subr.bf16.mxu0 0
        %2108 = vmatpush1.bf16.xpose.msra.mxu0 0
        %2109 = vmatprep.subr.bf16.mxu0 0
        %2110 = vmatpush1.bf16.xpose.msra.mxu0 0
        %2111 = vmatprep.subr.bf16.mxu0 0
        %2112 = vmatpush1.bf16.xpose.msra.mxu0 0
        %2113 = vmatprep.subr.bf16.mxu0 0
        %2114 = vmatpush1.bf16.xpose.msra.mxu0 0
        %2115 = vmatprep.subr.bf16.mxu0 0
        %2116 = vmatpush1.bf16.xpose.msra.mxu0 0
        %2117 = vmatprep.subr.bf16.mxu0 0
        %2118 = vmatpush1.bf16.xpose.msra.mxu0 0
        %2119 = vmatprep.subr.bf16.mxu0 0
        %2120 = vmatpush1.bf16.xpose.msra.mxu0 0
        %2121 = vmatprep.subr.bf16.mxu0 0
        %2122 = vmatpush1.bf16.xpose.msra.mxu0 0
        %2123 = vmatprep.subr.bf16.mxu0 0
        %2124 = vmatpush1.bf16.xpose.msra.mxu0 0
        %2125 = vmatprep.subr.bf16.mxu0 0
        %2126 = vmatpush1.bf16.xpose.msra.mxu0 0
        %2127 = vmatprep.subr.bf16.mxu0 0
        %2128 = vmatpush1.bf16.xpose.msra.mxu0 0
        %2129 = vmatprep.subr.bf16.mxu0 0
        %2130 = vmatpush1.bf16.xpose.msra.mxu0 0
        %2131 = vmatprep.subr.bf16.mxu0 0
        %2132 = vmatpush1.bf16.xpose.msra.mxu0 0
        %2133 = vmatprep.mubr.bf16.mxu0 0
        %2134 = vmatmul.mubr.bf16.gmra.mrb[0].mxu0 %v2096
        %v2135 = vpop.f32.mrb[0].mxu0
        %v2136 = vadd.f32 %v2047, %v2135
        %v2137 = vpop.f32.mrb[0].mxu0
        %v2138 = vpop.f32.mrb[0].mxu0
        %v2139 = vpop.f32.mrb[0].mxu0
        %2140 = vdwg.mxu0
        %v2142 = vsel %vm1351, %v2033, 0
        %v2145 = vsel %vm1351, %v2040, 0
        %2147 = vmatprep.subr.bf16.mxu0 0
        %2148 = vmatpush1.bf16.xpose.msra.mxu0 %v2145
        %2149 = vmatprep.subr.bf16.mxu0 0
        %2150 = vmatpush1.bf16.xpose.msra.mxu0 0
        %2151 = vmatprep.subr.bf16.mxu0 0
        %2152 = vmatpush1.bf16.xpose.msra.mxu0 0
        %2153 = vmatprep.subr.bf16.mxu0 0
        %2154 = vmatpush1.bf16.xpose.msra.mxu0 0
        %2155 = vmatprep.subr.bf16.mxu0 0
        %2156 = vmatpush1.bf16.xpose.msra.mxu0 0
        %2157 = vmatprep.subr.bf16.mxu0 0
        %2158 = vmatpush1.bf16.xpose.msra.mxu0 0
        %2159 = vmatprep.subr.bf16.mxu0 0
        %2160 = vmatpush1.bf16.xpose.msra.mxu0 0
        %2161 = vmatprep.subr.bf16.mxu0 0
        %2162 = vmatpush1.bf16.xpose.msra.mxu0 0
        %2163 = vmatprep.subr.bf16.mxu0 0
        %2164 = vmatpush1.bf16.xpose.msra.mxu0 0
        %2165 = vmatprep.subr.bf16.mxu0 0
        %2166 = vmatpush1.bf16.xpose.msra.mxu0 0
        %2167 = vmatprep.subr.bf16.mxu0 0
        %2168 = vmatpush1.bf16.xpose.msra.mxu0 0
        %2169 = vmatprep.subr.bf16.mxu0 0
        %2170 = vmatpush1.bf16.xpose.msra.mxu0 0
        %2171 = vmatprep.subr.bf16.mxu0 0
        %2172 = vmatpush1.bf16.xpose.msra.mxu0 0
        %2173 = vmatprep.subr.bf16.mxu0 0
        %2174 = vmatpush1.bf16.xpose.msra.mxu0 0
        %2175 = vmatprep.subr.bf16.mxu0 0
        %2176 = vmatpush1.bf16.xpose.msra.mxu0 0
        %2177 = vmatprep.subr.bf16.mxu0 0
        %2178 = vmatpush1.bf16.xpose.msra.mxu0 0
        %2179 = vmatprep.mubr.bf16.mxu0 0
        %2180 = vmatmul.mubr.bf16.gmra.mrb[0].mxu0 %v2142
        %v2181 = vpop.f32.mrb[0].mxu0
        %v2182 = vadd.f32 %v2047, %v2181
        %v2183 = vpop.f32.mrb[0].mxu0
        %v2184 = vpop.f32.mrb[0].mxu0
        %v2185 = vpop.f32.mrb[0].mxu0
        %2186 = vdwg.mxu0
        %v2188 = vsel %vm1351, %v2035, 0
        %v2191 = vsel %vm1351, %v2042, 0
        %2193 = vmatprep.subr.bf16.mxu0 0
        %2194 = vmatpush1.bf16.xpose.msra.mxu0 %v2191
        %2195 = vmatprep.subr.bf16.mxu0 0
        %2196 = vmatpush1.bf16.xpose.msra.mxu0 0
        %2197 = vmatprep.subr.bf16.mxu0 0
        %2198 = vmatpush1.bf16.xpose.msra.mxu0 0
        %2199 = vmatprep.subr.bf16.mxu0 0
        %2200 = vmatpush1.bf16.xpose.msra.mxu0 0
        %2201 = vmatprep.subr.bf16.mxu0 0
        %2202 = vmatpush1.bf16.xpose.msra.mxu0 0
        %2203 = vmatprep.subr.bf16.mxu0 0
        %2204 = vmatpush1.bf16.xpose.msra.mxu0 0
        %2205 = vmatprep.subr.bf16.mxu0 0
        %2206 = vmatpush1.bf16.xpose.msra.mxu0 0
        %2207 = vmatprep.subr.bf16.mxu0 0
        %2208 = vmatpush1.bf16.xpose.msra.mxu0 0
        %2209 = vmatprep.subr.bf16.mxu0 0
        %2210 = vmatpush1.bf16.xpose.msra.mxu0 0
        %2211 = vmatprep.subr.bf16.mxu0 0
        %2212 = vmatpush1.bf16.xpose.msra.mxu0 0
        %2213 = vmatprep.subr.bf16.mxu0 0
        %2214 = vmatpush1.bf16.xpose.msra.mxu0 0
        %2215 = vmatprep.subr.bf16.mxu0 0
        %2216 = vmatpush1.bf16.xpose.msra.mxu0 0
        %2217 = vmatprep.subr.bf16.mxu0 0
        %2218 = vmatpush1.bf16.xpose.msra.mxu0 0
        %2219 = vmatprep.subr.bf16.mxu0 0
        %2220 = vmatpush1.bf16.xpose.msra.mxu0 0
        %2221 = vmatprep.subr.bf16.mxu0 0
        %2222 = vmatpush1.bf16.xpose.msra.mxu0 0
        %2223 = vmatprep.subr.bf16.mxu0 0
        %2224 = vmatpush1.bf16.xpose.msra.mxu0 0
        %2225 = vmatprep.mubr.bf16.mxu0 0
        %2226 = vmatmul.mubr.bf16.gmra.mrb[0].mxu0 %v2188
        %v2227 = vpop.f32.mrb[0].mxu0
        %v2228 = vadd.f32 %v2047, %v2227
        %v2229 = vpop.f32.mrb[0].mxu0
        %v2230 = vpop.f32.mrb[0].mxu0
        %v2231 = vpop.f32.mrb[0].mxu0
        %2232 = vdwg.mxu0
        %v2233 = vsel %vm1351, %v2090, -inf
        %2234 = vmax.xlane.f32.xlu0 %v2233
        %v2235 = vpop.xlane.xlu0 %2234
        %v2236 = vsel %vm1351, %v2136, -inf
        %2237 = vmax.xlane.f32.xlu0 %v2236
        %v2238 = vpop.xlane.xlu0 %2237
        %v2239 = vsel %vm1351, %v2182, -inf
        %2240 = vmax.xlane.f32.xlu0 %v2239
        %v2241 = vpop.xlane.xlu0 %2240
        %v2242 = vsel %vm1351, %v2228, -inf
        %2243 = vmax.xlane.f32.xlu0 %v2242
        %v2244 = vpop.xlane.xlu0 %2243
        %v2245 = vsub.f32 %v2090, %v2235
        %v2246 = vsub.f32 %v2136, %v2238
        %v2247 = vsub.f32 %v2182, %v2241
        %v2248 = vsub.f32 %v2228, %v2244
        %v2249 = vmul.f32 %v2245, 1.442695
        %v2250 = vpow.pop %v2249
        %v2251 = vmul.f32 %v2246, 1.442695
        %v2252 = vpow.pop %v2251
        %v2253 = vmul.f32 %v2247, 1.442695
        %v2254 = vpow.pop %v2253
        %v2255 = vmul.f32 %v2248, 1.442695
        %v2256 = vpow.pop %v2255
        %v2257 = vsel %vm1351, %v2250, 0.0
        %2258 = vadd.xlane.f32.xlu0 %v2257
        %v2259 = vpop.xlane.xlu0 %2258
        %v2260 = vsel %vm1351, %v2252, 0.0
        %2261 = vadd.xlane.f32.xlu0 %v2260
        %v2262 = vpop.xlane.xlu0 %2261
        %v2263 = vsel %vm1351, %v2254, 0.0
        %2264 = vadd.xlane.f32.xlu0 %v2263
        %v2265 = vpop.xlane.xlu0 %2264
        %v2266 = vsel %vm1351, %v2256, 0.0
        %2267 = vadd.xlane.f32.xlu0 %v2266
        %v2268 = vpop.xlane.xlu0 %2267
        %v2269 = vrcp.pop %v2259
        %v2270 = vrcp.pop %v2262
        %v2271 = vrcp.pop %v2265
        %v2272 = vrcp.pop %v2268
        %v2273 = vmul.f32 %v2250, %v2269
        %v2274 = vmul.f32 %v2252, %v2270
        %v2275 = vmul.f32 %v2254, %v2271
        %v2276 = vmul.f32 %v2256, %v2272
        %v2277 = vpack.c.bf16 %v2273, %v2273
        %v2278 = vpack.c.bf16 %v2274, %v2274
        %v2279 = vpack.c.bf16 %v2275, %v2275
        %v2280 = vpack.c.bf16 %v2276, %v2276
        %2281 = vrot.lane.b32.xlu0 %v2028, 96
        %v2282 = vpop.permute.xlu0 %2281
        %v2284 = vsel %vm1351, %v2277, 0
        %v2287 = vsel %vm1589, %v2282, 0
        %2289 = vmatprep.subr.bf16.mxu0 0
        %2290 = vmatpush1.bf16.msra.mxu0 %v2287
        %2291 = vmatprep.subr.bf16.mxu0 0
        %2292 = vmatpush1.bf16.msra.mxu0 0
        %2293 = vmatprep.subr.bf16.mxu0 0
        %2294 = vmatpush1.bf16.msra.mxu0 0
        %2295 = vmatprep.subr.bf16.mxu0 0
        %2296 = vmatpush1.bf16.msra.mxu0 0
        %2297 = vmatprep.subr.bf16.mxu0 0
        %2298 = vmatpush1.bf16.msra.mxu0 0
        %2299 = vmatprep.subr.bf16.mxu0 0
        %2300 = vmatpush1.bf16.msra.mxu0 0
        %2301 = vmatprep.subr.bf16.mxu0 0
        %2302 = vmatpush1.bf16.msra.mxu0 0
        %2303 = vmatprep.subr.bf16.mxu0 0
        %2304 = vmatpush1.bf16.msra.mxu0 0
        %2305 = vmatprep.subr.bf16.mxu0 0
        %2306 = vmatpush1.bf16.msra.mxu0 0
        %2307 = vmatprep.subr.bf16.mxu0 0
        %2308 = vmatpush1.bf16.msra.mxu0 0
        %2309 = vmatprep.subr.bf16.mxu0 0
        %2310 = vmatpush1.bf16.msra.mxu0 0
        %2311 = vmatprep.subr.bf16.mxu0 0
        %2312 = vmatpush1.bf16.msra.mxu0 0
        %2313 = vmatprep.subr.bf16.mxu0 0
        %2314 = vmatpush1.bf16.msra.mxu0 0
        %2315 = vmatprep.subr.bf16.mxu0 0
        %2316 = vmatpush1.bf16.msra.mxu0 0
        %2317 = vmatprep.subr.bf16.mxu0 0
        %2318 = vmatpush1.bf16.msra.mxu0 0
        %2319 = vmatprep.subr.bf16.mxu0 0
        %2320 = vmatpush1.bf16.msra.mxu0 0
        %2321 = vmatprep.mubr.bf16.mxu0 0
        %2322 = vmatmul.mubr.bf16.gmra.mrb[0].mxu0 %v2284
        %v2323 = vpop.f32.mrb[0].mxu0
        %v2324 = vadd.f32 0.0, %v2323
        %v2325 = vpop.f32.mrb[0].mxu0
        %v2326 = vpop.f32.mrb[0].mxu0
        %v2327 = vpop.f32.mrb[0].mxu0
        %2328 = vdwg.mxu0
        %2329 = vrot.lane.b32.xlu0 %v2038, 96
        %v2330 = vpop.permute.xlu0 %2329
        %v2332 = vsel %vm1351, %v2278, 0
        %v2335 = vsel %vm1589, %v2330, 0
        %2337 = vmatprep.subr.bf16.mxu0 0
        %2338 = vmatpush1.bf16.msra.mxu0 %v2335
        %2339 = vmatprep.subr.bf16.mxu0 0
        %2340 = vmatpush1.bf16.msra.mxu0 0
        %2341 = vmatprep.subr.bf16.mxu0 0
        %2342 = vmatpush1.bf16.msra.mxu0 0
        %2343 = vmatprep.subr.bf16.mxu0 0
        %2344 = vmatpush1.bf16.msra.mxu0 0
        %2345 = vmatprep.subr.bf16.mxu0 0
        %2346 = vmatpush1.bf16.msra.mxu0 0
        %2347 = vmatprep.subr.bf16.mxu0 0
        %2348 = vmatpush1.bf16.msra.mxu0 0
        %2349 = vmatprep.subr.bf16.mxu0 0
        %2350 = vmatpush1.bf16.msra.mxu0 0
        %2351 = vmatprep.subr.bf16.mxu0 0
        %2352 = vmatpush1.bf16.msra.mxu0 0
        %2353 = vmatprep.subr.bf16.mxu0 0
        %2354 = vmatpush1.bf16.msra.mxu0 0
        %2355 = vmatprep.subr.bf16.mxu0 0
        %2356 = vmatpush1.bf16.msra.mxu0 0
        %2357 = vmatprep.subr.bf16.mxu0 0
        %2358 = vmatpush1.bf16.msra.mxu0 0
        %2359 = vmatprep.subr.bf16.mxu0 0
        %2360 = vmatpush1.bf16.msra.mxu0 0
        %2361 = vmatprep.subr.bf16.mxu0 0
        %2362 = vmatpush1.bf16.msra.mxu0 0
        %2363 = vmatprep.subr.bf16.mxu0 0
        %2364 = vmatpush1.bf16.msra.mxu0 0
        %2365 = vmatprep.subr.bf16.mxu0 0
        %2366 = vmatpush1.bf16.msra.mxu0 0
        %2367 = vmatprep.subr.bf16.mxu0 0
        %2368 = vmatpush1.bf16.msra.mxu0 0
        %2369 = vmatprep.mubr.bf16.mxu0 0
        %2370 = vmatmul.mubr.bf16.gmra.mrb[0].mxu0 %v2332
        %v2371 = vpop.f32.mrb[0].mxu0
        %v2372 = vadd.f32 0.0, %v2371
        %v2373 = vpop.f32.mrb[0].mxu0
        %v2374 = vpop.f32.mrb[0].mxu0
        %v2375 = vpop.f32.mrb[0].mxu0
        %2376 = vdwg.mxu0
        %2377 = vrot.lane.b32.xlu0 %v2040, 96
        %v2378 = vpop.permute.xlu0 %2377
        %v2380 = vsel %vm1351, %v2279, 0
        %v2383 = vsel %vm1589, %v2378, 0
        %2385 = vmatprep.subr.bf16.mxu0 0
        %2386 = vmatpush1.bf16.msra.mxu0 %v2383
        %2387 = vmatprep.subr.bf16.mxu0 0
        %2388 = vmatpush1.bf16.msra.mxu0 0
        %2389 = vmatprep.subr.bf16.mxu0 0
        %2390 = vmatpush1.bf16.msra.mxu0 0
        %2391 = vmatprep.subr.bf16.mxu0 0
        %2392 = vmatpush1.bf16.msra.mxu0 0
        %2393 = vmatprep.subr.bf16.mxu0 0
        %2394 = vmatpush1.bf16.msra.mxu0 0
        %2395 = vmatprep.subr.bf16.mxu0 0
        %2396 = vmatpush1.bf16.msra.mxu0 0
        %2397 = vmatprep.subr.bf16.mxu0 0
        %2398 = vmatpush1.bf16.msra.mxu0 0
        %2399 = vmatprep.subr.bf16.mxu0 0
        %2400 = vmatpush1.bf16.msra.mxu0 0
        %2401 = vmatprep.subr.bf16.mxu0 0
        %2402 = vmatpush1.bf16.msra.mxu0 0
        %2403 = vmatprep.subr.bf16.mxu0 0
        %2404 = vmatpush1.bf16.msra.mxu0 0
        %2405 = vmatprep.subr.bf16.mxu0 0
        %2406 = vmatpush1.bf16.msra.mxu0 0
        %2407 = vmatprep.subr.bf16.mxu0 0
        %2408 = vmatpush1.bf16.msra.mxu0 0
        %2409 = vmatprep.subr.bf16.mxu0 0
        %2410 = vmatpush1.bf16.msra.mxu0 0
        %2411 = vmatprep.subr.bf16.mxu0 0
        %2412 = vmatpush1.bf16.msra.mxu0 0
        %2413 = vmatprep.subr.bf16.mxu0 0
        %2414 = vmatpush1.bf16.msra.mxu0 0
        %2415 = vmatprep.subr.bf16.mxu0 0
        %2416 = vmatpush1.bf16.msra.mxu0 0
        %2417 = vmatprep.mubr.bf16.mxu0 0
        %2418 = vmatmul.mubr.bf16.gmra.mrb[0].mxu0 %v2380
        %v2419 = vpop.f32.mrb[0].mxu0
        %v2420 = vadd.f32 0.0, %v2419
        %v2421 = vpop.f32.mrb[0].mxu0
        %v2422 = vpop.f32.mrb[0].mxu0
        %v2423 = vpop.f32.mrb[0].mxu0
        %2424 = vdwg.mxu0
        %2425 = vrot.lane.b32.xlu0 %v2042, 96
        %v2426 = vpop.permute.xlu0 %2425
        %v2428 = vsel %vm1351, %v2280, 0
        %v2431 = vsel %vm1589, %v2426, 0
        %2433 = vmatprep.subr.bf16.mxu0 0
        %2434 = vmatpush1.bf16.msra.mxu0 %v2431
        %2435 = vmatprep.subr.bf16.mxu0 0
        %2436 = vmatpush1.bf16.msra.mxu0 0
        %2437 = vmatprep.subr.bf16.mxu0 0
        %2438 = vmatpush1.bf16.msra.mxu0 0
        %2439 = vmatprep.subr.bf16.mxu0 0
        %2440 = vmatpush1.bf16.msra.mxu0 0
        %2441 = vmatprep.subr.bf16.mxu0 0
        %2442 = vmatpush1.bf16.msra.mxu0 0
        %2443 = vmatprep.subr.bf16.mxu0 0
        %2444 = vmatpush1.bf16.msra.mxu0 0
        %2445 = vmatprep.subr.bf16.mxu0 0
        %2446 = vmatpush1.bf16.msra.mxu0 0
        %2447 = vmatprep.subr.bf16.mxu0 0
        %2448 = vmatpush1.bf16.msra.mxu0 0
        %2449 = vmatprep.subr.bf16.mxu0 0
        %2450 = vmatpush1.bf16.msra.mxu0 0
        %2451 = vmatprep.subr.bf16.mxu0 0
        %2452 = vmatpush1.bf16.msra.mxu0 0
        %2453 = vmatprep.subr.bf16.mxu0 0
        %2454 = vmatpush1.bf16.msra.mxu0 0
        %2455 = vmatprep.subr.bf16.mxu0 0
        %2456 = vmatpush1.bf16.msra.mxu0 0
        %2457 = vmatprep.subr.bf16.mxu0 0
        %2458 = vmatpush1.bf16.msra.mxu0 0
        %2459 = vmatprep.subr.bf16.mxu0 0
        %2460 = vmatpush1.bf16.msra.mxu0 0
        %2461 = vmatprep.subr.bf16.mxu0 0
        %2462 = vmatpush1.bf16.msra.mxu0 0
        %2463 = vmatprep.subr.bf16.mxu0 0
        %2464 = vmatpush1.bf16.msra.mxu0 0
        %2465 = vmatprep.mubr.bf16.mxu0 0
        %2466 = vmatmul.mubr.bf16.gmra.mrb[0].mxu0 %v2428
        %v2467 = vpop.f32.mrb[0].mxu0
        %v2468 = vadd.f32 0.0, %v2467
        %v2469 = vpop.f32.mrb[0].mxu0
        %v2470 = vpop.f32.mrb[0].mxu0
        %v2471 = vpop.f32.mrb[0].mxu0
        %2472 = vdwg.mxu0
        %2474 = vrot.lane.b32.xlu0 %v2372, 8
        %v2475 = vpop.permute.xlu0 %2474
        %2478 = vrot.lane.b32.xlu0 %v2420, 16
        %v2479 = vpop.permute.xlu0 %2478
        %2482 = vrot.lane.b32.xlu0 %v2468, 24
        %v2483 = vpop.permute.xlu0 %2482
        %v2485 = vsel %vm1351, %v2324, %v2475
        %v2486 = vsel %vm1790, %v2485, %v2479
        %v2487 = vsel %vm1792, %v2486, %v2483
        %v2488 = vpack.c.bf16 %v2487, %v2487
        %v2490 = vlaneseq
        %v2491 = vshrl.u32 %v2490, 7
        %v2492 = vsub.s32 0, %v2491
        %v2493 = vrot.slane %v1902, %v2492
        %v2499 = vunpack.c.l.b16 %v1898
        %v2500 = vunpack.c.l.b16 %v1899
        %v2501 = vunpack.c.l.b16 %v1900
        %v2502 = vunpack.c.l.b16 %v1901
        %v2503 = vpack.c.b16 %v2500, %v2499
        %v2504 = vpack.c.b16 %v2502, %v2501
        %v2508 = vsel %vm1233, %v2488, 0
        %2510 = vmatprep.subr.bf16.mxu0 0
        %2511 = vmatpush1.bf16.msra.mxu0 %v2503
        %2512 = vmatprep.subr.bf16.mxu0 0
        %2513 = vmatpush1.bf16.msra.mxu0 %v2504
        %2514 = vmatprep.subr.bf16.mxu0 0
        %2515 = vmatpush1.bf16.msra.mxu0 0
        %2516 = vmatprep.subr.bf16.mxu0 0
        %2517 = vmatpush1.bf16.msra.mxu0 0
        %2518 = vmatprep.subr.bf16.mxu0 0
        %2519 = vmatpush1.bf16.msra.mxu0 0
        %2520 = vmatprep.subr.bf16.mxu0 0
        %2521 = vmatpush1.bf16.msra.mxu0 0
        %2522 = vmatprep.subr.bf16.mxu0 0
        %2523 = vmatpush1.bf16.msra.mxu0 0
        %2524 = vmatprep.subr.bf16.mxu0 0
        %2525 = vmatpush1.bf16.msra.mxu0 0
        %2526 = vmatprep.subr.bf16.mxu0 0
        %2527 = vmatpush1.bf16.msra.mxu0 0
        %2528 = vmatprep.subr.bf16.mxu0 0
        %2529 = vmatpush1.bf16.msra.mxu0 0
        %2530 = vmatprep.subr.bf16.mxu0 0
        %2531 = vmatpush1.bf16.msra.mxu0 0
        %2532 = vmatprep.subr.bf16.mxu0 0
        %2533 = vmatpush1.bf16.msra.mxu0 0
        %2534 = vmatprep.subr.bf16.mxu0 0
        %2535 = vmatpush1.bf16.msra.mxu0 0
        %2536 = vmatprep.subr.bf16.mxu0 0
        %2537 = vmatpush1.bf16.msra.mxu0 0
        %2538 = vmatprep.subr.bf16.mxu0 0
        %2539 = vmatpush1.bf16.msra.mxu0 0
        %2540 = vmatprep.subr.bf16.mxu0 0
        %2541 = vmatpush1.bf16.msra.mxu0 0
        %2542 = vmatprep.mubr.bf16.mxu0 0
        %2543 = vmatmul.mubr.bf16.gmra.mrb[0].mxu0 %v2508
        %v2544 = vpop.f32.mrb[0].mxu0
        %v2545 = vadd.f32 %v2493, %v2544
        %v2546 = vpop.f32.mrb[0].mxu0
        %v2547 = vpop.f32.mrb[0].mxu0
        %v2548 = vpop.f32.mrb[0].mxu0
        %2549 = vdwg.mxu0
        %v2550 = vadd.f32 %v2545, %v1884
        %v2551 = vsel %vm1233, %v2550, 0.0
        %2552 = vadd.xlane.f32.xlu0 %v2551
        %v2553 = vpop.xlane.xlu0 %2552
        %v2554 = vmul.f32 %v2553, %v1860
        %v2555 = vsub.f32 %v2550, %v2554
        %v2556 = vmul.f32 %v2555, %v2555
        %v2557 = vsel %vm1233, %v2556, 0.0
        %2558 = vadd.xlane.f32.xlu0 %v2557
        %v2559 = vpop.xlane.xlu0 %2558
        %v2560 = vmul.f32 %v2559, %v1860
        %v2561 = vadd.f32 %v2560, 1e-06
        %v2562 = vrsqrt.pop %v2561
        %v2563 = vmul.f32 %v2555, %v2562
        %v2565 = vlaneseq
        %v2566 = vshrl.u32 %v2565, 7
        %v2567 = vsub.s32 0, %v2566
        %v2568 = vrot.slane %v1903, %v2567
        %v2570 = vmul.f32 %v2563, %v2568
        %v2572 = vlaneseq
        %v2573 = vshrl.u32 %v2572, 7
        %v2574 = vsub.s32 0, %v2573
        %v2575 = vrot.slane %v1904, %v2574
        %v2577 = vadd.f32 %v2570, %v2575
        %v2578 = vpack.c.bf16 %v2577, %v2577
        %v2579 = vld [vmem:[%s1168] sm:$0xf]
        %v2580 = vld [vmem:[%s1168 + $0x4] sm:$0xf]
        %v2581 = vld [vmem:[%s1168 + $0x8] sm:$0xf]
        %v2582 = vld [vmem:[%s1168 + $0xc] sm:$0xf]
        %v2583 = vld [vmem:[%s1171] sm:$0x1]
        %v2585 = vlaneseq
        %v2586 = vshrl.u32 %v2585, 7
        %v2587 = vsub.s32 0, %v2586
        %v2588 = vrot.slane %v2583, %v2587
        %v2594 = vunpack.c.l.b16 %v2579
        %v2595 = vunpack.c.l.b16 %v2580
        %v2596 = vunpack.c.l.b16 %v2581
        %v2597 = vunpack.c.l.b16 %v2582
        %v2598 = vpack.c.b16 %v2595, %v2594
        %v2599 = vpack.c.b16 %v2597, %v2596
        %v2603 = vsel %vm1233, %v2578, 0
        %2605 = vmatprep.subr.bf16.mxu0 0
        %2606 = vmatpush1.bf16.msra.mxu0 %v2598
        %2607 = vmatprep.subr.bf16.mxu0 0
        %2608 = vmatpush1.bf16.msra.mxu0 %v2599
        %2609 = vmatprep.subr.bf16.mxu0 0
        %2610 = vmatpush1.bf16.msra.mxu0 0
        %2611 = vmatprep.subr.bf16.mxu0 0
        %2612 = vmatpush1.bf16.msra.mxu0 0
        %2613 = vmatprep.subr.bf16.mxu0 0
        %2614 = vmatpush1.bf16.msra.mxu0 0
        %2615 = vmatprep.subr.bf16.mxu0 0
        %2616 = vmatpush1.bf16.msra.mxu0 0
        %2617 = vmatprep.subr.bf16.mxu0 0
        %2618 = vmatpush1.bf16.msra.mxu0 0
        %2619 = vmatprep.subr.bf16.mxu0 0
        %2620 = vmatpush1.bf16.msra.mxu0 0
        %2621 = vmatprep.subr.bf16.mxu0 0
        %2622 = vmatpush1.bf16.msra.mxu0 0
        %2623 = vmatprep.subr.bf16.mxu0 0
        %2624 = vmatpush1.bf16.msra.mxu0 0
        %2625 = vmatprep.subr.bf16.mxu0 0
        %2626 = vmatpush1.bf16.msra.mxu0 0
        %2627 = vmatprep.subr.bf16.mxu0 0
        %2628 = vmatpush1.bf16.msra.mxu0 0
        %2629 = vmatprep.subr.bf16.mxu0 0
        %2630 = vmatpush1.bf16.msra.mxu0 0
        %2631 = vmatprep.subr.bf16.mxu0 0
        %2632 = vmatpush1.bf16.msra.mxu0 0
        %2633 = vmatprep.subr.bf16.mxu0 0
        %2634 = vmatpush1.bf16.msra.mxu0 0
        %2635 = vmatprep.subr.bf16.mxu0 0
        %2636 = vmatpush1.bf16.msra.mxu0 0
        %2637 = vmatprep.mubr.bf16.mxu0 0
        %2638 = vmatmul.mubr.bf16.gmra.mrb[0].mxu0 %v2603
        %v2639 = vpop.f32.mrb[0].mxu0
        %v2640 = vadd.f32 %v2588, %v2639
        %v2641 = vpop.f32.mrb[0].mxu0
        %v2642 = vpop.f32.mrb[0].mxu0
        %v2643 = vpop.f32.mrb[0].mxu0
        %2644 = vdwg.mxu0
        %v2645 = vmax.f32 %v2640, 0.0
        %v2646 = vpack.c.bf16 %v2645, %v2645
        %v2647 = vld [vmem:[%s1176] sm:$0xf]
        %v2648 = vld [vmem:[%s1176 + $0x4] sm:$0xf]
        %v2649 = vld [vmem:[%s1176 + $0x8] sm:$0xf]
        %v2650 = vld [vmem:[%s1176 + $0xc] sm:$0xf]
        %v2651 = vld [vmem:[%s1176 + $0x10] sm:$0xf]
        %v2652 = vld [vmem:[%s1176 + $0x14] sm:$0xf]
        %v2653 = vld [vmem:[%s1176 + $0x18] sm:$0xf]
        %v2654 = vld [vmem:[%s1176 + $0x1c] sm:$0xf]
        %v2655 = vld [vmem:[%s1179] sm:$0x1]
        %v2657 = vlaneseq
        %v2658 = vshrl.u32 %v2657, 7
        %v2659 = vsub.s32 0, %v2658
        %v2660 = vrot.slane %v2655, %v2659
        %v2670 = vunpack.c.l.b16 %v2647
        %v2671 = vunpack.c.l.b16 %v2648
        %v2672 = vunpack.c.l.b16 %v2649
        %v2673 = vunpack.c.l.b16 %v2650
        %v2674 = vunpack.c.l.b16 %v2651
        %v2675 = vunpack.c.l.b16 %v2652
        %v2676 = vunpack.c.l.b16 %v2653
        %v2677 = vunpack.c.l.b16 %v2654
        %v2678 = vpack.c.b16 %v2671, %v2670
        %v2679 = vpack.c.b16 %v2673, %v2672
        %v2680 = vpack.c.b16 %v2675, %v2674
        %v2681 = vpack.c.b16 %v2677, %v2676
        %vm2686 = vcmask 523264
        %v2688 = vsel %vm2686, %v2646, 0
        %2690 = vmatprep.subr.bf16.mxu0 0
        %2691 = vmatpush1.bf16.msra.mxu0 %v2678
        %2692 = vmatprep.subr.bf16.mxu0 0
        %2693 = vmatpush1.bf16.msra.mxu0 %v2679
        %2694 = vmatprep.subr.bf16.mxu0 0
        %2695 = vmatpush1.bf16.msra.mxu0 %v2680
        %2696 = vmatprep.subr.bf16.mxu0 0
        %2697 = vmatpush1.bf16.msra.mxu0 %v2681
        %2698 = vmatprep.subr.bf16.mxu0 0
        %2699 = vmatpush1.bf16.msra.mxu0 0
        %2700 = vmatprep.subr.bf16.mxu0 0
        %2701 = vmatpush1.bf16.msra.mxu0 0
        %2702 = vmatprep.subr.bf16.mxu0 0
        %2703 = vmatpush1.bf16.msra.mxu0 0
        %2704 = vmatprep.subr.bf16.mxu0 0
        %2705 = vmatpush1.bf16.msra.mxu0 0
        %2706 = vmatprep.subr.bf16.mxu0 0
        %2707 = vmatpush1.bf16.msra.mxu0 0
        %2708 = vmatprep.subr.bf16.mxu0 0
        %2709 = vmatpush1.bf16.msra.mxu0 0
        %2710 = vmatprep.subr.bf16.mxu0 0
        %2711 = vmatpush1.bf16.msra.mxu0 0
        %2712 = vmatprep.subr.bf16.mxu0 0
        %2713 = vmatpush1.bf16.msra.mxu0 0
        %2714 = vmatprep.subr.bf16.mxu0 0
        %2715 = vmatpush1.bf16.msra.mxu0 0
        %2716 = vmatprep.subr.bf16.mxu0 0
        %2717 = vmatpush1.bf16.msra.mxu0 0
        %2718 = vmatprep.subr.bf16.mxu0 0
        %2719 = vmatpush1.bf16.msra.mxu0 0
        %2720 = vmatprep.subr.bf16.mxu0 0
        %2721 = vmatpush1.bf16.msra.mxu0 0
        %2722 = vmatprep.mubr.bf16.mxu0 0
        %2723 = vmatmul.mubr.bf16.gmra.mrb[0].mxu0 %v2688
        %v2724 = vpop.f32.mrb[0].mxu0
        %v2725 = vadd.f32 %v2660, %v2724
        %v2726 = vpop.f32.mrb[0].mxu0
        %v2727 = vpop.f32.mrb[0].mxu0
        %v2728 = vpop.f32.mrb[0].mxu0
        %2729 = vdwg.mxu0
        %v2730 = vadd.f32 %v2725, %v2577
        %v2731 = vld [vmem:[%s1182] sm:$0x1]
        %v2732 = vld [vmem:[%s1185] sm:$0x1]
        %v2733 = vsel %vm1233, %v2730, 0.0
        %2734 = vadd.xlane.f32.xlu0 %v2733
        %v2735 = vpop.xlane.xlu0 %2734
        %v2736 = vmul.f32 %v2735, %v1860
        %v2737 = vsub.f32 %v2730, %v2736
        %v2738 = vmul.f32 %v2737, %v2737
        %v2739 = vsel %vm1233, %v2738, 0.0
        %2740 = vadd.xlane.f32.xlu0 %v2739
        %v2741 = vpop.xlane.xlu0 %2740
        %v2742 = vmul.f32 %v2741, %v1860
        %v2743 = vadd.f32 %v2742, 1e-06
        %v2744 = vrsqrt.pop %v2743
        %v2745 = vmul.f32 %v2737, %v2744
        %v2747 = vlaneseq
        %v2748 = vshrl.u32 %v2747, 7
        %v2749 = vsub.s32 0, %v2748
        %v2750 = vrot.slane %v2731, %v2749
        %v2752 = vmul.f32 %v2745, %v2750
        %v2754 = vlaneseq
        %v2755 = vshrl.u32 %v2754, 7
        %v2756 = vsub.s32 0, %v2755
        %v2757 = vrot.slane %v2732, %v2756
        %v2759 = vadd.f32 %v2752, %v2757
        %2760 = vst.msk [vmem:[#allocation2] sm:$0xff] %vm1233, %v2759
        %p2761 = scmp.eq.s32.totalorder %s45, 1
        // Predicated region
        $region129: #{decoder_forward.1} parent=123 // pred_check
          %p2762 = pneg %p2761
        $region130: #{decoder_forward.1} parent=123 // pred_check_branch
          %2764 = sbr.rel (%p2762) target = $region132
        $region131: #{decoder_forward.1} parent=123 // pred_region
          %2765 = vst.msk [vmem:[%s1092] sm:$0xff] %vm1233, %v2759
        $region132: #{decoder_forward.1} parent=123 // pred_fallthru
          _
        %s2766 = sand.u32 %s731, 1
        %s2767 = scalar_lea.sflag [#allocation4], %s2766
        %s2768 = sand.u32 %s731, 1
        %s2769 = smul.addr %s2768, 8
        %s2770 = scalar_lea.vmem [#allocation3], %s2769
        // Predicated region
        $region133: #{decoder_forward.1} parent=123 // pred_check
          %p2771 = pneg %p741
        $region134: #{decoder_forward.1} parent=123 // pred_check_branch
          %2773 = sbr.rel (%p2771) target = $region136
        $region135: #{decoder_forward.1} parent=123 // pred_region
          %s2775 = ssub.s32 128, 128
          %2776 = vsyncadd %s2767, %s2775
          %s2777 = smul.addr %s44, 128
          %s2778 = scalar_lea.hbm %s26, %s2777
          %s2780 = sshll.u32 %s2770, 4
          %s2781 = int_to_ptr.vmem [resolvable:$true] %s2780
          %2783 = dma.vmem_to_hbm [thread:$0]  %s2781, 128, %s2778, %s2767
        $region136: #{decoder_forward.1} parent=123 // pred_fallthru
          _
      $region124: #{decoder_forward.1} parent=5 // pred_fallthru
        _
      %p2784 = scmp.le.s32.totalorder 2, %s35
      // Predicated region
      $region137: #{decoder_forward.1} parent=5 // pred_check
        %p2785 = pneg %p2784
      $region138: #{decoder_forward.1} parent=5 // pred_check_branch
        %2787 = sbr.rel (%p2785) target = $region140
      $region139: #{decoder_forward.1} parent=5 // pred_region
        %s2788 = ssub.s32 %s35, 2
        // Predicated region
        $region141: #{decoder_forward.1} parent=139 // pred_check
          %p2789 = pneg %p747
        $region142: #{decoder_forward.1} parent=139 // pred_check_branch
          %2791 = sbr.rel (%p2789) target = $region144
        $region143: #{decoder_forward.1} parent=139 // pred_region
          %s2792 = sand.u32 %s732, 1
          %s2793 = scalar_lea.sflag [#allocation4], %s2792
          %s2794 = sand.u32 %s732, 1
          %s2795 = smul.addr %s2794, 8
          %s2796 = scalar_lea.vmem [#allocation3], %s2795
          %2797 = dma.done %s2793, 128
        $region144: #{decoder_forward.1} parent=139 // pred_fallthru
          _
      $region140: #{decoder_forward.1} parent=5 // pred_fallthru
        _
    $region6: #{decoder_forward.1} parent=1 // loop_footer
      %s39 = sadd.s32 1, %s35
    $region7: #{decoder_forward.1} parent=1 // loop_footer_branch
      %34 = sbr.rel target = $region3
    $region8: #{decoder_forward.1} parent=1 // loop_exit
      _
    %2798 = vsyncpa [#allocation4], 1
    %s2799 = scalar_lea.sflag [#allocation4], 1
    %2800 = vsyncpa %s2799, 1

</llo_original>
